<compile_context>
chip_gen: v5e
topology: v5e:2x2
jax: 0.10.0
libtpu: 0.0.40
codegen_flags: <defaults>
</compile_context>

<pallas_src>
import jax
import jax.numpy as jnp
from jax.experimental import pallas as pl
from jax.experimental.pallas import tpu as pltpu

# ---- static configuration ----
N, CIN, C, H, W = 2, 8, 8, 16, 16
DILATIONS = (1, 6, 12)
NBR = len(DILATIONS) + 1              # + image-pool branch (context_cfg=None)
CC = NBR * C                          # stage-1 concat channels = 32
HW = H * W
M = N * HW                            # total pixels = 512
NTAP1 = 2 + 9 * (len(DILATIONS) - 1)  # pool + 1x1 + 9 (d=6) + 9 (d=12) = 20
XL = 256                              # input halo pad (lanes): >= 12*(W+1), mult of 128
CL = 128                              # cat   halo pad (lanes): >= (W+1),    mult of 128
LOG2W = W.bit_length() - 1
assert (1 << LOG2W) == W and (H & (H - 1)) == 0, "mask math assumes pow2 H, W"
assert XL >= max(DILATIONS) * (W + 1) and CL >= (W + 1)


def aspp_kernel(x_ref, ws_ref, wb_ref, sh_ref, out_ref, xs_ref, cat_ref):
    f32 = jnp.float32
    m = out_ref.shape[-1]                      # pixels in this step (= M)
    nimg = m // HW

    # --- stage the input into a zero-filled halo buffer (aligned stores) ---
    xs_ref[:, :XL] = jnp.zeros((CIN, XL), f32)
    xs_ref[:, XL + m:] = jnp.zeros((CIN, XL), f32)
    xs_ref[:, XL:XL + m] = x_ref[...]
    cat_ref[:, :CL] = jnp.zeros((CC, CL), f32)
    cat_ref[:, CL + m:] = jnp.zeros((CC, CL), f32)

    # --- per-lane pixel coordinates (shared by all boundary masks) ---
    pix = jax.lax.broadcasted_iota(jnp.int32, (1, m), 1)
    wcol = pix & (W - 1)
    hrow = (pix >> LOG2W) & (H - 1)

    def shift_masks(s):
        # validity of row/col shifts {-s, 0, +s}; None means "always valid"
        rm = {0: None, -s: hrow >= s, s: hrow < H - s}
        cm = {0: None, -s: wcol >= s, s: wcol < W - s}
        return rm, cm

    def masked(val, rm, cm, dy, dx):
        msk = None
        if dy != 0:
            msk = rm[dy]
        if dx != 0:
            msk = cm[dx] if msk is None else (msk & cm[dx])
        return val if msk is None else jnp.where(msk, val, 0.0)

    def wtap(ref, t):                          # t-th (C, K) folded tap weight
        return ref[t * C:(t + 1) * C, :]

    taps9 = [(ky, kx) for ky in range(3) for kx in range(3)]

    # --- image-pool branch (1x1-upsample == per-image broadcast) -> rows [0,C) ---
    mean_full = jnp.concatenate(
        [jnp.broadcast_to(
            jnp.mean(x_ref[:, i * HW:(i + 1) * HW], axis=1, keepdims=True),
            (CIN, HW)) for i in range(nimg)], axis=1)                 # (CIN, m)
    yp = jnp.dot(wtap(ws_ref, 0), mean_full, preferred_element_type=f32)
    cat_ref[0:C, CL:CL + m] = jnp.maximum(yp + sh_ref[:, 0:1], 0.0)

    # --- 1x1 branch -> rows [C, 2C) ---
    y1 = jnp.dot(wtap(ws_ref, 1), x_ref[...], preferred_element_type=f32)
    cat_ref[C:2 * C, CL:CL + m] = jnp.maximum(y1 + sh_ref[:, 1:2], 0.0)

    # --- dilated 3x3 branches (d=6, d=12) -> rows [2C,3C), [3C,4C) ---
    for b, d in enumerate(DILATIONS[1:]):
        rm, cm = shift_masks(d)
        acc = jnp.zeros((C, m), f32)
        for k, (ky, kx) in enumerate(taps9):
            dy, dx = (ky - 1) * d, (kx - 1) * d
            off = dy * W + dx
            contrib = jnp.dot(wtap(ws_ref, 2 + 9 * b + k),
                              xs_ref[:, XL + off:XL + off + m],
                              preferred_element_type=f32)
            acc = acc + masked(contrib, rm, cm, dy, dx)
        cat_ref[(2 + b) * C:(3 + b) * C, CL:CL + m] = jnp.maximum(
            acc + sh_ref[:, 2 + b:3 + b], 0.0)

    # --- bottleneck 3x3 (padding=1) -> output ---
    rm, cm = shift_masks(1)
    acc = jnp.zeros((C, m), f32)
    for k, (ky, kx) in enumerate(taps9):
        dy, dx = ky - 1, kx - 1
        off = dy * W + dx
        contrib = jnp.dot(wtap(wb_ref, k),
                          cat_ref[:, CL + off:CL + off + m],
                          preferred_element_type=f32)
        acc = acc + masked(contrib, rm, cm, dy, dx)
    out_ref[...] = jnp.maximum(acc + sh_ref[:, 4:5], 0.0)


def _pack_params(params):
    """Fold eval-BN scale into every conv tap; pack into 3 dense arrays."""
    wpool, apool, w1, a1, w6, a6, w12, a12, wb, ab = params
    taps = [(wpool * apool[0]).T, (w1 * a1[0]).T]            # each (C, CIN)
    for w, a in ((w6, a6), (w12, a12)):
        wf = w * a[0]                                         # (3,3,CIN,C)
        taps += [wf[ky, kx].T for ky in range(3) for kx in range(3)]
    ws = jnp.concatenate(taps, axis=0)                        # (NTAP1*C, CIN)
    wbf = wb * ab[0]                                          # (3,3,CC,C)
    wbt = jnp.concatenate(
        [wbf[ky, kx].T for ky in range(3) for kx in range(3)], axis=0)  # (9*C, CC)
    sh = jnp.stack([apool[1], a1[1], a6[1], a12[1], ab[1]], axis=1)     # (C, 5)
    return ws, wbt, sh


def aspp_forward(x_nchw, params):
    ws, wbt, sh = _pack_params(params)
    # lane-dense input: channels on sublanes, pixels (n*HW + h*W + w) on lanes
    xt = jnp.transpose(x_nchw, (1, 0, 2, 3)).reshape(CIN, M)

    out_t = pl.pallas_call(
        aspp_kernel,
        out_shape=jax.ShapeDtypeStruct((C, M), jnp.float32),
        grid=(1,),
        in_specs=[pl.BlockSpec((CIN, M), lambda i: (0, 0)),
                  pl.BlockSpec((NTAP1 * C, CIN), lambda i: (0, 0)),
                  pl.BlockSpec((9 * C, CC), lambda i: (0, 0)),
                  pl.BlockSpec((C, 5), lambda i: (0, 0))],
        out_specs=pl.BlockSpec((C, M), lambda i: (0, 0)),
        scratch_shapes=[pltpu.VMEM((CIN, M + 2 * XL), jnp.float32),
                        pltpu.VMEM((CC, M + 2 * CL), jnp.float32)],
        compiler_params=pltpu.CompilerParams(
            dimension_semantics=("arbitrary",)),
    )(xt, ws, wbt, sh)
    # (C, N*H*W) -> (N, C, H, W)
    return out_t.reshape(C, N, H, W).transpose(1, 0, 2, 3)


# ---- deterministic synthetic parameters ----
def init_params(key):
    ks = jax.random.split(key, 10)

    def conv_w(k, shape):
        return 0.1 * jax.random.normal(k, shape, jnp.float32)

    def bn_affine(k, c):
        k1, k2, k3, k4 = jax.random.split(k, 4)
        gamma = 1.0 + 0.1 * jax.random.normal(k1, (c,), jnp.float32)
        beta = 0.1 * jax.random.normal(k2, (c,), jnp.float32)
        rmean = 0.1 * jax.random.normal(k3, (c,), jnp.float32)
        rvar = 0.5 + jnp.abs(jax.random.normal(k4, (c,), jnp.float32))
        scale = gamma * jax.lax.rsqrt(rvar + 1e-5)
        shift = beta - rmean * scale
        return jnp.stack([scale, shift]).astype(jnp.float32)   # (2, C)

    wpool = conv_w(ks[0], (CIN, C));           apool = bn_affine(ks[1], C)
    w1 = conv_w(ks[2], (CIN, C));              a1 = bn_affine(ks[3], C)
    w6 = conv_w(ks[4], (3, 3, CIN, C));        a6 = bn_affine(ks[5], C)
    w12 = conv_w(ks[6], (3, 3, CIN, C));       a12 = bn_affine(ks[7], C)
    wb = conv_w(ks[8], (3, 3, NBR * C, C));    ab = bn_affine(ks[9], C)
    return (wpool, apool, w1, a1, w6, a6, w12, a12, wb, ab)


# ---- pure-JAX reference (same math, lax conv) for a correctness check ----
def ref_forward(x_nchw, params):
    (wpool, apool, w1, a1, w6, a6, w12, a12, wb, ab) = params
    x = jnp.transpose(x_nchw, (0, 2, 3, 1))

    def conv(v, w, pad, dil):
        return jax.lax.conv_general_dilated(
            v, w, window_strides=(1, 1),
            padding=[(pad, pad), (pad, pad)], rhs_dilation=(dil, dil),
            dimension_numbers=('NHWC', 'HWIO', 'NHWC'),
            precision=jax.lax.Precision.HIGHEST)

    def bn_relu(y, a):
        return jnp.maximum(y * a[0] + a[1], 0.0)

    xm = jnp.mean(x, axis=(1, 2), keepdims=True)
    yp = jnp.broadcast_to(bn_relu(conv(xm, wpool[None, None], 0, 1), apool),
                          (N, H, W, C))
    y1 = bn_relu(conv(x, w1[None, None], 0, 1), a1)
    y6 = bn_relu(conv(x, w6, 6, 6), a6)
    y12 = bn_relu(conv(x, w12, 12, 12), a12)
    cat = jnp.concatenate([yp, y1, y6, y12], axis=-1)
    yb = bn_relu(conv(cat, wb, 1, 1), ab)
    return jnp.transpose(yb, (0, 3, 1, 2))


if __name__ == "__main__":
    key = jax.random.PRNGKey(0)
    kx_, kp = jax.random.split(key)
    x = jax.random.normal(kx_, (N, CIN, H, W), jnp.float32)  # PyTorch-style NCHW
    params = init_params(kp)

    fwd = jax.jit(aspp_forward)
    out = jax.block_until_ready(fwd(x, params))
    ref = ref_forward(x, params)

    assert out.shape == (N, C, H, W)
    err = float(jnp.max(jnp.abs(out - ref)))
    assert jnp.allclose(out, ref, rtol=1e-4, atol=1e-4), err
    print("KERNEL_OK")
</pallas_src>

<mosaic_0001>
module attributes {stable_mosaic.version = 11 : i64} {
  func.func @aspp_kernel(%arg0: i32, %arg1: memref<8x512xf32, #tpu.memory_space<vmem>>, %arg2: memref<160x8xf32, #tpu.memory_space<vmem>>, %arg3: memref<72x32xf32, #tpu.memory_space<vmem>>, %arg4: memref<8x5xf32, #tpu.memory_space<vmem>>, %arg5: memref<8x512xf32, #tpu.memory_space<vmem>>, %arg6: memref<8x1024xf32, #tpu.memory_space<vmem>>, %arg7: memref<32x768xf32, #tpu.memory_space<vmem>>) attributes {dimension_semantics = [#tpu.dimension_semantics<arbitrary>], iteration_bounds = array<i64: 1>, scalar_prefetch = 0 : i64, scratch_operands = 2 : i64, tpu.core_type = #tpu.core_type<tc>, window_params = [{pipeline_mode = #tpu.pipeline_mode<synchronous>, transform_indices = @transform_0, window_bounds = array<i64: 8, 512>}, {pipeline_mode = #tpu.pipeline_mode<synchronous>, transform_indices = @transform_1, window_bounds = array<i64: 160, 8>}, {pipeline_mode = #tpu.pipeline_mode<synchronous>, transform_indices = @transform_2, window_bounds = array<i64: 72, 32>}, {pipeline_mode = #tpu.pipeline_mode<synchronous>, transform_indices = @transform_3, window_bounds = array<i64: 8, 5>}, {pipeline_mode = #tpu.pipeline_mode<synchronous>, transform_indices = @transform_4, window_bounds = array<i64: 8, 512>}]} {
    %cst = arith.constant 0.000000e+00 : f32
    %0 = vector.broadcast %cst : f32 to vector<8x256xf32>
    %c0 = arith.constant 0 : index
    %c0_0 = arith.constant 0 : index
    %1 = vector.load %arg6[%c0, %c0_0] : memref<8x1024xf32, #tpu.memory_space<vmem>>, vector<8x256xf32>
    tpu.vector_store %arg6[%c0, %c0_0], %0 {strides = array<i32>} : memref<8x1024xf32, #tpu.memory_space<vmem>>, vector<8x256xf32>,
    %cst_1 = arith.constant 0.000000e+00 : f32
    %2 = vector.broadcast %cst_1 : f32 to vector<8x256xf32>
    %c0_2 = arith.constant 0 : index
    %c768 = arith.constant 768 : index
    %3 = vector.load %arg6[%c0_2, %c768] : memref<8x1024xf32, #tpu.memory_space<vmem>>, vector<8x256xf32>
    tpu.vector_store %arg6[%c0_2, %c768], %2 {strides = array<i32>} : memref<8x1024xf32, #tpu.memory_space<vmem>>, vector<8x256xf32>,
    %c0_3 = arith.constant 0 : index
    %c0_4 = arith.constant 0 : index
    %4 = vector.load %arg1[%c0_3, %c0_4] : memref<8x512xf32, #tpu.memory_space<vmem>>, vector<8x512xf32>
    %c0_5 = arith.constant 0 : index
    %c256 = arith.constant 256 : index
    %5 = vector.load %arg6[%c0_5, %c256] : memref<8x1024xf32, #tpu.memory_space<vmem>>, vector<8x512xf32>
    tpu.vector_store %arg6[%c0_5, %c256], %4 {strides = array<i32>} : memref<8x1024xf32, #tpu.memory_space<vmem>>, vector<8x512xf32>,
    %cst_6 = arith.constant 0.000000e+00 : f32
    %6 = vector.broadcast %cst_6 : f32 to vector<32x128xf32>
    %c0_7 = arith.constant 0 : index
    %c0_8 = arith.constant 0 : index
    %7 = vector.load %arg7[%c0_7, %c0_8] : memref<32x768xf32, #tpu.memory_space<vmem>>, vector<32x128xf32>
    tpu.vector_store %arg7[%c0_7, %c0_8], %6 {strides = array<i32>} : memref<32x768xf32, #tpu.memory_space<vmem>>, vector<32x128xf32>,
    %cst_9 = arith.constant 0.000000e+00 : f32
    %8 = vector.broadcast %cst_9 : f32 to vector<32x128xf32>
    %c0_10 = arith.constant 0 : index
    %c640 = arith.constant 640 : index
    %9 = vector.load %arg7[%c0_10, %c640] : memref<32x768xf32, #tpu.memory_space<vmem>>, vector<32x128xf32>
    tpu.vector_store %arg7[%c0_10, %c640], %8 {strides = array<i32>} : memref<32x768xf32, #tpu.memory_space<vmem>>, vector<32x128xf32>,
    %10 = tpu.iota {dimensions = array<i32: 1>} : vector<1x512xi32>
    %c15_i32 = arith.constant 15 : i32
    %11 = vector.broadcast %c15_i32 : i32 to vector<1x512xi32>
    %12 = arith.andi %10, %11 : vector<1x512xi32>
    %c4_i32 = arith.constant 4 : i32
    %13 = vector.broadcast %c4_i32 : i32 to vector<1x512xi32>
    %14 = arith.shrsi %10, %13 : vector<1x512xi32>
    %c15_i32_11 = arith.constant 15 : i32
    %15 = vector.broadcast %c15_i32_11 : i32 to vector<1x512xi32>
    %16 = arith.andi %14, %15 : vector<1x512xi32>
    %c0_12 = arith.constant 0 : index
    %c0_13 = arith.constant 0 : index
    %17 = vector.load %arg1[%c0_12, %c0_13] : memref<8x512xf32, #tpu.memory_space<vmem>>, vector<8x256xf32>
    %cst_14 = arith.constant dense<0.000000e+00> : vector<8xf32>
    %18 = vector.multi_reduction <add>, %17, %cst_14 [1] : vector<8x256xf32> to vector<8xf32>
    %19 = vector.shape_cast %18 : vector<8xf32> to vector<8x1xf32>
    %cst_15 = arith.constant 2.560000e+02 : f32
    %20 = vector.broadcast %cst_15 : f32 to vector<8x1xf32>
    %21 = arith.divf %19, %20 : vector<8x1xf32>
    %22 = vector.shape_cast %21 : vector<8x1xf32> to vector<8x1xf32>
    %23 = vector.broadcast %22 : vector<8x1xf32> to vector<8x256xf32>
    %c0_16 = arith.constant 0 : index
    %c256_17 = arith.constant 256 : index
    %24 = vector.load %arg1[%c0_16, %c256_17] : memref<8x512xf32, #tpu.memory_space<vmem>>, vector<8x256xf32>
    %cst_18 = arith.constant dense<0.000000e+00> : vector<8xf32>
    %25 = vector.multi_reduction <add>, %24, %cst_18 [1] : vector<8x256xf32> to vector<8xf32>
    %26 = vector.shape_cast %25 : vector<8xf32> to vector<8x1xf32>
    %cst_19 = arith.constant 2.560000e+02 : f32
    %27 = vector.broadcast %cst_19 : f32 to vector<8x1xf32>
    %28 = arith.divf %26, %27 : vector<8x1xf32>
    %29 = vector.shape_cast %28 : vector<8x1xf32> to vector<8x1xf32>
    %30 = vector.broadcast %29 : vector<8x1xf32> to vector<8x256xf32>
    %31 = tpu.concatenate %23, %30 in 1 : vector<8x256xf32>, vector<8x256xf32> -> vector<8x512xf32>
    %c0_20 = arith.constant 0 : index
    %c0_21 = arith.constant 0 : index
    %32 = vector.load %arg2[%c0_20, %c0_21] : memref<160x8xf32, #tpu.memory_space<vmem>>, vector<8x8xf32>
    %cst_22 = arith.constant dense<0.000000e+00> : vector<8x512xf32>
    %33 = tpu.matmul %32, %31, %cst_22 {dimension_numbers = #tpu.dot_dimension_numbers<[1], [0], [0], [1], [0, 0, 1, 1], [], []>} : vector<8x8xf32>, vector<8x512xf32>, vector<8x512xf32> -> vector<8x512xf32>
    %c0_23 = arith.constant 0 : index
    %c0_24 = arith.constant 0 : index
    %34 = vector.load %arg4[%c0_23, %c0_24] : memref<8x5xf32, #tpu.memory_space<vmem>>, vector<8x1xf32>
    %35 = vector.broadcast %34 : vector<8x1xf32> to vector<8x512xf32>
    %36 = arith.addf %33, %35 : vector<8x512xf32>
    %cst_25 = arith.constant 0.000000e+00 : f32
    %37 = vector.broadcast %cst_25 : f32 to vector<8x512xf32>
    %38 = arith.maximumf %36, %37 : vector<8x512xf32>
    %c0_26 = arith.constant 0 : index
    %c128 = arith.constant 128 : index
    %39 = vector.load %arg7[%c0_26, %c128] : memref<32x768xf32, #tpu.memory_space<vmem>>, vector<8x512xf32>
    tpu.vector_store %arg7[%c0_26, %c128], %38 {strides = array<i32>} : memref<32x768xf32, #tpu.memory_space<vmem>>, vector<8x512xf32>,
    %c8 = arith.constant 8 : index
    %c0_27 = arith.constant 0 : index
    %40 = vector.load %arg2[%c8, %c0_27] : memref<160x8xf32, #tpu.memory_space<vmem>>, vector<8x8xf32>
    %c0_28 = arith.constant 0 : index
    %c0_29 = arith.constant 0 : index
    %41 = vector.load %arg1[%c0_28, %c0_29] : memref<8x512xf32, #tpu.memory_space<vmem>>, vector<8x512xf32>
    %cst_30 = arith.constant dense<0.000000e+00> : vector<8x512xf32>
    %42 = tpu.matmul %40, %41, %cst_30 {dimension_numbers = #tpu.dot_dimension_numbers<[1], [0], [0], [1], [0, 0, 1, 1], [], []>} : vector<8x8xf32>, vector<8x512xf32>, vector<8x512xf32> -> vector<8x512xf32>
    %c0_31 = arith.constant 0 : index
    %c1 = arith.constant 1 : index
    %43 = vector.load %arg4[%c0_31, %c1] : memref<8x5xf32, #tpu.memory_space<vmem>>, vector<8x1xf32>
    %44 = vector.broadcast %43 : vector<8x1xf32> to vector<8x512xf32>
    %45 = arith.addf %42, %44 : vector<8x512xf32>
    %cst_32 = arith.constant 0.000000e+00 : f32
    %46 = vector.broadcast %cst_32 : f32 to vector<8x512xf32>
    %47 = arith.maximumf %45, %46 : vector<8x512xf32>
    %c8_33 = arith.constant 8 : index
    %c128_34 = arith.constant 128 : index
    %48 = vector.load %arg7[%c8_33, %c128_34] : memref<32x768xf32, #tpu.memory_space<vmem>>, vector<8x512xf32>
    tpu.vector_store %arg7[%c8_33, %c128_34], %47 {strides = array<i32>} : memref<32x768xf32, #tpu.memory_space<vmem>>, vector<8x512xf32>,
    %c6_i32 = arith.constant 6 : i32
    %49 = vector.broadcast %c6_i32 : i32 to vector<1x512xi32>
    %50 = arith.cmpi sge, %16, %49 : vector<1x512xi32>
    %c10_i32 = arith.constant 10 : i32
    %51 = vector.broadcast %c10_i32 : i32 to vector<1x512xi32>
    %52 = arith.cmpi slt, %16, %51 : vector<1x512xi32>
    %c6_i32_35 = arith.constant 6 : i32
    %53 = vector.broadcast %c6_i32_35 : i32 to vector<1x512xi32>
    %54 = arith.cmpi sge, %12, %53 : vector<1x512xi32>
    %c10_i32_36 = arith.constant 10 : i32
    %55 = vector.broadcast %c10_i32_36 : i32 to vector<1x512xi32>
    %56 = arith.cmpi slt, %12, %55 : vector<1x512xi32>
    %cst_37 = arith.constant 0.000000e+00 : f32
    %57 = vector.broadcast %cst_37 : f32 to vector<8x512xf32>
    %c16 = arith.constant 16 : index
    %c0_38 = arith.constant 0 : index
    %58 = vector.load %arg2[%c16, %c0_38] : memref<160x8xf32, #tpu.memory_space<vmem>>, vector<8x8xf32>
    %c0_39 = arith.constant 0 : index
    %c154 = arith.constant 154 : index
    %59 = vector.load %arg6[%c0_39, %c154] : memref<8x1024xf32, #tpu.memory_space<vmem>>, vector<8x512xf32>
    %cst_40 = arith.constant dense<0.000000e+00> : vector<8x512xf32>
    %60 = tpu.matmul %58, %59, %cst_40 {dimension_numbers = #tpu.dot_dimension_numbers<[1], [0], [0], [1], [0, 0, 1, 1], [], []>} : vector<8x8xf32>, vector<8x512xf32>, vector<8x512xf32> -> vector<8x512xf32>
    %61 = arith.andi %50, %54 : vector<1x512xi1>
    %cst_41 = arith.constant 0.000000e+00 : f32
    %62 = vector.shape_cast %61 : vector<1x512xi1> to vector<1x512xi1>
    %63 = vector.broadcast %62 : vector<1x512xi1> to vector<8x512xi1>
    %64 = vector.broadcast %cst_41 : f32 to vector<8x512xf32>
    %65 = arith.select %63, %60, %64 : vector<8x512xi1>, vector<8x512xf32>
    %66 = arith.addf %57, %65 : vector<8x512xf32>
    %c24 = arith.constant 24 : index
    %c0_42 = arith.constant 0 : index
    %67 = vector.load %arg2[%c24, %c0_42] : memref<160x8xf32, #tpu.memory_space<vmem>>, vector<8x8xf32>
    %c0_43 = arith.constant 0 : index
    %c160 = arith.constant 160 : index
    %68 = vector.load %arg6[%c0_43, %c160] : memref<8x1024xf32, #tpu.memory_space<vmem>>, vector<8x512xf32>
    %cst_44 = arith.constant dense<0.000000e+00> : vector<8x512xf32>
    %69 = tpu.matmul %67, %68, %cst_44 {dimension_numbers = #tpu.dot_dimension_numbers<[1], [0], [0], [1], [0, 0, 1, 1], [], []>} : vector<8x8xf32>, vector<8x512xf32>, vector<8x512xf32> -> vector<8x512xf32>
    %cst_45 = arith.constant 0.000000e+00 : f32
    %70 = vector.shape_cast %50 : vector<1x512xi1> to vector<1x512xi1>
    %71 = vector.broadcast %70 : vector<1x512xi1> to vector<8x512xi1>
    %72 = vector.broadcast %cst_45 : f32 to vector<8x512xf32>
    %73 = arith.select %71, %69, %72 : vector<8x512xi1>, vector<8x512xf32>
    %74 = arith.addf %66, %73 : vector<8x512xf32>
    %c32 = arith.constant 32 : index
    %c0_46 = arith.constant 0 : index
    %75 = vector.load %arg2[%c32, %c0_46] : memref<160x8xf32, #tpu.memory_space<vmem>>, vector<8x8xf32>
    %c0_47 = arith.constant 0 : index
    %c166 = arith.constant 166 : index
    %76 = vector.load %arg6[%c0_47, %c166] : memref<8x1024xf32, #tpu.memory_space<vmem>>, vector<8x512xf32>
    %cst_48 = arith.constant dense<0.000000e+00> : vector<8x512xf32>
    %77 = tpu.matmul %75, %76, %cst_48 {dimension_numbers = #tpu.dot_dimension_numbers<[1], [0], [0], [1], [0, 0, 1, 1], [], []>} : vector<8x8xf32>, vector<8x512xf32>, vector<8x512xf32> -> vector<8x512xf32>
    %78 = arith.andi %50, %56 : vector<1x512xi1>
    %cst_49 = arith.constant 0.000000e+00 : f32
    %79 = vector.shape_cast %78 : vector<1x512xi1> to vector<1x512xi1>
    %80 = vector.broadcast %79 : vector<1x512xi1> to vector<8x512xi1>
    %81 = vector.broadcast %cst_49 : f32 to vector<8x512xf32>
    %82 = arith.select %80, %77, %81 : vector<8x512xi1>, vector<8x512xf32>
    %83 = arith.addf %74, %82 : vector<8x512xf32>
    %c40 = arith.constant 40 : index
    %c0_50 = arith.constant 0 : index
    %84 = vector.load %arg2[%c40, %c0_50] : memref<160x8xf32, #tpu.memory_space<vmem>>, vector<8x8xf32>
    %c0_51 = arith.constant 0 : index
    %c250 = arith.constant 250 : index
    %85 = vector.load %arg6[%c0_51, %c250] : memref<8x1024xf32, #tpu.memory_space<vmem>>, vector<8x512xf32>
    %cst_52 = arith.constant dense<0.000000e+00> : vector<8x512xf32>
    %86 = tpu.matmul %84, %85, %cst_52 {dimension_numbers = #tpu.dot_dimension_numbers<[1], [0], [0], [1], [0, 0, 1, 1], [], []>} : vector<8x8xf32>, vector<8x512xf32>, vector<8x512xf32> -> vector<8x512xf32>
    %cst_53 = arith.constant 0.000000e+00 : f32
    %87 = vector.shape_cast %54 : vector<1x512xi1> to vector<1x512xi1>
    %88 = vector.broadcast %87 : vector<1x512xi1> to vector<8x512xi1>
    %89 = vector.broadcast %cst_53 : f32 to vector<8x512xf32>
    %90 = arith.select %88, %86, %89 : vector<8x512xi1>, vector<8x512xf32>
    %91 = arith.addf %83, %90 : vector<8x512xf32>
    %c48 = arith.constant 48 : index
    %c0_54 = arith.constant 0 : index
    %92 = vector.load %arg2[%c48, %c0_54] : memref<160x8xf32, #tpu.memory_space<vmem>>, vector<8x8xf32>
    %c0_55 = arith.constant 0 : index
    %c256_56 = arith.constant 256 : index
    %93 = vector.load %arg6[%c0_55, %c256_56] : memref<8x1024xf32, #tpu.memory_space<vmem>>, vector<8x512xf32>
    %cst_57 = arith.constant dense<0.000000e+00> : vector<8x512xf32>
    %94 = tpu.matmul %92, %93, %cst_57 {dimension_numbers = #tpu.dot_dimension_numbers<[1], [0], [0], [1], [0, 0, 1, 1], [], []>} : vector<8x8xf32>, vector<8x512xf32>, vector<8x512xf32> -> vector<8x512xf32>
    %95 = arith.addf %91, %94 : vector<8x512xf32>
    %c56 = arith.constant 56 : index
    %c0_58 = arith.constant 0 : index
    %96 = vector.load %arg2[%c56, %c0_58] : memref<160x8xf32, #tpu.memory_space<vmem>>, vector<8x8xf32>
    %c0_59 = arith.constant 0 : index
    %c262 = arith.constant 262 : index
    %97 = vector.load %arg6[%c0_59, %c262] : memref<8x1024xf32, #tpu.memory_space<vmem>>, vector<8x512xf32>
    %cst_60 = arith.constant dense<0.000000e+00> : vector<8x512xf32>
    %98 = tpu.matmul %96, %97, %cst_60 {dimension_numbers = #tpu.dot_dimension_numbers<[1], [0], [0], [1], [0, 0, 1, 1], [], []>} : vector<8x8xf32>, vector<8x512xf32>, vector<8x512xf32> -> vector<8x512xf32>
    %cst_61 = arith.constant 0.000000e+00 : f32
    %99 = vector.shape_cast %56 : vector<1x512xi1> to vector<1x512xi1>
    %100 = vector.broadcast %99 : vector<1x512xi1> to vector<8x512xi1>
    %101 = vector.broadcast %cst_61 : f32 to vector<8x512xf32>
    %102 = arith.select %100, %98, %101 : vector<8x512xi1>, vector<8x512xf32>
    %103 = arith.addf %95, %102 : vector<8x512xf32>
    %c64 = arith.constant 64 : index
    %c0_62 = arith.constant 0 : index
    %104 = vector.load %arg2[%c64, %c0_62] : memref<160x8xf32, #tpu.memory_space<vmem>>, vector<8x8xf32>
    %c0_63 = arith.constant 0 : index
    %c346 = arith.constant 346 : index
    %105 = vector.load %arg6[%c0_63, %c346] : memref<8x1024xf32, #tpu.memory_space<vmem>>, vector<8x512xf32>
    %cst_64 = arith.constant dense<0.000000e+00> : vector<8x512xf32>
    %106 = tpu.matmul %104, %105, %cst_64 {dimension_numbers = #tpu.dot_dimension_numbers<[1], [0], [0], [1], [0, 0, 1, 1], [], []>} : vector<8x8xf32>, vector<8x512xf32>, vector<8x512xf32> -> vector<8x512xf32>
    %107 = arith.andi %52, %54 : vector<1x512xi1>
    %cst_65 = arith.constant 0.000000e+00 : f32
    %108 = vector.shape_cast %107 : vector<1x512xi1> to vector<1x512xi1>
    %109 = vector.broadcast %108 : vector<1x512xi1> to vector<8x512xi1>
    %110 = vector.broadcast %cst_65 : f32 to vector<8x512xf32>
    %111 = arith.select %109, %106, %110 : vector<8x512xi1>, vector<8x512xf32>
    %112 = arith.addf %103, %111 : vector<8x512xf32>
    %c72 = arith.constant 72 : index
    %c0_66 = arith.constant 0 : index
    %113 = vector.load %arg2[%c72, %c0_66] : memref<160x8xf32, #tpu.memory_space<vmem>>, vector<8x8xf32>
    %c0_67 = arith.constant 0 : index
    %c352 = arith.constant 352 : index
    %114 = vector.load %arg6[%c0_67, %c352] : memref<8x1024xf32, #tpu.memory_space<vmem>>, vector<8x512xf32>
    %cst_68 = arith.constant dense<0.000000e+00> : vector<8x512xf32>
    %115 = tpu.matmul %113, %114, %cst_68 {dimension_numbers = #tpu.dot_dimension_numbers<[1], [0], [0], [1], [0, 0, 1, 1], [], []>} : vector<8x8xf32>, vector<8x512xf32>, vector<8x512xf32> -> vector<8x512xf32>
    %cst_69 = arith.constant 0.000000e+00 : f32
    %116 = vector.shape_cast %52 : vector<1x512xi1> to vector<1x512xi1>
    %117 = vector.broadcast %116 : vector<1x512xi1> to vector<8x512xi1>
    %118 = vector.broadcast %cst_69 : f32 to vector<8x512xf32>
    %119 = arith.select %117, %115, %118 : vector<8x512xi1>, vector<8x512xf32>
    %120 = arith.addf %112, %119 : vector<8x512xf32>
    %c80 = arith.constant 80 : index
    %c0_70 = arith.constant 0 : index
    %121 = vector.load %arg2[%c80, %c0_70] : memref<160x8xf32, #tpu.memory_space<vmem>>, vector<8x8xf32>
    %c0_71 = arith.constant 0 : index
    %c358 = arith.constant 358 : index
    %122 = vector.load %arg6[%c0_71, %c358] : memref<8x1024xf32, #tpu.memory_space<vmem>>, vector<8x512xf32>
    %cst_72 = arith.constant dense<0.000000e+00> : vector<8x512xf32>
    %123 = tpu.matmul %121, %122, %cst_72 {dimension_numbers = #tpu.dot_dimension_numbers<[1], [0], [0], [1], [0, 0, 1, 1], [], []>} : vector<8x8xf32>, vector<8x512xf32>, vector<8x512xf32> -> vector<8x512xf32>
    %124 = arith.andi %52, %56 : vector<1x512xi1>
    %cst_73 = arith.constant 0.000000e+00 : f32
    %125 = vector.shape_cast %124 : vector<1x512xi1> to vector<1x512xi1>
    %126 = vector.broadcast %125 : vector<1x512xi1> to vector<8x512xi1>
    %127 = vector.broadcast %cst_73 : f32 to vector<8x512xf32>
    %128 = arith.select %126, %123, %127 : vector<8x512xi1>, vector<8x512xf32>
    %129 = arith.addf %120, %128 : vector<8x512xf32>
    %c0_74 = arith.constant 0 : index
    %c2 = arith.constant 2 : index
    %130 = vector.load %arg4[%c0_74, %c2] : memref<8x5xf32, #tpu.memory_space<vmem>>, vector<8x1xf32>
    %131 = vector.broadcast %130 : vector<8x1xf32> to vector<8x512xf32>
    %132 = arith.addf %129, %131 : vector<8x512xf32>
    %cst_75 = arith.constant 0.000000e+00 : f32
    %133 = vector.broadcast %cst_75 : f32 to vector<8x512xf32>
    %134 = arith.maximumf %132, %133 : vector<8x512xf32>
    %c16_76 = arith.constant 16 : index
    %c128_77 = arith.constant 128 : index
    %135 = vector.load %arg7[%c16_76, %c128_77] : memref<32x768xf32, #tpu.memory_space<vmem>>, vector<8x512xf32>
    tpu.vector_store %arg7[%c16_76, %c128_77], %134 {strides = array<i32>} : memref<32x768xf32, #tpu.memory_space<vmem>>, vector<8x512xf32>,
    %c12_i32 = arith.constant 12 : i32
    %136 = vector.broadcast %c12_i32 : i32 to vector<1x512xi32>
    %137 = arith.cmpi sge, %16, %136 : vector<1x512xi32>
    %c4_i32_78 = arith.constant 4 : i32
    %138 = vector.broadcast %c4_i32_78 : i32 to vector<1x512xi32>
    %139 = arith.cmpi slt, %16, %138 : vector<1x512xi32>
    %c12_i32_79 = arith.constant 12 : i32
    %140 = vector.broadcast %c12_i32_79 : i32 to vector<1x512xi32>
    %141 = arith.cmpi sge, %12, %140 : vector<1x512xi32>
    %c4_i32_80 = arith.constant 4 : i32
    %142 = vector.broadcast %c4_i32_80 : i32 to vector<1x512xi32>
    %143 = arith.cmpi slt, %12, %142 : vector<1x512xi32>
    %cst_81 = arith.constant 0.000000e+00 : f32
    %144 = vector.broadcast %cst_81 : f32 to vector<8x512xf32>
    %c88 = arith.constant 88 : index
    %c0_82 = arith.constant 0 : index
    %145 = vector.load %arg2[%c88, %c0_82] : memref<160x8xf32, #tpu.memory_space<vmem>>, vector<8x8xf32>
    %c0_83 = arith.constant 0 : index
    %c52 = arith.constant 52 : index
    %146 = vector.load %arg6[%c0_83, %c52] : memref<8x1024xf32, #tpu.memory_space<vmem>>, vector<8x512xf32>
    %cst_84 = arith.constant dense<0.000000e+00> : vector<8x512xf32>
    %147 = tpu.matmul %145, %146, %cst_84 {dimension_numbers = #tpu.dot_dimension_numbers<[1], [0], [0], [1], [0, 0, 1, 1], [], []>} : vector<8x8xf32>, vector<8x512xf32>, vector<8x512xf32> -> vector<8x512xf32>
    %148 = arith.andi %137, %141 : vector<1x512xi1>
    %cst_85 = arith.constant 0.000000e+00 : f32
    %149 = vector.shape_cast %148 : vector<1x512xi1> to vector<1x512xi1>
    %150 = vector.broadcast %149 : vector<1x512xi1> to vector<8x512xi1>
    %151 = vector.broadcast %cst_85 : f32 to vector<8x512xf32>
    %152 = arith.select %150, %147, %151 : vector<8x512xi1>, vector<8x512xf32>
    %153 = arith.addf %144, %152 : vector<8x512xf32>
    %c96 = arith.constant 96 : index
    %c0_86 = arith.constant 0 : index
    %154 = vector.load %arg2[%c96, %c0_86] : memref<160x8xf32, #tpu.memory_space<vmem>>, vector<8x8xf32>
    %c0_87 = arith.constant 0 : index
    %c64_88 = arith.constant 64 : index
    %155 = vector.load %arg6[%c0_87, %c64_88] : memref<8x1024xf32, #tpu.memory_space<vmem>>, vector<8x512xf32>
    %cst_89 = arith.constant dense<0.000000e+00> : vector<8x512xf32>
    %156 = tpu.matmul %154, %155, %cst_89 {dimension_numbers = #tpu.dot_dimension_numbers<[1], [0], [0], [1], [0, 0, 1, 1], [], []>} : vector<8x8xf32>, vector<8x512xf32>, vector<8x512xf32> -> vector<8x512xf32>
    %cst_90 = arith.constant 0.000000e+00 : f32
    %157 = vector.shape_cast %137 : vector<1x512xi1> to vector<1x512xi1>
    %158 = vector.broadcast %157 : vector<1x512xi1> to vector<8x512xi1>
    %159 = vector.broadcast %cst_90 : f32 to vector<8x512xf32>
    %160 = arith.select %158, %156, %159 : vector<8x512xi1>, vector<8x512xf32>
    %161 = arith.addf %153, %160 : vector<8x512xf32>
    %c104 = arith.constant 104 : index
    %c0_91 = arith.constant 0 : index
    %162 = vector.load %arg2[%c104, %c0_91] : memref<160x8xf32, #tpu.memory_space<vmem>>, vector<8x8xf32>
    %c0_92 = arith.constant 0 : index
    %c76 = arith.constant 76 : index
    %163 = vector.load %arg6[%c0_92, %c76] : memref<8x1024xf32, #tpu.memory_space<vmem>>, vector<8x512xf32>
    %cst_93 = arith.constant dense<0.000000e+00> : vector<8x512xf32>
    %164 = tpu.matmul %162, %163, %cst_93 {dimension_numbers = #tpu.dot_dimension_numbers<[1], [0], [0], [1], [0, 0, 1, 1], [], []>} : vector<8x8xf32>, vector<8x512xf32>, vector<8x512xf32> -> vector<8x512xf32>
    %165 = arith.andi %137, %143 : vector<1x512xi1>
    %cst_94 = arith.constant 0.000000e+00 : f32
    %166 = vector.shape_cast %165 : vector<1x512xi1> to vector<1x512xi1>
    %167 = vector.broadcast %166 : vector<1x512xi1> to vector<8x512xi1>
    %168 = vector.broadcast %cst_94 : f32 to vector<8x512xf32>
    %169 = arith.select %167, %164, %168 : vector<8x512xi1>, vector<8x512xf32>
    %170 = arith.addf %161, %169 : vector<8x512xf32>
    %c112 = arith.constant 112 : index
    %c0_95 = arith.constant 0 : index
    %171 = vector.load %arg2[%c112, %c0_95] : memref<160x8xf32, #tpu.memory_space<vmem>>, vector<8x8xf32>
    %c0_96 = arith.constant 0 : index
    %c244 = arith.constant 244 : index
    %172 = vector.load %arg6[%c0_96, %c244] : memref<8x1024xf32, #tpu.memory_space<vmem>>, vector<8x512xf32>
    %cst_97 = arith.constant dense<0.000000e+00> : vector<8x512xf32>
    %173 = tpu.matmul %171, %172, %cst_97 {dimension_numbers = #tpu.dot_dimension_numbers<[1], [0], [0], [1], [0, 0, 1, 1], [], []>} : vector<8x8xf32>, vector<8x512xf32>, vector<8x512xf32> -> vector<8x512xf32>
    %cst_98 = arith.constant 0.000000e+00 : f32
    %174 = vector.shape_cast %141 : vector<1x512xi1> to vector<1x512xi1>
    %175 = vector.broadcast %174 : vector<1x512xi1> to vector<8x512xi1>
    %176 = vector.broadcast %cst_98 : f32 to vector<8x512xf32>
    %177 = arith.select %175, %173, %176 : vector<8x512xi1>, vector<8x512xf32>
    %178 = arith.addf %170, %177 : vector<8x512xf32>
    %c120 = arith.constant 120 : index
    %c0_99 = arith.constant 0 : index
    %179 = vector.load %arg2[%c120, %c0_99] : memref<160x8xf32, #tpu.memory_space<vmem>>, vector<8x8xf32>
    %c0_100 = arith.constant 0 : index
    %c256_101 = arith.constant 256 : index
    %180 = vector.load %arg6[%c0_100, %c256_101] : memref<8x1024xf32, #tpu.memory_space<vmem>>, vector<8x512xf32>
    %cst_102 = arith.constant dense<0.000000e+00> : vector<8x512xf32>
    %181 = tpu.matmul %179, %180, %cst_102 {dimension_numbers = #tpu.dot_dimension_numbers<[1], [0], [0], [1], [0, 0, 1, 1], [], []>} : vector<8x8xf32>, vector<8x512xf32>, vector<8x512xf32> -> vector<8x512xf32>
    %182 = arith.addf %178, %181 : vector<8x512xf32>
    %c128_103 = arith.constant 128 : index
    %c0_104 = arith.constant 0 : index
    %183 = vector.load %arg2[%c128_103, %c0_104] : memref<160x8xf32, #tpu.memory_space<vmem>>, vector<8x8xf32>
    %c0_105 = arith.constant 0 : index
    %c268 = arith.constant 268 : index
    %184 = vector.load %arg6[%c0_105, %c268] : memref<8x1024xf32, #tpu.memory_space<vmem>>, vector<8x512xf32>
    %cst_106 = arith.constant dense<0.000000e+00> : vector<8x512xf32>
    %185 = tpu.matmul %183, %184, %cst_106 {dimension_numbers = #tpu.dot_dimension_numbers<[1], [0], [0], [1], [0, 0, 1, 1], [], []>} : vector<8x8xf32>, vector<8x512xf32>, vector<8x512xf32> -> vector<8x512xf32>
    %cst_107 = arith.constant 0.000000e+00 : f32
    %186 = vector.shape_cast %143 : vector<1x512xi1> to vector<1x512xi1>
    %187 = vector.broadcast %186 : vector<1x512xi1> to vector<8x512xi1>
    %188 = vector.broadcast %cst_107 : f32 to vector<8x512xf32>
    %189 = arith.select %187, %185, %188 : vector<8x512xi1>, vector<8x512xf32>
    %190 = arith.addf %182, %189 : vector<8x512xf32>
    %c136 = arith.constant 136 : index
    %c0_108 = arith.constant 0 : index
    %191 = vector.load %arg2[%c136, %c0_108] : memref<160x8xf32, #tpu.memory_space<vmem>>, vector<8x8xf32>
    %c0_109 = arith.constant 0 : index
    %c436 = arith.constant 436 : index
    %192 = vector.load %arg6[%c0_109, %c436] : memref<8x1024xf32, #tpu.memory_space<vmem>>, vector<8x512xf32>
    %cst_110 = arith.constant dense<0.000000e+00> : vector<8x512xf32>
    %193 = tpu.matmul %191, %192, %cst_110 {dimension_numbers = #tpu.dot_dimension_numbers<[1], [0], [0], [1], [0, 0, 1, 1], [], []>} : vector<8x8xf32>, vector<8x512xf32>, vector<8x512xf32> -> vector<8x512xf32>
    %194 = arith.andi %139, %141 : vector<1x512xi1>
    %cst_111 = arith.constant 0.000000e+00 : f32
    %195 = vector.shape_cast %194 : vector<1x512xi1> to vector<1x512xi1>
    %196 = vector.broadcast %195 : vector<1x512xi1> to vector<8x512xi1>
    %197 = vector.broadcast %cst_111 : f32 to vector<8x512xf32>
    %198 = arith.select %196, %193, %197 : vector<8x512xi1>, vector<8x512xf32>
    %199 = arith.addf %190, %198 : vector<8x512xf32>
    %c144 = arith.constant 144 : index
    %c0_112 = arith.constant 0 : index
    %200 = vector.load %arg2[%c144, %c0_112] : memref<160x8xf32, #tpu.memory_space<vmem>>, vector<8x8xf32>
    %c0_113 = arith.constant 0 : index
    %c448 = arith.constant 448 : index
    %201 = vector.load %arg6[%c0_113, %c448] : memref<8x1024xf32, #tpu.memory_space<vmem>>, vector<8x512xf32>
    %cst_114 = arith.constant dense<0.000000e+00> : vector<8x512xf32>
    %202 = tpu.matmul %200, %201, %cst_114 {dimension_numbers = #tpu.dot_dimension_numbers<[1], [0], [0], [1], [0, 0, 1, 1], [], []>} : vector<8x8xf32>, vector<8x512xf32>, vector<8x512xf32> -> vector<8x512xf32>
    %cst_115 = arith.constant 0.000000e+00 : f32
    %203 = vector.shape_cast %139 : vector<1x512xi1> to vector<1x512xi1>
    %204 = vector.broadcast %203 : vector<1x512xi1> to vector<8x512xi1>
    %205 = vector.broadcast %cst_115 : f32 to vector<8x512xf32>
    %206 = arith.select %204, %202, %205 : vector<8x512xi1>, vector<8x512xf32>
    %207 = arith.addf %199, %206 : vector<8x512xf32>
    %c152 = arith.constant 152 : index
    %c0_116 = arith.constant 0 : index
    %208 = vector.load %arg2[%c152, %c0_116] : memref<160x8xf32, #tpu.memory_space<vmem>>, vector<8x8xf32>
    %c0_117 = arith.constant 0 : index
    %c460 = arith.constant 460 : index
    %209 = vector.load %arg6[%c0_117, %c460] : memref<8x1024xf32, #tpu.memory_space<vmem>>, vector<8x512xf32>
    %cst_118 = arith.constant dense<0.000000e+00> : vector<8x512xf32>
    %210 = tpu.matmul %208, %209, %cst_118 {dimension_numbers = #tpu.dot_dimension_numbers<[1], [0], [0], [1], [0, 0, 1, 1], [], []>} : vector<8x8xf32>, vector<8x512xf32>, vector<8x512xf32> -> vector<8x512xf32>
    %211 = arith.andi %139, %143 : vector<1x512xi1>
    %cst_119 = arith.constant 0.000000e+00 : f32
    %212 = vector.shape_cast %211 : vector<1x512xi1> to vector<1x512xi1>
    %213 = vector.broadcast %212 : vector<1x512xi1> to vector<8x512xi1>
    %214 = vector.broadcast %cst_119 : f32 to vector<8x512xf32>
    %215 = arith.select %213, %210, %214 : vector<8x512xi1>, vector<8x512xf32>
    %216 = arith.addf %207, %215 : vector<8x512xf32>
    %c0_120 = arith.constant 0 : index
    %c3 = arith.constant 3 : index
    %217 = vector.load %arg4[%c0_120, %c3] : memref<8x5xf32, #tpu.memory_space<vmem>>, vector<8x1xf32>
    %218 = vector.broadcast %217 : vector<8x1xf32> to vector<8x512xf32>
    %219 = arith.addf %216, %218 : vector<8x512xf32>
    %cst_121 = arith.constant 0.000000e+00 : f32
    %220 = vector.broadcast %cst_121 : f32 to vector<8x512xf32>
    %221 = arith.maximumf %219, %220 : vector<8x512xf32>
    %c24_122 = arith.constant 24 : index
    %c128_123 = arith.constant 128 : index
    %222 = vector.load %arg7[%c24_122, %c128_123] : memref<32x768xf32, #tpu.memory_space<vmem>>, vector<8x512xf32>
    tpu.vector_store %arg7[%c24_122, %c128_123], %221 {strides = array<i32>} : memref<32x768xf32, #tpu.memory_space<vmem>>, vector<8x512xf32>,
    %c1_i32 = arith.constant 1 : i32
    %223 = vector.broadcast %c1_i32 : i32 to vector<1x512xi32>
    %224 = arith.cmpi sge, %16, %223 : vector<1x512xi32>
    %c15_i32_124 = arith.constant 15 : i32
    %225 = vector.broadcast %c15_i32_124 : i32 to vector<1x512xi32>
    %226 = arith.cmpi slt, %16, %225 : vector<1x512xi32>
    %c1_i32_125 = arith.constant 1 : i32
    %227 = vector.broadcast %c1_i32_125 : i32 to vector<1x512xi32>
    %228 = arith.cmpi sge, %12, %227 : vector<1x512xi32>
    %c15_i32_126 = arith.constant 15 : i32
    %229 = vector.broadcast %c15_i32_126 : i32 to vector<1x512xi32>
    %230 = arith.cmpi slt, %12, %229 : vector<1x512xi32>
    %cst_127 = arith.constant 0.000000e+00 : f32
    %231 = vector.broadcast %cst_127 : f32 to vector<8x512xf32>
    %c0_128 = arith.constant 0 : index
    %c0_129 = arith.constant 0 : index
    %232 = vector.load %arg3[%c0_128, %c0_129] : memref<72x32xf32, #tpu.memory_space<vmem>>, vector<8x32xf32>
    %c0_130 = arith.constant 0 : index
    %c111 = arith.constant 111 : index
    %233 = vector.load %arg7[%c0_130, %c111] : memref<32x768xf32, #tpu.memory_space<vmem>>, vector<32x512xf32>
    %cst_131 = arith.constant dense<0.000000e+00> : vector<8x512xf32>
    %234 = tpu.matmul %232, %233, %cst_131 {dimension_numbers = #tpu.dot_dimension_numbers<[1], [0], [0], [1], [0, 0, 1, 1], [], []>} : vector<8x32xf32>, vector<32x512xf32>, vector<8x512xf32> -> vector<8x512xf32>
    %235 = arith.andi %224, %228 : vector<1x512xi1>
    %cst_132 = arith.constant 0.000000e+00 : f32
    %236 = vector.shape_cast %235 : vector<1x512xi1> to vector<1x512xi1>
    %237 = vector.broadcast %236 : vector<1x512xi1> to vector<8x512xi1>
    %238 = vector.broadcast %cst_132 : f32 to vector<8x512xf32>
    %239 = arith.select %237, %234, %238 : vector<8x512xi1>, vector<8x512xf32>
    %240 = arith.addf %231, %239 : vector<8x512xf32>
    %c8_133 = arith.constant 8 : index
    %c0_134 = arith.constant 0 : index
    %241 = vector.load %arg3[%c8_133, %c0_134] : memref<72x32xf32, #tpu.memory_space<vmem>>, vector<8x32xf32>
    %c0_135 = arith.constant 0 : index
    %c112_136 = arith.constant 112 : index
    %242 = vector.load %arg7[%c0_135, %c112_136] : memref<32x768xf32, #tpu.memory_space<vmem>>, vector<32x512xf32>
    %cst_137 = arith.constant dense<0.000000e+00> : vector<8x512xf32>
    %243 = tpu.matmul %241, %242, %cst_137 {dimension_numbers = #tpu.dot_dimension_numbers<[1], [0], [0], [1], [0, 0, 1, 1], [], []>} : vector<8x32xf32>, vector<32x512xf32>, vector<8x512xf32> -> vector<8x512xf32>
    %cst_138 = arith.constant 0.000000e+00 : f32
    %244 = vector.shape_cast %224 : vector<1x512xi1> to vector<1x512xi1>
    %245 = vector.broadcast %244 : vector<1x512xi1> to vector<8x512xi1>
    %246 = vector.broadcast %cst_138 : f32 to vector<8x512xf32>
    %247 = arith.select %245, %243, %246 : vector<8x512xi1>, vector<8x512xf32>
    %248 = arith.addf %240, %247 : vector<8x512xf32>
    %c16_139 = arith.constant 16 : index
    %c0_140 = arith.constant 0 : index
    %249 = vector.load %arg3[%c16_139, %c0_140] : memref<72x32xf32, #tpu.memory_space<vmem>>, vector<8x32xf32>
    %c0_141 = arith.constant 0 : index
    %c113 = arith.constant 113 : index
    %250 = vector.load %arg7[%c0_141, %c113] : memref<32x768xf32, #tpu.memory_space<vmem>>, vector<32x512xf32>
    %cst_142 = arith.constant dense<0.000000e+00> : vector<8x512xf32>
    %251 = tpu.matmul %249, %250, %cst_142 {dimension_numbers = #tpu.dot_dimension_numbers<[1], [0], [0], [1], [0, 0, 1, 1], [], []>} : vector<8x32xf32>, vector<32x512xf32>, vector<8x512xf32> -> vector<8x512xf32>
    %252 = arith.andi %224, %230 : vector<1x512xi1>
    %cst_143 = arith.constant 0.000000e+00 : f32
    %253 = vector.shape_cast %252 : vector<1x512xi1> to vector<1x512xi1>
    %254 = vector.broadcast %253 : vector<1x512xi1> to vector<8x512xi1>
    %255 = vector.broadcast %cst_143 : f32 to vector<8x512xf32>
    %256 = arith.select %254, %251, %255 : vector<8x512xi1>, vector<8x512xf32>
    %257 = arith.addf %248, %256 : vector<8x512xf32>
    %c24_144 = arith.constant 24 : index
    %c0_145 = arith.constant 0 : index
    %258 = vector.load %arg3[%c24_144, %c0_145] : memref<72x32xf32, #tpu.memory_space<vmem>>, vector<8x32xf32>
    %c0_146 = arith.constant 0 : index
    %c127 = arith.constant 127 : index
    %259 = vector.load %arg7[%c0_146, %c127] : memref<32x768xf32, #tpu.memory_space<vmem>>, vector<32x512xf32>
    %cst_147 = arith.constant dense<0.000000e+00> : vector<8x512xf32>
    %260 = tpu.matmul %258, %259, %cst_147 {dimension_numbers = #tpu.dot_dimension_numbers<[1], [0], [0], [1], [0, 0, 1, 1], [], []>} : vector<8x32xf32>, vector<32x512xf32>, vector<8x512xf32> -> vector<8x512xf32>
    %cst_148 = arith.constant 0.000000e+00 : f32
    %261 = vector.shape_cast %228 : vector<1x512xi1> to vector<1x512xi1>
    %262 = vector.broadcast %261 : vector<1x512xi1> to vector<8x512xi1>
    %263 = vector.broadcast %cst_148 : f32 to vector<8x512xf32>
    %264 = arith.select %262, %260, %263 : vector<8x512xi1>, vector<8x512xf32>
    %265 = arith.addf %257, %264 : vector<8x512xf32>
    %c32_149 = arith.constant 32 : index
    %c0_150 = arith.constant 0 : index
    %266 = vector.load %arg3[%c32_149, %c0_150] : memref<72x32xf32, #tpu.memory_space<vmem>>, vector<8x32xf32>
    %c0_151 = arith.constant 0 : index
    %c128_152 = arith.constant 128 : index
    %267 = vector.load %arg7[%c0_151, %c128_152] : memref<32x768xf32, #tpu.memory_space<vmem>>, vector<32x512xf32>
    %cst_153 = arith.constant dense<0.000000e+00> : vector<8x512xf32>
    %268 = tpu.matmul %266, %267, %cst_153 {dimension_numbers = #tpu.dot_dimension_numbers<[1], [0], [0], [1], [0, 0, 1, 1], [], []>} : vector<8x32xf32>, vector<32x512xf32>, vector<8x512xf32> -> vector<8x512xf32>
    %269 = arith.addf %265, %268 : vector<8x512xf32>
    %c40_154 = arith.constant 40 : index
    %c0_155 = arith.constant 0 : index
    %270 = vector.load %arg3[%c40_154, %c0_155] : memref<72x32xf32, #tpu.memory_space<vmem>>, vector<8x32xf32>
    %c0_156 = arith.constant 0 : index
    %c129 = arith.constant 129 : index
    %271 = vector.load %arg7[%c0_156, %c129] : memref<32x768xf32, #tpu.memory_space<vmem>>, vector<32x512xf32>
    %cst_157 = arith.constant dense<0.000000e+00> : vector<8x512xf32>
    %272 = tpu.matmul %270, %271, %cst_157 {dimension_numbers = #tpu.dot_dimension_numbers<[1], [0], [0], [1], [0, 0, 1, 1], [], []>} : vector<8x32xf32>, vector<32x512xf32>, vector<8x512xf32> -> vector<8x512xf32>
    %cst_158 = arith.constant 0.000000e+00 : f32
    %273 = vector.shape_cast %230 : vector<1x512xi1> to vector<1x512xi1>
    %274 = vector.broadcast %273 : vector<1x512xi1> to vector<8x512xi1>
    %275 = vector.broadcast %cst_158 : f32 to vector<8x512xf32>
    %276 = arith.select %274, %272, %275 : vector<8x512xi1>, vector<8x512xf32>
    %277 = arith.addf %269, %276 : vector<8x512xf32>
    %c48_159 = arith.constant 48 : index
    %c0_160 = arith.constant 0 : index
    %278 = vector.load %arg3[%c48_159, %c0_160] : memref<72x32xf32, #tpu.memory_space<vmem>>, vector<8x32xf32>
    %c0_161 = arith.constant 0 : index
    %c143 = arith.constant 143 : index
    %279 = vector.load %arg7[%c0_161, %c143] : memref<32x768xf32, #tpu.memory_space<vmem>>, vector<32x512xf32>
    %cst_162 = arith.constant dense<0.000000e+00> : vector<8x512xf32>
    %280 = tpu.matmul %278, %279, %cst_162 {dimension_numbers = #tpu.dot_dimension_numbers<[1], [0], [0], [1], [0, 0, 1, 1], [], []>} : vector<8x32xf32>, vector<32x512xf32>, vector<8x512xf32> -> vector<8x512xf32>
    %281 = arith.andi %226, %228 : vector<1x512xi1>
    %cst_163 = arith.constant 0.000000e+00 : f32
    %282 = vector.shape_cast %281 : vector<1x512xi1> to vector<1x512xi1>
    %283 = vector.broadcast %282 : vector<1x512xi1> to vector<8x512xi1>
    %284 = vector.broadcast %cst_163 : f32 to vector<8x512xf32>
    %285 = arith.select %283, %280, %284 : vector<8x512xi1>, vector<8x512xf32>
    %286 = arith.addf %277, %285 : vector<8x512xf32>
    %c56_164 = arith.constant 56 : index
    %c0_165 = arith.constant 0 : index
    %287 = vector.load %arg3[%c56_164, %c0_165] : memref<72x32xf32, #tpu.memory_space<vmem>>, vector<8x32xf32>
    %c0_166 = arith.constant 0 : index
    %c144_167 = arith.constant 144 : index
    %288 = vector.load %arg7[%c0_166, %c144_167] : memref<32x768xf32, #tpu.memory_space<vmem>>, vector<32x512xf32>
    %cst_168 = arith.constant dense<0.000000e+00> : vector<8x512xf32>
    %289 = tpu.matmul %287, %288, %cst_168 {dimension_numbers = #tpu.dot_dimension_numbers<[1], [0], [0], [1], [0, 0, 1, 1], [], []>} : vector<8x32xf32>, vector<32x512xf32>, vector<8x512xf32> -> vector<8x512xf32>
    %cst_169 = arith.constant 0.000000e+00 : f32
    %290 = vector.shape_cast %226 : vector<1x512xi1> to vector<1x512xi1>
    %291 = vector.broadcast %290 : vector<1x512xi1> to vector<8x512xi1>
    %292 = vector.broadcast %cst_169 : f32 to vector<8x512xf32>
    %293 = arith.select %291, %289, %292 : vector<8x512xi1>, vector<8x512xf32>
    %294 = arith.addf %286, %293 : vector<8x512xf32>
    %c64_170 = arith.constant 64 : index
    %c0_171 = arith.constant 0 : index
    %295 = vector.load %arg3[%c64_170, %c0_171] : memref<72x32xf32, #tpu.memory_space<vmem>>, vector<8x32xf32>
    %c0_172 = arith.constant 0 : index
    %c145 = arith.constant 145 : index
    %296 = vector.load %arg7[%c0_172, %c145] : memref<32x768xf32, #tpu.memory_space<vmem>>, vector<32x512xf32>
    %cst_173 = arith.constant dense<0.000000e+00> : vector<8x512xf32>
    %297 = tpu.matmul %295, %296, %cst_173 {dimension_numbers = #tpu.dot_dimension_numbers<[1], [0], [0], [1], [0, 0, 1, 1], [], []>} : vector<8x32xf32>, vector<32x512xf32>, vector<8x512xf32> -> vector<8x512xf32>
    %298 = arith.andi %226, %230 : vector<1x512xi1>
    %cst_174 = arith.constant 0.000000e+00 : f32
    %299 = vector.shape_cast %298 : vector<1x512xi1> to vector<1x512xi1>
    %300 = vector.broadcast %299 : vector<1x512xi1> to vector<8x512xi1>
    %301 = vector.broadcast %cst_174 : f32 to vector<8x512xf32>
    %302 = arith.select %300, %297, %301 : vector<8x512xi1>, vector<8x512xf32>
    %303 = arith.addf %294, %302 : vector<8x512xf32>
    %c0_175 = arith.constant 0 : index
    %c4 = arith.constant 4 : index
    %304 = vector.load %arg4[%c0_175, %c4] : memref<8x5xf32, #tpu.memory_space<vmem>>, vector<8x1xf32>
    %305 = vector.broadcast %304 : vector<8x1xf32> to vector<8x512xf32>
    %306 = arith.addf %303, %305 : vector<8x512xf32>
    %cst_176 = arith.constant 0.000000e+00 : f32
    %307 = vector.broadcast %cst_176 : f32 to vector<8x512xf32>
    %308 = arith.maximumf %306, %307 : vector<8x512xf32>
    %c0_177 = arith.constant 0 : index
    %c0_178 = arith.constant 0 : index
    %309 = vector.load %arg5[%c0_177, %c0_178] : memref<8x512xf32, #tpu.memory_space<vmem>>, vector<8x512xf32>
    tpu.vector_store %arg5[%c0_177, %c0_178], %308 {strides = array<i32>} : memref<8x512xf32, #tpu.memory_space<vmem>>, vector<8x512xf32>,
    return
  }
  func.func @transform_0(%arg0: i32) -> (i32, i32) {
    %c0_i32 = arith.constant 0 : i32
    %c0_i32_0 = arith.constant 0 : i32
    %c0_i32_1 = arith.constant 0 : i32
    return %c0_i32, %c0_i32_0 : i32, i32
  }
  func.func @transform_1(%arg0: i32) -> (i32, i32) {
    %c0_i32 = arith.constant 0 : i32
    %c0_i32_0 = arith.constant 0 : i32
    %c0_i32_1 = arith.constant 0 : i32
    return %c0_i32, %c0_i32_0 : i32, i32
  }
  func.func @transform_2(%arg0: i32) -> (i32, i32) {
    %c0_i32 = arith.constant 0 : i32
    %c0_i32_0 = arith.constant 0 : i32
    %c0_i32_1 = arith.constant 0 : i32
    return %c0_i32, %c0_i32_0 : i32, i32
  }
  func.func @transform_3(%arg0: i32) -> (i32, i32) {
    %c0_i32 = arith.constant 0 : i32
    %c0_i32_0 = arith.constant 0 : i32
    %c0_i32_1 = arith.constant 0 : i32
    return %c0_i32, %c0_i32_0 : i32, i32
  }
  func.func @transform_4(%arg0: i32) -> (i32, i32) {
    %c0_i32 = arith.constant 0 : i32
    %c0_i32_0 = arith.constant 0 : i32
    %c0_i32_1 = arith.constant 0 : i32
    return %c0_i32, %c0_i32_0 : i32, i32
  }
}

</mosaic_0001>

<llo_original>
// kernel: aspp_forward.1
$region0: #{aspp_forward.1}
  #allocation0 [shape = 'u32[]', space=smem, size = 0x4, offset = 0x4, fixed_abs, tag = 'smem constant byte address 0x4 - core index']
  #allocation1 [shape = 'u32[72,128]{1,0:T(1,128)}', space=vmem, size = 0x9000, scoped, tag = 'internal scratch']
  #allocation2 [shape = 'f32[8,1024]{1,0:T(8,128)}', space=vmem, size = 0x8000, scoped, tag = 'scratch operand']
  #allocation3 [shape = 'f32[32,768]{1,0:T(8,128)}', space=vmem, size = 0x18000, scoped, tag = 'scratch operand']
  %s0 = inlined_call_operand.vmem [shape: f32[8,512], index: 0, kind: input, shape index: {}]
  %s1 = inlined_call_operand.vmem [shape: f32[160,8], index: 1, kind: input, shape index: {}]
  %s2 = inlined_call_operand.vmem [shape: f32[72,32], index: 2, kind: input, shape index: {}]
  %s3 = inlined_call_operand.vmem [shape: f32[8,5], index: 3, kind: input, shape index: {}]
  %s4 = inlined_call_operand.vmem [shape: f32[8,512], index: 4, kind: output, shape index: {}]
  %s5 = sld [smem:[#allocation0]]
  $region26: #{aspp_forward.1} parent=0
    _
  %s7 = ssub.s32 1, %s5
  %s8 = scalar_select 0, %s7, %s5
  // Predicated region
  $region2: #{aspp_forward.1} parent=0 // pred_check
    _
  $region3: #{aspp_forward.1} parent=0 // pred_check_branch
    %10 = sbr.rel (0) target = $region5
  $region4: #{aspp_forward.1} parent=0 // pred_region
    _
  $region5: #{aspp_forward.1} parent=0 // pred_fallthru
    _
  // Predicated region
  $region6: #{aspp_forward.1} parent=0 // pred_check
    _
  $region7: #{aspp_forward.1} parent=0 // pred_check_branch
    %12 = sbr.rel (0) target = $region9
  $region8: #{aspp_forward.1} parent=0 // pred_region
    _
  $region9: #{aspp_forward.1} parent=0 // pred_fallthru
    _
  // Predicated region
  $region10: #{aspp_forward.1} parent=0 // pred_check
    _
  $region11: #{aspp_forward.1} parent=0 // pred_check_branch
    %14 = sbr.rel (0) target = $region13
  $region12: #{aspp_forward.1} parent=0 // pred_region
    _
  $region13: #{aspp_forward.1} parent=0 // pred_fallthru
    _
  // Predicated region
  $region14: #{aspp_forward.1} parent=0 // pred_check
    _
  $region15: #{aspp_forward.1} parent=0 // pred_check_branch
    %16 = sbr.rel (0) target = $region17
  $region16: #{aspp_forward.1} parent=0 // pred_region
    _
  $region17: #{aspp_forward.1} parent=0 // pred_fallthru
    _
  %17 = vst [vmem:[#allocation2] sm:$0xff] 0.0
  %18 = vst [vmem:[#allocation2 + $0x8] sm:$0xff] 0.0
  %19 = vst [vmem:[#allocation2 + $0x30] sm:$0xff] 0.0
  %20 = vst [vmem:[#allocation2 + $0x38] sm:$0xff] 0.0
  %v21 = vld [vmem:[%s0] sm:$0xff]
  %v22 = vld [vmem:[%s0 + $0x8] sm:$0xff]
  %v23 = vld [vmem:[%s0 + $0x10] sm:$0xff]
  %v24 = vld [vmem:[%s0 + $0x18] sm:$0xff]
  %25 = vst [vmem:[#allocation2 + $0x10] sm:$0xff] %v21
  %26 = vst [vmem:[#allocation2 + $0x18] sm:$0xff] %v22
  %27 = vst [vmem:[#allocation2 + $0x20] sm:$0xff] %v23
  %28 = vst [vmem:[#allocation2 + $0x28] sm:$0xff] %v24
  %29 = vst [vmem:[#allocation3] sm:$0xff] 0.0
  %30 = vst [vmem:[#allocation3 + $0x30] sm:$0xff] 0.0
  %31 = vst [vmem:[#allocation3 + $0x60] sm:$0xff] 0.0
  %32 = vst [vmem:[#allocation3 + $0x90] sm:$0xff] 0.0
  %33 = vst [vmem:[#allocation3 + $0x28] sm:$0xff] 0.0
  %34 = vst [vmem:[#allocation3 + $0x58] sm:$0xff] 0.0
  %35 = vst [vmem:[#allocation3 + $0x88] sm:$0xff] 0.0
  %36 = vst [vmem:[#allocation3 + $0xb8] sm:$0xff] 0.0
  %v37 = vlaneseq
  %v38 = vand.u32 %v37, 127
  %v39 = vadd.s32 %v38, 128
  %v40 = vadd.s32 %v38, 256
  %v41 = vadd.s32 %v38, 384
  %v42 = vand.u32 %v38, 15
  %v43 = vand.u32 %v39, 15
  %v44 = vand.u32 %v40, 15
  %v45 = vand.u32 %v41, 15
  %v46 = vshra.s32 %v38, 4
  %v47 = vshra.s32 %v39, 4
  %v48 = vshra.s32 %v40, 4
  %v49 = vshra.s32 %v41, 4
  %v50 = vand.u32 %v46, 15
  %v51 = vand.u32 %v47, 15
  %v52 = vand.u32 %v48, 15
  %v53 = vand.u32 %v49, 15
  %v54 = vld [vmem:[%s0] sm:$0xff]
  %v55 = vld [vmem:[%s0 + $0x8] sm:$0xff]
  %v56 = vadd.f32 %v54, %v55
  %57 = vadd.xlane.f32.xlu0 %v56
  %v58 = vpop.xlane.xlu0 %57
  %v59 = vrcp.pop 256.0
  %v60 = vmul.f32 256.0, %v59
  %v61 = vsub.f32 1.0, %v60
  %v62 = vmul.f32 %v59, %v61
  %v63 = vadd.f32 %v59, %v62
  %vm64 = vweird.f32 %v59
  %v65 = vsel %vm64, %v59, %v63
  %v66 = vmul.f32 %v58, %v65
  %v67 = vld [vmem:[%s0 + $0x10] sm:$0xff]
  %v68 = vld [vmem:[%s0 + $0x18] sm:$0xff]
  %v69 = vadd.f32 %v67, %v68
  %70 = vadd.xlane.f32.xlu0 %v69
  %v71 = vpop.xlane.xlu0 %70
  %v72 = vmul.f32 %v71, %v65
  %v73 = vld [vmem:[%s1] sm:$0xff]
  %v74 = vld [vmem:[%s3] sm:$0xff]
  %76 = vset.pattern.permute.xlu0 0
  %77 = vperm.xlu0 %76, %v74
  %v78 = vpop.permute.xlu0 %77
  %vm80 = vcmask 64512
  %v82 = vsel %vm80, %v73, 0
  %84 = vmatpush.msra.mxu0 0.0
  %85 = vmatpush.msra.mxu0 0.0
  %86 = vmatpush.msra.mxu0 0.0
  %87 = vmatpush.msra.mxu0 0.0
  %88 = vmatpush.msra.mxu0 0.0
  %89 = vmatpush.msra.mxu0 0.0
  %90 = vmatpush.msra.mxu0 0.0
  %91 = vmatpush.msra.mxu0 0.0
  %92 = vmatpush.msra.mxu0 0.0
  %93 = vmatpush.msra.mxu0 0.0
  %94 = vmatpush.msra.mxu0 0.0
  %95 = vmatpush.msra.mxu0 0.0
  %96 = vmatpush.msra.mxu0 0.0
  %97 = vmatpush.msra.mxu0 0.0
  %98 = vmatpush.msra.mxu0 0.0
  %99 = vmatpush.msra.mxu0 %v66
  %100 = vmatmul.f32.gmra.mxu0 %v82
  %v101 = vpop.f32.mrf.mxu0
  %v102 = vadd.f32 %v78, %v101
  %103 = vdwg.mxu0
  %104 = vmatpush.msra.mxu0 0.0
  %105 = vmatpush.msra.mxu0 0.0
  %106 = vmatpush.msra.mxu0 0.0
  %107 = vmatpush.msra.mxu0 0.0
  %108 = vmatpush.msra.mxu0 0.0
  %109 = vmatpush.msra.mxu0 0.0
  %110 = vmatpush.msra.mxu0 0.0
  %111 = vmatpush.msra.mxu0 0.0
  %112 = vmatpush.msra.mxu0 0.0
  %113 = vmatpush.msra.mxu0 0.0
  %114 = vmatpush.msra.mxu0 0.0
  %115 = vmatpush.msra.mxu0 0.0
  %116 = vmatpush.msra.mxu0 0.0
  %117 = vmatpush.msra.mxu0 0.0
  %118 = vmatpush.msra.mxu0 0.0
  %119 = vmatpush.msra.mxu0 %v72
  %120 = vmatmul.f32.gmra.mxu0 %v82
  %v121 = vpop.f32.mrf.mxu0
  %v122 = vadd.f32 %v78, %v121
  %123 = vdwg.mxu0
  %v124 = vmax.f32 %v102, 0.0
  %v125 = vmax.f32 %v122, 0.0
  %126 = vst [vmem:[#allocation3 + $0x8] sm:$0xff] %v124
  %127 = vst [vmem:[#allocation3 + $0x10] sm:$0xff] %v124
  %128 = vst [vmem:[#allocation3 + $0x18] sm:$0xff] %v125
  %129 = vst [vmem:[#allocation3 + $0x20] sm:$0xff] %v125
  %v130 = vld [vmem:[%s1 + $0x8] sm:$0xff]
  %v131 = vld [vmem:[%s0] sm:$0xff]
  %v132 = vld [vmem:[%s0 + $0x8] sm:$0xff]
  %v133 = vld [vmem:[%s0 + $0x10] sm:$0xff]
  %v134 = vld [vmem:[%s0 + $0x18] sm:$0xff]
  %v135 = vld [vmem:[%s3] sm:$0xff]
  %137 = vset.pattern.permute.xlu0 1
  %138 = vperm.xlu0 %137, %v135
  %v139 = vpop.permute.xlu0 %138
  %v142 = vsel %vm80, %v130, 0
  %144 = vmatpush.msra.mxu0 0.0
  %145 = vmatpush.msra.mxu0 0.0
  %146 = vmatpush.msra.mxu0 0.0
  %147 = vmatpush.msra.mxu0 0.0
  %148 = vmatpush.msra.mxu0 0.0
  %149 = vmatpush.msra.mxu0 0.0
  %150 = vmatpush.msra.mxu0 0.0
  %151 = vmatpush.msra.mxu0 0.0
  %152 = vmatpush.msra.mxu0 0.0
  %153 = vmatpush.msra.mxu0 0.0
  %154 = vmatpush.msra.mxu0 0.0
  %155 = vmatpush.msra.mxu0 0.0
  %156 = vmatpush.msra.mxu0 0.0
  %157 = vmatpush.msra.mxu0 0.0
  %158 = vmatpush.msra.mxu0 0.0
  %159 = vmatpush.msra.mxu0 %v131
  %160 = vmatmul.f32.gmra.mxu0 %v142
  %v161 = vpop.f32.mrf.mxu0
  %v162 = vadd.f32 %v139, %v161
  %163 = vdwg.mxu0
  %164 = vmatpush.msra.mxu0 0.0
  %165 = vmatpush.msra.mxu0 0.0
  %166 = vmatpush.msra.mxu0 0.0
  %167 = vmatpush.msra.mxu0 0.0
  %168 = vmatpush.msra.mxu0 0.0
  %169 = vmatpush.msra.mxu0 0.0
  %170 = vmatpush.msra.mxu0 0.0
  %171 = vmatpush.msra.mxu0 0.0
  %172 = vmatpush.msra.mxu0 0.0
  %173 = vmatpush.msra.mxu0 0.0
  %174 = vmatpush.msra.mxu0 0.0
  %175 = vmatpush.msra.mxu0 0.0
  %176 = vmatpush.msra.mxu0 0.0
  %177 = vmatpush.msra.mxu0 0.0
  %178 = vmatpush.msra.mxu0 0.0
  %179 = vmatpush.msra.mxu0 %v132
  %180 = vmatmul.f32.gmra.mxu0 %v142
  %v181 = vpop.f32.mrf.mxu0
  %v182 = vadd.f32 %v139, %v181
  %183 = vdwg.mxu0
  %184 = vmatpush.msra.mxu0 0.0
  %185 = vmatpush.msra.mxu0 0.0
  %186 = vmatpush.msra.mxu0 0.0
  %187 = vmatpush.msra.mxu0 0.0
  %188 = vmatpush.msra.mxu0 0.0
  %189 = vmatpush.msra.mxu0 0.0
  %190 = vmatpush.msra.mxu0 0.0
  %191 = vmatpush.msra.mxu0 0.0
  %192 = vmatpush.msra.mxu0 0.0
  %193 = vmatpush.msra.mxu0 0.0
  %194 = vmatpush.msra.mxu0 0.0
  %195 = vmatpush.msra.mxu0 0.0
  %196 = vmatpush.msra.mxu0 0.0
  %197 = vmatpush.msra.mxu0 0.0
  %198 = vmatpush.msra.mxu0 0.0
  %199 = vmatpush.msra.mxu0 %v133
  %200 = vmatmul.f32.gmra.mxu0 %v142
  %v201 = vpop.f32.mrf.mxu0
  %v202 = vadd.f32 %v139, %v201
  %203 = vdwg.mxu0
  %204 = vmatpush.msra.mxu0 0.0
  %205 = vmatpush.msra.mxu0 0.0
  %206 = vmatpush.msra.mxu0 0.0
  %207 = vmatpush.msra.mxu0 0.0
  %208 = vmatpush.msra.mxu0 0.0
  %209 = vmatpush.msra.mxu0 0.0
  %210 = vmatpush.msra.mxu0 0.0
  %211 = vmatpush.msra.mxu0 0.0
  %212 = vmatpush.msra.mxu0 0.0
  %213 = vmatpush.msra.mxu0 0.0
  %214 = vmatpush.msra.mxu0 0.0
  %215 = vmatpush.msra.mxu0 0.0
  %216 = vmatpush.msra.mxu0 0.0
  %217 = vmatpush.msra.mxu0 0.0
  %218 = vmatpush.msra.mxu0 0.0
  %219 = vmatpush.msra.mxu0 %v134
  %220 = vmatmul.f32.gmra.mxu0 %v142
  %v221 = vpop.f32.mrf.mxu0
  %v222 = vadd.f32 %v139, %v221
  %223 = vdwg.mxu0
  %v224 = vmax.f32 %v162, 0.0
  %v225 = vmax.f32 %v182, 0.0
  %v226 = vmax.f32 %v202, 0.0
  %v227 = vmax.f32 %v222, 0.0
  %228 = vst [vmem:[#allocation3 + $0x38] sm:$0xff] %v224
  %229 = vst [vmem:[#allocation3 + $0x40] sm:$0xff] %v225
  %230 = vst [vmem:[#allocation3 + $0x48] sm:$0xff] %v226
  %231 = vst [vmem:[#allocation3 + $0x50] sm:$0xff] %v227
  %vm232 = vcmp.ge.s32.totalorder %v50, 6
  %vm233 = vcmp.ge.s32.totalorder %v51, 6
  %vm234 = vcmp.ge.s32.totalorder %v52, 6
  %vm235 = vcmp.ge.s32.totalorder %v53, 6
  %vm236 = vcmp.lt.s32.totalorder %v50, 10
  %vm237 = vcmp.lt.s32.totalorder %v51, 10
  %vm238 = vcmp.lt.s32.totalorder %v52, 10
  %vm239 = vcmp.lt.s32.totalorder %v53, 10
  %vm240 = vcmp.ge.s32.totalorder %v42, 6
  %vm241 = vcmp.ge.s32.totalorder %v43, 6
  %vm242 = vcmp.ge.s32.totalorder %v44, 6
  %vm243 = vcmp.ge.s32.totalorder %v45, 6
  %vm244 = vcmp.lt.s32.totalorder %v42, 10
  %vm245 = vcmp.lt.s32.totalorder %v43, 10
  %vm246 = vcmp.lt.s32.totalorder %v44, 10
  %vm247 = vcmp.lt.s32.totalorder %v45, 10
  %v248 = vld [vmem:[%s1 + $0x10] sm:$0xff]
  %v249 = vld [vmem:[#allocation2 + $0x8] sm:$0xff]
  %v250 = vld [vmem:[#allocation2 + $0x10] sm:$0xff]
  %v251 = vld [vmem:[#allocation2 + $0x18] sm:$0xff]
  %v252 = vld [vmem:[#allocation2 + $0x20] sm:$0xff]
  %v253 = vld [vmem:[#allocation2 + $0x28] sm:$0xff]
  %259 = vrot.lane.b32.xlu0 %v249, 102
  %v260 = vpop.permute.xlu0 %259
  %261 = vrot.lane.b32.xlu0 %v250, 102
  %v262 = vpop.permute.xlu0 %261
  %263 = vrot.lane.b32.xlu0 %v251, 102
  %v264 = vpop.permute.xlu0 %263
  %265 = vrot.lane.b32.xlu0 %v252, 102
  %v266 = vpop.permute.xlu0 %265
  %267 = vrot.lane.b32.xlu0 %v253, 102
  %v268 = vpop.permute.xlu0 %267
  %vm269 = vcmask 834560
  %v270 = vsel %vm269, %v260, %v262
  %v271 = vsel %vm269, %v262, %v264
  %v272 = vsel %vm269, %v264, %v266
  %v273 = vsel %vm269, %v266, %v268
  %v279 = vsel %vm80, %v248, 0
  %281 = vmatpush.msra.mxu0 0.0
  %282 = vmatpush.msra.mxu0 0.0
  %283 = vmatpush.msra.mxu0 0.0
  %284 = vmatpush.msra.mxu0 0.0
  %285 = vmatpush.msra.mxu0 0.0
  %286 = vmatpush.msra.mxu0 0.0
  %287 = vmatpush.msra.mxu0 0.0
  %288 = vmatpush.msra.mxu0 0.0
  %289 = vmatpush.msra.mxu0 0.0
  %290 = vmatpush.msra.mxu0 0.0
  %291 = vmatpush.msra.mxu0 0.0
  %292 = vmatpush.msra.mxu0 0.0
  %293 = vmatpush.msra.mxu0 0.0
  %294 = vmatpush.msra.mxu0 0.0
  %295 = vmatpush.msra.mxu0 0.0
  %296 = vmatpush.msra.mxu0 %v270
  %297 = vmatmul.f32.gmra.mxu0 %v279
  %v298 = vpop.f32.mrf.mxu0
  %v299 = vadd.f32 0.0, %v298
  %300 = vdwg.mxu0
  %301 = vmatpush.msra.mxu0 0.0
  %302 = vmatpush.msra.mxu0 0.0
  %303 = vmatpush.msra.mxu0 0.0
  %304 = vmatpush.msra.mxu0 0.0
  %305 = vmatpush.msra.mxu0 0.0
  %306 = vmatpush.msra.mxu0 0.0
  %307 = vmatpush.msra.mxu0 0.0
  %308 = vmatpush.msra.mxu0 0.0
  %309 = vmatpush.msra.mxu0 0.0
  %310 = vmatpush.msra.mxu0 0.0
  %311 = vmatpush.msra.mxu0 0.0
  %312 = vmatpush.msra.mxu0 0.0
  %313 = vmatpush.msra.mxu0 0.0
  %314 = vmatpush.msra.mxu0 0.0
  %315 = vmatpush.msra.mxu0 0.0
  %316 = vmatpush.msra.mxu0 %v271
  %317 = vmatmul.f32.gmra.mxu0 %v279
  %v318 = vpop.f32.mrf.mxu0
  %v319 = vadd.f32 0.0, %v318
  %320 = vdwg.mxu0
  %321 = vmatpush.msra.mxu0 0.0
  %322 = vmatpush.msra.mxu0 0.0
  %323 = vmatpush.msra.mxu0 0.0
  %324 = vmatpush.msra.mxu0 0.0
  %325 = vmatpush.msra.mxu0 0.0
  %326 = vmatpush.msra.mxu0 0.0
  %327 = vmatpush.msra.mxu0 0.0
  %328 = vmatpush.msra.mxu0 0.0
  %329 = vmatpush.msra.mxu0 0.0
  %330 = vmatpush.msra.mxu0 0.0
  %331 = vmatpush.msra.mxu0 0.0
  %332 = vmatpush.msra.mxu0 0.0
  %333 = vmatpush.msra.mxu0 0.0
  %334 = vmatpush.msra.mxu0 0.0
  %335 = vmatpush.msra.mxu0 0.0
  %336 = vmatpush.msra.mxu0 %v272
  %337 = vmatmul.f32.gmra.mxu0 %v279
  %v338 = vpop.f32.mrf.mxu0
  %v339 = vadd.f32 0.0, %v338
  %340 = vdwg.mxu0
  %341 = vmatpush.msra.mxu0 0.0
  %342 = vmatpush.msra.mxu0 0.0
  %343 = vmatpush.msra.mxu0 0.0
  %344 = vmatpush.msra.mxu0 0.0
  %345 = vmatpush.msra.mxu0 0.0
  %346 = vmatpush.msra.mxu0 0.0
  %347 = vmatpush.msra.mxu0 0.0
  %348 = vmatpush.msra.mxu0 0.0
  %349 = vmatpush.msra.mxu0 0.0
  %350 = vmatpush.msra.mxu0 0.0
  %351 = vmatpush.msra.mxu0 0.0
  %352 = vmatpush.msra.mxu0 0.0
  %353 = vmatpush.msra.mxu0 0.0
  %354 = vmatpush.msra.mxu0 0.0
  %355 = vmatpush.msra.mxu0 0.0
  %356 = vmatpush.msra.mxu0 %v273
  %357 = vmatmul.f32.gmra.mxu0 %v279
  %v358 = vpop.f32.mrf.mxu0
  %v359 = vadd.f32 0.0, %v358
  %360 = vdwg.mxu0
  %vm361 = vmand %vm232, %vm240
  %vm362 = vmand %vm233, %vm241
  %vm363 = vmand %vm234, %vm242
  %vm364 = vmand %vm235, %vm243
  %v365 = vsel %vm361, 1, 0
  %v366 = vsel %vm362, 1, 0
  %v367 = vsel %vm363, 1, 0
  %v368 = vsel %vm364, 1, 0
  %vm369 = vcmp.eq.s32.totalorder %v365, 1
  %vm370 = vcmp.eq.s32.totalorder %v366, 1
  %vm371 = vcmp.eq.s32.totalorder %v367, 1
  %vm372 = vcmp.eq.s32.totalorder %v368, 1
  %v373 = vsel %vm369, %v299, 0.0
  %v374 = vsel %vm370, %v319, 0.0
  %v375 = vsel %vm371, %v339, 0.0
  %v376 = vsel %vm372, %v359, 0.0
  %v377 = vadd.f32 %v373, 0.0
  %v378 = vadd.f32 %v374, 0.0
  %v379 = vadd.f32 %v375, 0.0
  %v380 = vadd.f32 %v376, 0.0
  %v381 = vld [vmem:[%s1 + $0x18] sm:$0xff]
  %382 = vrot.lane.b32.xlu0 %v249, 96
  %v383 = vpop.permute.xlu0 %382
  %384 = vrot.lane.b32.xlu0 %v250, 96
  %v385 = vpop.permute.xlu0 %384
  %386 = vrot.lane.b32.xlu0 %v251, 96
  %v387 = vpop.permute.xlu0 %386
  %388 = vrot.lane.b32.xlu0 %v252, 96
  %v389 = vpop.permute.xlu0 %388
  %390 = vrot.lane.b32.xlu0 %v253, 96
  %v391 = vpop.permute.xlu0 %390
  %vm392 = vcmask 785408
  %v393 = vsel %vm392, %v383, %v385
  %v394 = vsel %vm392, %v385, %v387
  %v395 = vsel %vm392, %v387, %v389
  %v396 = vsel %vm392, %v389, %v391
  %v402 = vsel %vm80, %v381, 0
  %404 = vmatpush.msra.mxu0 0.0
  %405 = vmatpush.msra.mxu0 0.0
  %406 = vmatpush.msra.mxu0 0.0
  %407 = vmatpush.msra.mxu0 0.0
  %408 = vmatpush.msra.mxu0 0.0
  %409 = vmatpush.msra.mxu0 0.0
  %410 = vmatpush.msra.mxu0 0.0
  %411 = vmatpush.msra.mxu0 0.0
  %412 = vmatpush.msra.mxu0 0.0
  %413 = vmatpush.msra.mxu0 0.0
  %414 = vmatpush.msra.mxu0 0.0
  %415 = vmatpush.msra.mxu0 0.0
  %416 = vmatpush.msra.mxu0 0.0
  %417 = vmatpush.msra.mxu0 0.0
  %418 = vmatpush.msra.mxu0 0.0
  %419 = vmatpush.msra.mxu0 %v393
  %420 = vmatmul.f32.gmra.mxu0 %v402
  %v421 = vpop.f32.mrf.mxu0
  %v422 = vadd.f32 0.0, %v421
  %423 = vdwg.mxu0
  %424 = vmatpush.msra.mxu0 0.0
  %425 = vmatpush.msra.mxu0 0.0
  %426 = vmatpush.msra.mxu0 0.0
  %427 = vmatpush.msra.mxu0 0.0
  %428 = vmatpush.msra.mxu0 0.0
  %429 = vmatpush.msra.mxu0 0.0
  %430 = vmatpush.msra.mxu0 0.0
  %431 = vmatpush.msra.mxu0 0.0
  %432 = vmatpush.msra.mxu0 0.0
  %433 = vmatpush.msra.mxu0 0.0
  %434 = vmatpush.msra.mxu0 0.0
  %435 = vmatpush.msra.mxu0 0.0
  %436 = vmatpush.msra.mxu0 0.0
  %437 = vmatpush.msra.mxu0 0.0
  %438 = vmatpush.msra.mxu0 0.0
  %439 = vmatpush.msra.mxu0 %v394
  %440 = vmatmul.f32.gmra.mxu0 %v402
  %v441 = vpop.f32.mrf.mxu0
  %v442 = vadd.f32 0.0, %v441
  %443 = vdwg.mxu0
  %444 = vmatpush.msra.mxu0 0.0
  %445 = vmatpush.msra.mxu0 0.0
  %446 = vmatpush.msra.mxu0 0.0
  %447 = vmatpush.msra.mxu0 0.0
  %448 = vmatpush.msra.mxu0 0.0
  %449 = vmatpush.msra.mxu0 0.0
  %450 = vmatpush.msra.mxu0 0.0
  %451 = vmatpush.msra.mxu0 0.0
  %452 = vmatpush.msra.mxu0 0.0
  %453 = vmatpush.msra.mxu0 0.0
  %454 = vmatpush.msra.mxu0 0.0
  %455 = vmatpush.msra.mxu0 0.0
  %456 = vmatpush.msra.mxu0 0.0
  %457 = vmatpush.msra.mxu0 0.0
  %458 = vmatpush.msra.mxu0 0.0
  %459 = vmatpush.msra.mxu0 %v395
  %460 = vmatmul.f32.gmra.mxu0 %v402
  %v461 = vpop.f32.mrf.mxu0
  %v462 = vadd.f32 0.0, %v461
  %463 = vdwg.mxu0
  %464 = vmatpush.msra.mxu0 0.0
  %465 = vmatpush.msra.mxu0 0.0
  %466 = vmatpush.msra.mxu0 0.0
  %467 = vmatpush.msra.mxu0 0.0
  %468 = vmatpush.msra.mxu0 0.0
  %469 = vmatpush.msra.mxu0 0.0
  %470 = vmatpush.msra.mxu0 0.0
  %471 = vmatpush.msra.mxu0 0.0
  %472 = vmatpush.msra.mxu0 0.0
  %473 = vmatpush.msra.mxu0 0.0
  %474 = vmatpush.msra.mxu0 0.0
  %475 = vmatpush.msra.mxu0 0.0
  %476 = vmatpush.msra.mxu0 0.0
  %477 = vmatpush.msra.mxu0 0.0
  %478 = vmatpush.msra.mxu0 0.0
  %479 = vmatpush.msra.mxu0 %v396
  %480 = vmatmul.f32.gmra.mxu0 %v402
  %v481 = vpop.f32.mrf.mxu0
  %v482 = vadd.f32 0.0, %v481
  %483 = vdwg.mxu0
  %v484 = vsel %vm232, 1, 0
  %v485 = vsel %vm233, 1, 0
  %v486 = vsel %vm234, 1, 0
  %v487 = vsel %vm235, 1, 0
  %vm488 = vcmp.eq.s32.totalorder %v484, 1
  %vm489 = vcmp.eq.s32.totalorder %v485, 1
  %vm490 = vcmp.eq.s32.totalorder %v486, 1
  %vm491 = vcmp.eq.s32.totalorder %v487, 1
  %v492 = vsel %vm488, %v422, 0.0
  %v493 = vsel %vm489, %v442, 0.0
  %v494 = vsel %vm490, %v462, 0.0
  %v495 = vsel %vm491, %v482, 0.0
  %v496 = vadd.f32 %v377, %v492
  %v497 = vadd.f32 %v378, %v493
  %v498 = vadd.f32 %v379, %v494
  %v499 = vadd.f32 %v380, %v495
  %v500 = vld [vmem:[%s1 + $0x20] sm:$0xff]
  %501 = vrot.lane.b32.xlu0 %v249, 90
  %v502 = vpop.permute.xlu0 %501
  %503 = vrot.lane.b32.xlu0 %v250, 90
  %v504 = vpop.permute.xlu0 %503
  %505 = vrot.lane.b32.xlu0 %v251, 90
  %v506 = vpop.permute.xlu0 %505
  %507 = vrot.lane.b32.xlu0 %v252, 90
  %v508 = vpop.permute.xlu0 %507
  %509 = vrot.lane.b32.xlu0 %v253, 90
  %v510 = vpop.permute.xlu0 %509
  %vm511 = vcmask 736256
  %v512 = vsel %vm511, %v502, %v504
  %v513 = vsel %vm511, %v504, %v506
  %v514 = vsel %vm511, %v506, %v508
  %v515 = vsel %vm511, %v508, %v510
  %v521 = vsel %vm80, %v500, 0
  %523 = vmatpush.msra.mxu0 0.0
  %524 = vmatpush.msra.mxu0 0.0
  %525 = vmatpush.msra.mxu0 0.0
  %526 = vmatpush.msra.mxu0 0.0
  %527 = vmatpush.msra.mxu0 0.0
  %528 = vmatpush.msra.mxu0 0.0
  %529 = vmatpush.msra.mxu0 0.0
  %530 = vmatpush.msra.mxu0 0.0
  %531 = vmatpush.msra.mxu0 0.0
  %532 = vmatpush.msra.mxu0 0.0
  %533 = vmatpush.msra.mxu0 0.0
  %534 = vmatpush.msra.mxu0 0.0
  %535 = vmatpush.msra.mxu0 0.0
  %536 = vmatpush.msra.mxu0 0.0
  %537 = vmatpush.msra.mxu0 0.0
  %538 = vmatpush.msra.mxu0 %v512
  %539 = vmatmul.f32.gmra.mxu0 %v521
  %v540 = vpop.f32.mrf.mxu0
  %v541 = vadd.f32 0.0, %v540
  %542 = vdwg.mxu0
  %543 = vmatpush.msra.mxu0 0.0
  %544 = vmatpush.msra.mxu0 0.0
  %545 = vmatpush.msra.mxu0 0.0
  %546 = vmatpush.msra.mxu0 0.0
  %547 = vmatpush.msra.mxu0 0.0
  %548 = vmatpush.msra.mxu0 0.0
  %549 = vmatpush.msra.mxu0 0.0
  %550 = vmatpush.msra.mxu0 0.0
  %551 = vmatpush.msra.mxu0 0.0
  %552 = vmatpush.msra.mxu0 0.0
  %553 = vmatpush.msra.mxu0 0.0
  %554 = vmatpush.msra.mxu0 0.0
  %555 = vmatpush.msra.mxu0 0.0
  %556 = vmatpush.msra.mxu0 0.0
  %557 = vmatpush.msra.mxu0 0.0
  %558 = vmatpush.msra.mxu0 %v513
  %559 = vmatmul.f32.gmra.mxu0 %v521
  %v560 = vpop.f32.mrf.mxu0
  %v561 = vadd.f32 0.0, %v560
  %562 = vdwg.mxu0
  %563 = vmatpush.msra.mxu0 0.0
  %564 = vmatpush.msra.mxu0 0.0
  %565 = vmatpush.msra.mxu0 0.0
  %566 = vmatpush.msra.mxu0 0.0
  %567 = vmatpush.msra.mxu0 0.0
  %568 = vmatpush.msra.mxu0 0.0
  %569 = vmatpush.msra.mxu0 0.0
  %570 = vmatpush.msra.mxu0 0.0
  %571 = vmatpush.msra.mxu0 0.0
  %572 = vmatpush.msra.mxu0 0.0
  %573 = vmatpush.msra.mxu0 0.0
  %574 = vmatpush.msra.mxu0 0.0
  %575 = vmatpush.msra.mxu0 0.0
  %576 = vmatpush.msra.mxu0 0.0
  %577 = vmatpush.msra.mxu0 0.0
  %578 = vmatpush.msra.mxu0 %v514
  %579 = vmatmul.f32.gmra.mxu0 %v521
  %v580 = vpop.f32.mrf.mxu0
  %v581 = vadd.f32 0.0, %v580
  %582 = vdwg.mxu0
  %583 = vmatpush.msra.mxu0 0.0
  %584 = vmatpush.msra.mxu0 0.0
  %585 = vmatpush.msra.mxu0 0.0
  %586 = vmatpush.msra.mxu0 0.0
  %587 = vmatpush.msra.mxu0 0.0
  %588 = vmatpush.msra.mxu0 0.0
  %589 = vmatpush.msra.mxu0 0.0
  %590 = vmatpush.msra.mxu0 0.0
  %591 = vmatpush.msra.mxu0 0.0
  %592 = vmatpush.msra.mxu0 0.0
  %593 = vmatpush.msra.mxu0 0.0
  %594 = vmatpush.msra.mxu0 0.0
  %595 = vmatpush.msra.mxu0 0.0
  %596 = vmatpush.msra.mxu0 0.0
  %597 = vmatpush.msra.mxu0 0.0
  %598 = vmatpush.msra.mxu0 %v515
  %599 = vmatmul.f32.gmra.mxu0 %v521
  %v600 = vpop.f32.mrf.mxu0
  %v601 = vadd.f32 0.0, %v600
  %602 = vdwg.mxu0
  %vm603 = vmand %vm232, %vm244
  %vm604 = vmand %vm233, %vm245
  %vm605 = vmand %vm234, %vm246
  %vm606 = vmand %vm235, %vm247
  %v607 = vsel %vm603, 1, 0
  %v608 = vsel %vm604, 1, 0
  %v609 = vsel %vm605, 1, 0
  %v610 = vsel %vm606, 1, 0
  %vm611 = vcmp.eq.s32.totalorder %v607, 1
  %vm612 = vcmp.eq.s32.totalorder %v608, 1
  %vm613 = vcmp.eq.s32.totalorder %v609, 1
  %vm614 = vcmp.eq.s32.totalorder %v610, 1
  %v615 = vsel %vm611, %v541, 0.0
  %v616 = vsel %vm612, %v561, 0.0
  %v617 = vsel %vm613, %v581, 0.0
  %v618 = vsel %vm614, %v601, 0.0
  %v619 = vadd.f32 %v496, %v615
  %v620 = vadd.f32 %v497, %v616
  %v621 = vadd.f32 %v498, %v617
  %v622 = vadd.f32 %v499, %v618
  %v623 = vld [vmem:[%s1 + $0x28] sm:$0xff]
  %624 = vrot.lane.b32.xlu0 %v249, 6
  %v625 = vpop.permute.xlu0 %624
  %626 = vrot.lane.b32.xlu0 %v250, 6
  %v627 = vpop.permute.xlu0 %626
  %628 = vrot.lane.b32.xlu0 %v251, 6
  %v629 = vpop.permute.xlu0 %628
  %630 = vrot.lane.b32.xlu0 %v252, 6
  %v631 = vpop.permute.xlu0 %630
  %632 = vrot.lane.b32.xlu0 %v253, 6
  %v633 = vpop.permute.xlu0 %632
  %vm634 = vcmask 48128
  %v635 = vsel %vm634, %v625, %v627
  %v636 = vsel %vm634, %v627, %v629
  %v637 = vsel %vm634, %v629, %v631
  %v638 = vsel %vm634, %v631, %v633
  %v644 = vsel %vm80, %v623, 0
  %646 = vmatpush.msra.mxu0 0.0
  %647 = vmatpush.msra.mxu0 0.0
  %648 = vmatpush.msra.mxu0 0.0
  %649 = vmatpush.msra.mxu0 0.0
  %650 = vmatpush.msra.mxu0 0.0
  %651 = vmatpush.msra.mxu0 0.0
  %652 = vmatpush.msra.mxu0 0.0
  %653 = vmatpush.msra.mxu0 0.0
  %654 = vmatpush.msra.mxu0 0.0
  %655 = vmatpush.msra.mxu0 0.0
  %656 = vmatpush.msra.mxu0 0.0
  %657 = vmatpush.msra.mxu0 0.0
  %658 = vmatpush.msra.mxu0 0.0
  %659 = vmatpush.msra.mxu0 0.0
  %660 = vmatpush.msra.mxu0 0.0
  %661 = vmatpush.msra.mxu0 %v635
  %662 = vmatmul.f32.gmra.mxu0 %v644
  %v663 = vpop.f32.mrf.mxu0
  %v664 = vadd.f32 0.0, %v663
  %665 = vdwg.mxu0
  %666 = vmatpush.msra.mxu0 0.0
  %667 = vmatpush.msra.mxu0 0.0
  %668 = vmatpush.msra.mxu0 0.0
  %669 = vmatpush.msra.mxu0 0.0
  %670 = vmatpush.msra.mxu0 0.0
  %671 = vmatpush.msra.mxu0 0.0
  %672 = vmatpush.msra.mxu0 0.0
  %673 = vmatpush.msra.mxu0 0.0
  %674 = vmatpush.msra.mxu0 0.0
  %675 = vmatpush.msra.mxu0 0.0
  %676 = vmatpush.msra.mxu0 0.0
  %677 = vmatpush.msra.mxu0 0.0
  %678 = vmatpush.msra.mxu0 0.0
  %679 = vmatpush.msra.mxu0 0.0
  %680 = vmatpush.msra.mxu0 0.0
  %681 = vmatpush.msra.mxu0 %v636
  %682 = vmatmul.f32.gmra.mxu0 %v644
  %v683 = vpop.f32.mrf.mxu0
  %v684 = vadd.f32 0.0, %v683
  %685 = vdwg.mxu0
  %686 = vmatpush.msra.mxu0 0.0
  %687 = vmatpush.msra.mxu0 0.0
  %688 = vmatpush.msra.mxu0 0.0
  %689 = vmatpush.msra.mxu0 0.0
  %690 = vmatpush.msra.mxu0 0.0
  %691 = vmatpush.msra.mxu0 0.0
  %692 = vmatpush.msra.mxu0 0.0
  %693 = vmatpush.msra.mxu0 0.0
  %694 = vmatpush.msra.mxu0 0.0
  %695 = vmatpush.msra.mxu0 0.0
  %696 = vmatpush.msra.mxu0 0.0
  %697 = vmatpush.msra.mxu0 0.0
  %698 = vmatpush.msra.mxu0 0.0
  %699 = vmatpush.msra.mxu0 0.0
  %700 = vmatpush.msra.mxu0 0.0
  %701 = vmatpush.msra.mxu0 %v637
  %702 = vmatmul.f32.gmra.mxu0 %v644
  %v703 = vpop.f32.mrf.mxu0
  %v704 = vadd.f32 0.0, %v703
  %705 = vdwg.mxu0
  %706 = vmatpush.msra.mxu0 0.0
  %707 = vmatpush.msra.mxu0 0.0
  %708 = vmatpush.msra.mxu0 0.0
  %709 = vmatpush.msra.mxu0 0.0
  %710 = vmatpush.msra.mxu0 0.0
  %711 = vmatpush.msra.mxu0 0.0
  %712 = vmatpush.msra.mxu0 0.0
  %713 = vmatpush.msra.mxu0 0.0
  %714 = vmatpush.msra.mxu0 0.0
  %715 = vmatpush.msra.mxu0 0.0
  %716 = vmatpush.msra.mxu0 0.0
  %717 = vmatpush.msra.mxu0 0.0
  %718 = vmatpush.msra.mxu0 0.0
  %719 = vmatpush.msra.mxu0 0.0
  %720 = vmatpush.msra.mxu0 0.0
  %721 = vmatpush.msra.mxu0 %v638
  %722 = vmatmul.f32.gmra.mxu0 %v644
  %v723 = vpop.f32.mrf.mxu0
  %v724 = vadd.f32 0.0, %v723
  %725 = vdwg.mxu0
  %v726 = vsel %vm240, 1, 0
  %v727 = vsel %vm241, 1, 0
  %v728 = vsel %vm242, 1, 0
  %v729 = vsel %vm243, 1, 0
  %vm730 = vcmp.eq.s32.totalorder %v726, 1
  %vm731 = vcmp.eq.s32.totalorder %v727, 1
  %vm732 = vcmp.eq.s32.totalorder %v728, 1
  %vm733 = vcmp.eq.s32.totalorder %v729, 1
  %v734 = vsel %vm730, %v664, 0.0
  %v735 = vsel %vm731, %v684, 0.0
  %v736 = vsel %vm732, %v704, 0.0
  %v737 = vsel %vm733, %v724, 0.0
  %v738 = vadd.f32 %v619, %v734
  %v739 = vadd.f32 %v620, %v735
  %v740 = vadd.f32 %v621, %v736
  %v741 = vadd.f32 %v622, %v737
  %v742 = vld [vmem:[%s1 + $0x30] sm:$0xff]
  %v744 = vsel %vm80, %v742, 0
  %746 = vmatpush.msra.mxu0 0.0
  %747 = vmatpush.msra.mxu0 0.0
  %748 = vmatpush.msra.mxu0 0.0
  %749 = vmatpush.msra.mxu0 0.0
  %750 = vmatpush.msra.mxu0 0.0
  %751 = vmatpush.msra.mxu0 0.0
  %752 = vmatpush.msra.mxu0 0.0
  %753 = vmatpush.msra.mxu0 0.0
  %754 = vmatpush.msra.mxu0 0.0
  %755 = vmatpush.msra.mxu0 0.0
  %756 = vmatpush.msra.mxu0 0.0
  %757 = vmatpush.msra.mxu0 0.0
  %758 = vmatpush.msra.mxu0 0.0
  %759 = vmatpush.msra.mxu0 0.0
  %760 = vmatpush.msra.mxu0 0.0
  %761 = vmatpush.msra.mxu0 %v250
  %762 = vmatmul.f32.gmra.mxu0 %v744
  %v763 = vpop.f32.mrf.mxu0
  %v764 = vadd.f32 0.0, %v763
  %765 = vdwg.mxu0
  %766 = vmatpush.msra.mxu0 0.0
  %767 = vmatpush.msra.mxu0 0.0
  %768 = vmatpush.msra.mxu0 0.0
  %769 = vmatpush.msra.mxu0 0.0
  %770 = vmatpush.msra.mxu0 0.0
  %771 = vmatpush.msra.mxu0 0.0
  %772 = vmatpush.msra.mxu0 0.0
  %773 = vmatpush.msra.mxu0 0.0
  %774 = vmatpush.msra.mxu0 0.0
  %775 = vmatpush.msra.mxu0 0.0
  %776 = vmatpush.msra.mxu0 0.0
  %777 = vmatpush.msra.mxu0 0.0
  %778 = vmatpush.msra.mxu0 0.0
  %779 = vmatpush.msra.mxu0 0.0
  %780 = vmatpush.msra.mxu0 0.0
  %781 = vmatpush.msra.mxu0 %v251
  %782 = vmatmul.f32.gmra.mxu0 %v744
  %v783 = vpop.f32.mrf.mxu0
  %v784 = vadd.f32 0.0, %v783
  %785 = vdwg.mxu0
  %786 = vmatpush.msra.mxu0 0.0
  %787 = vmatpush.msra.mxu0 0.0
  %788 = vmatpush.msra.mxu0 0.0
  %789 = vmatpush.msra.mxu0 0.0
  %790 = vmatpush.msra.mxu0 0.0
  %791 = vmatpush.msra.mxu0 0.0
  %792 = vmatpush.msra.mxu0 0.0
  %793 = vmatpush.msra.mxu0 0.0
  %794 = vmatpush.msra.mxu0 0.0
  %795 = vmatpush.msra.mxu0 0.0
  %796 = vmatpush.msra.mxu0 0.0
  %797 = vmatpush.msra.mxu0 0.0
  %798 = vmatpush.msra.mxu0 0.0
  %799 = vmatpush.msra.mxu0 0.0
  %800 = vmatpush.msra.mxu0 0.0
  %801 = vmatpush.msra.mxu0 %v252
  %802 = vmatmul.f32.gmra.mxu0 %v744
  %v803 = vpop.f32.mrf.mxu0
  %v804 = vadd.f32 0.0, %v803
  %805 = vdwg.mxu0
  %806 = vmatpush.msra.mxu0 0.0
  %807 = vmatpush.msra.mxu0 0.0
  %808 = vmatpush.msra.mxu0 0.0
  %809 = vmatpush.msra.mxu0 0.0
  %810 = vmatpush.msra.mxu0 0.0
  %811 = vmatpush.msra.mxu0 0.0
  %812 = vmatpush.msra.mxu0 0.0
  %813 = vmatpush.msra.mxu0 0.0
  %814 = vmatpush.msra.mxu0 0.0
  %815 = vmatpush.msra.mxu0 0.0
  %816 = vmatpush.msra.mxu0 0.0
  %817 = vmatpush.msra.mxu0 0.0
  %818 = vmatpush.msra.mxu0 0.0
  %819 = vmatpush.msra.mxu0 0.0
  %820 = vmatpush.msra.mxu0 0.0
  %821 = vmatpush.msra.mxu0 %v253
  %822 = vmatmul.f32.gmra.mxu0 %v744
  %v823 = vpop.f32.mrf.mxu0
  %v824 = vadd.f32 0.0, %v823
  %825 = vdwg.mxu0
  %v826 = vadd.f32 %v738, %v764
  %v827 = vadd.f32 %v739, %v784
  %v828 = vadd.f32 %v740, %v804
  %v829 = vadd.f32 %v741, %v824
  %v830 = vld [vmem:[%s1 + $0x38] sm:$0xff]
  %v831 = vld [vmem:[#allocation2 + $0x10] sm:$0xff]
  %v832 = vld [vmem:[#allocation2 + $0x18] sm:$0xff]
  %v833 = vld [vmem:[#allocation2 + $0x20] sm:$0xff]
  %v834 = vld [vmem:[#allocation2 + $0x28] sm:$0xff]
  %v835 = vld [vmem:[#allocation2 + $0x30] sm:$0xff]
  %841 = vrot.lane.b32.xlu0 %v831, 122
  %v842 = vpop.permute.xlu0 %841
  %843 = vrot.lane.b32.xlu0 %v832, 122
  %v844 = vpop.permute.xlu0 %843
  %845 = vrot.lane.b32.xlu0 %v833, 122
  %v846 = vpop.permute.xlu0 %845
  %847 = vrot.lane.b32.xlu0 %v834, 122
  %v848 = vpop.permute.xlu0 %847
  %849 = vrot.lane.b32.xlu0 %v835, 122
  %v850 = vpop.permute.xlu0 %849
  %vm851 = vcmask 998400
  %v852 = vsel %vm851, %v842, %v844
  %v853 = vsel %vm851, %v844, %v846
  %v854 = vsel %vm851, %v846, %v848
  %v855 = vsel %vm851, %v848, %v850
  %v861 = vsel %vm80, %v830, 0
  %863 = vmatpush.msra.mxu0 0.0
  %864 = vmatpush.msra.mxu0 0.0
  %865 = vmatpush.msra.mxu0 0.0
  %866 = vmatpush.msra.mxu0 0.0
  %867 = vmatpush.msra.mxu0 0.0
  %868 = vmatpush.msra.mxu0 0.0
  %869 = vmatpush.msra.mxu0 0.0
  %870 = vmatpush.msra.mxu0 0.0
  %871 = vmatpush.msra.mxu0 0.0
  %872 = vmatpush.msra.mxu0 0.0
  %873 = vmatpush.msra.mxu0 0.0
  %874 = vmatpush.msra.mxu0 0.0
  %875 = vmatpush.msra.mxu0 0.0
  %876 = vmatpush.msra.mxu0 0.0
  %877 = vmatpush.msra.mxu0 0.0
  %878 = vmatpush.msra.mxu0 %v852
  %879 = vmatmul.f32.gmra.mxu0 %v861
  %v880 = vpop.f32.mrf.mxu0
  %v881 = vadd.f32 0.0, %v880
  %882 = vdwg.mxu0
  %883 = vmatpush.msra.mxu0 0.0
  %884 = vmatpush.msra.mxu0 0.0
  %885 = vmatpush.msra.mxu0 0.0
  %886 = vmatpush.msra.mxu0 0.0
  %887 = vmatpush.msra.mxu0 0.0
  %888 = vmatpush.msra.mxu0 0.0
  %889 = vmatpush.msra.mxu0 0.0
  %890 = vmatpush.msra.mxu0 0.0
  %891 = vmatpush.msra.mxu0 0.0
  %892 = vmatpush.msra.mxu0 0.0
  %893 = vmatpush.msra.mxu0 0.0
  %894 = vmatpush.msra.mxu0 0.0
  %895 = vmatpush.msra.mxu0 0.0
  %896 = vmatpush.msra.mxu0 0.0
  %897 = vmatpush.msra.mxu0 0.0
  %898 = vmatpush.msra.mxu0 %v853
  %899 = vmatmul.f32.gmra.mxu0 %v861
  %v900 = vpop.f32.mrf.mxu0
  %v901 = vadd.f32 0.0, %v900
  %902 = vdwg.mxu0
  %903 = vmatpush.msra.mxu0 0.0
  %904 = vmatpush.msra.mxu0 0.0
  %905 = vmatpush.msra.mxu0 0.0
  %906 = vmatpush.msra.mxu0 0.0
  %907 = vmatpush.msra.mxu0 0.0
  %908 = vmatpush.msra.mxu0 0.0
  %909 = vmatpush.msra.mxu0 0.0
  %910 = vmatpush.msra.mxu0 0.0
  %911 = vmatpush.msra.mxu0 0.0
  %912 = vmatpush.msra.mxu0 0.0
  %913 = vmatpush.msra.mxu0 0.0
  %914 = vmatpush.msra.mxu0 0.0
  %915 = vmatpush.msra.mxu0 0.0
  %916 = vmatpush.msra.mxu0 0.0
  %917 = vmatpush.msra.mxu0 0.0
  %918 = vmatpush.msra.mxu0 %v854
  %919 = vmatmul.f32.gmra.mxu0 %v861
  %v920 = vpop.f32.mrf.mxu0
  %v921 = vadd.f32 0.0, %v920
  %922 = vdwg.mxu0
  %923 = vmatpush.msra.mxu0 0.0
  %924 = vmatpush.msra.mxu0 0.0
  %925 = vmatpush.msra.mxu0 0.0
  %926 = vmatpush.msra.mxu0 0.0
  %927 = vmatpush.msra.mxu0 0.0
  %928 = vmatpush.msra.mxu0 0.0
  %929 = vmatpush.msra.mxu0 0.0
  %930 = vmatpush.msra.mxu0 0.0
  %931 = vmatpush.msra.mxu0 0.0
  %932 = vmatpush.msra.mxu0 0.0
  %933 = vmatpush.msra.mxu0 0.0
  %934 = vmatpush.msra.mxu0 0.0
  %935 = vmatpush.msra.mxu0 0.0
  %936 = vmatpush.msra.mxu0 0.0
  %937 = vmatpush.msra.mxu0 0.0
  %938 = vmatpush.msra.mxu0 %v855
  %939 = vmatmul.f32.gmra.mxu0 %v861
  %v940 = vpop.f32.mrf.mxu0
  %v941 = vadd.f32 0.0, %v940
  %942 = vdwg.mxu0
  %v943 = vsel %vm244, 1, 0
  %v944 = vsel %vm245, 1, 0
  %v945 = vsel %vm246, 1, 0
  %v946 = vsel %vm247, 1, 0
  %vm947 = vcmp.eq.s32.totalorder %v943, 1
  %vm948 = vcmp.eq.s32.totalorder %v944, 1
  %vm949 = vcmp.eq.s32.totalorder %v945, 1
  %vm950 = vcmp.eq.s32.totalorder %v946, 1
  %v951 = vsel %vm947, %v881, 0.0
  %v952 = vsel %vm948, %v901, 0.0
  %v953 = vsel %vm949, %v921, 0.0
  %v954 = vsel %vm950, %v941, 0.0
  %v955 = vadd.f32 %v826, %v951
  %v956 = vadd.f32 %v827, %v952
  %v957 = vadd.f32 %v828, %v953
  %v958 = vadd.f32 %v829, %v954
  %v959 = vld [vmem:[%s1 + $0x40] sm:$0xff]
  %960 = vrot.lane.b32.xlu0 %v831, 38
  %v961 = vpop.permute.xlu0 %960
  %962 = vrot.lane.b32.xlu0 %v832, 38
  %v963 = vpop.permute.xlu0 %962
  %964 = vrot.lane.b32.xlu0 %v833, 38
  %v965 = vpop.permute.xlu0 %964
  %966 = vrot.lane.b32.xlu0 %v834, 38
  %v967 = vpop.permute.xlu0 %966
  %968 = vrot.lane.b32.xlu0 %v835, 38
  %v969 = vpop.permute.xlu0 %968
  %vm970 = vcmask 310272
  %v971 = vsel %vm970, %v961, %v963
  %v972 = vsel %vm970, %v963, %v965
  %v973 = vsel %vm970, %v965, %v967
  %v974 = vsel %vm970, %v967, %v969
  %v980 = vsel %vm80, %v959, 0
  %982 = vmatpush.msra.mxu0 0.0
  %983 = vmatpush.msra.mxu0 0.0
  %984 = vmatpush.msra.mxu0 0.0
  %985 = vmatpush.msra.mxu0 0.0
  %986 = vmatpush.msra.mxu0 0.0
  %987 = vmatpush.msra.mxu0 0.0
  %988 = vmatpush.msra.mxu0 0.0
  %989 = vmatpush.msra.mxu0 0.0
  %990 = vmatpush.msra.mxu0 0.0
  %991 = vmatpush.msra.mxu0 0.0
  %992 = vmatpush.msra.mxu0 0.0
  %993 = vmatpush.msra.mxu0 0.0
  %994 = vmatpush.msra.mxu0 0.0
  %995 = vmatpush.msra.mxu0 0.0
  %996 = vmatpush.msra.mxu0 0.0
  %997 = vmatpush.msra.mxu0 %v971
  %998 = vmatmul.f32.gmra.mxu0 %v980
  %v999 = vpop.f32.mrf.mxu0
  %v1000 = vadd.f32 0.0, %v999
  %1001 = vdwg.mxu0
  %1002 = vmatpush.msra.mxu0 0.0
  %1003 = vmatpush.msra.mxu0 0.0
  %1004 = vmatpush.msra.mxu0 0.0
  %1005 = vmatpush.msra.mxu0 0.0
  %1006 = vmatpush.msra.mxu0 0.0
  %1007 = vmatpush.msra.mxu0 0.0
  %1008 = vmatpush.msra.mxu0 0.0
  %1009 = vmatpush.msra.mxu0 0.0
  %1010 = vmatpush.msra.mxu0 0.0
  %1011 = vmatpush.msra.mxu0 0.0
  %1012 = vmatpush.msra.mxu0 0.0
  %1013 = vmatpush.msra.mxu0 0.0
  %1014 = vmatpush.msra.mxu0 0.0
  %1015 = vmatpush.msra.mxu0 0.0
  %1016 = vmatpush.msra.mxu0 0.0
  %1017 = vmatpush.msra.mxu0 %v972
  %1018 = vmatmul.f32.gmra.mxu0 %v980
  %v1019 = vpop.f32.mrf.mxu0
  %v1020 = vadd.f32 0.0, %v1019
  %1021 = vdwg.mxu0
  %1022 = vmatpush.msra.mxu0 0.0
  %1023 = vmatpush.msra.mxu0 0.0
  %1024 = vmatpush.msra.mxu0 0.0
  %1025 = vmatpush.msra.mxu0 0.0
  %1026 = vmatpush.msra.mxu0 0.0
  %1027 = vmatpush.msra.mxu0 0.0
  %1028 = vmatpush.msra.mxu0 0.0
  %1029 = vmatpush.msra.mxu0 0.0
  %1030 = vmatpush.msra.mxu0 0.0
  %1031 = vmatpush.msra.mxu0 0.0
  %1032 = vmatpush.msra.mxu0 0.0
  %1033 = vmatpush.msra.mxu0 0.0
  %1034 = vmatpush.msra.mxu0 0.0
  %1035 = vmatpush.msra.mxu0 0.0
  %1036 = vmatpush.msra.mxu0 0.0
  %1037 = vmatpush.msra.mxu0 %v973
  %1038 = vmatmul.f32.gmra.mxu0 %v980
  %v1039 = vpop.f32.mrf.mxu0
  %v1040 = vadd.f32 0.0, %v1039
  %1041 = vdwg.mxu0
  %1042 = vmatpush.msra.mxu0 0.0
  %1043 = vmatpush.msra.mxu0 0.0
  %1044 = vmatpush.msra.mxu0 0.0
  %1045 = vmatpush.msra.mxu0 0.0
  %1046 = vmatpush.msra.mxu0 0.0
  %1047 = vmatpush.msra.mxu0 0.0
  %1048 = vmatpush.msra.mxu0 0.0
  %1049 = vmatpush.msra.mxu0 0.0
  %1050 = vmatpush.msra.mxu0 0.0
  %1051 = vmatpush.msra.mxu0 0.0
  %1052 = vmatpush.msra.mxu0 0.0
  %1053 = vmatpush.msra.mxu0 0.0
  %1054 = vmatpush.msra.mxu0 0.0
  %1055 = vmatpush.msra.mxu0 0.0
  %1056 = vmatpush.msra.mxu0 0.0
  %1057 = vmatpush.msra.mxu0 %v974
  %1058 = vmatmul.f32.gmra.mxu0 %v980
  %v1059 = vpop.f32.mrf.mxu0
  %v1060 = vadd.f32 0.0, %v1059
  %1061 = vdwg.mxu0
  %vm1062 = vmand %vm236, %vm240
  %vm1063 = vmand %vm237, %vm241
  %vm1064 = vmand %vm238, %vm242
  %vm1065 = vmand %vm239, %vm243
  %v1066 = vsel %vm1062, 1, 0
  %v1067 = vsel %vm1063, 1, 0
  %v1068 = vsel %vm1064, 1, 0
  %v1069 = vsel %vm1065, 1, 0
  %vm1070 = vcmp.eq.s32.totalorder %v1066, 1
  %vm1071 = vcmp.eq.s32.totalorder %v1067, 1
  %vm1072 = vcmp.eq.s32.totalorder %v1068, 1
  %vm1073 = vcmp.eq.s32.totalorder %v1069, 1
  %v1074 = vsel %vm1070, %v1000, 0.0
  %v1075 = vsel %vm1071, %v1020, 0.0
  %v1076 = vsel %vm1072, %v1040, 0.0
  %v1077 = vsel %vm1073, %v1060, 0.0
  %v1078 = vadd.f32 %v955, %v1074
  %v1079 = vadd.f32 %v956, %v1075
  %v1080 = vadd.f32 %v957, %v1076
  %v1081 = vadd.f32 %v958, %v1077
  %v1082 = vld [vmem:[%s1 + $0x48] sm:$0xff]
  %1083 = vrot.lane.b32.xlu0 %v831, 32
  %v1084 = vpop.permute.xlu0 %1083
  %1085 = vrot.lane.b32.xlu0 %v832, 32
  %v1086 = vpop.permute.xlu0 %1085
  %1087 = vrot.lane.b32.xlu0 %v833, 32
  %v1088 = vpop.permute.xlu0 %1087
  %1089 = vrot.lane.b32.xlu0 %v834, 32
  %v1090 = vpop.permute.xlu0 %1089
  %1091 = vrot.lane.b32.xlu0 %v835, 32
  %v1092 = vpop.permute.xlu0 %1091
  %vm1093 = vcmask 261120
  %v1094 = vsel %vm1093, %v1084, %v1086
  %v1095 = vsel %vm1093, %v1086, %v1088
  %v1096 = vsel %vm1093, %v1088, %v1090
  %v1097 = vsel %vm1093, %v1090, %v1092
  %v1103 = vsel %vm80, %v1082, 0
  %1105 = vmatpush.msra.mxu0 0.0
  %1106 = vmatpush.msra.mxu0 0.0
  %1107 = vmatpush.msra.mxu0 0.0
  %1108 = vmatpush.msra.mxu0 0.0
  %1109 = vmatpush.msra.mxu0 0.0
  %1110 = vmatpush.msra.mxu0 0.0
  %1111 = vmatpush.msra.mxu0 0.0
  %1112 = vmatpush.msra.mxu0 0.0
  %1113 = vmatpush.msra.mxu0 0.0
  %1114 = vmatpush.msra.mxu0 0.0
  %1115 = vmatpush.msra.mxu0 0.0
  %1116 = vmatpush.msra.mxu0 0.0
  %1117 = vmatpush.msra.mxu0 0.0
  %1118 = vmatpush.msra.mxu0 0.0
  %1119 = vmatpush.msra.mxu0 0.0
  %1120 = vmatpush.msra.mxu0 %v1094
  %1121 = vmatmul.f32.gmra.mxu0 %v1103
  %v1122 = vpop.f32.mrf.mxu0
  %v1123 = vadd.f32 0.0, %v1122
  %1124 = vdwg.mxu0
  %1125 = vmatpush.msra.mxu0 0.0
  %1126 = vmatpush.msra.mxu0 0.0
  %1127 = vmatpush.msra.mxu0 0.0
  %1128 = vmatpush.msra.mxu0 0.0
  %1129 = vmatpush.msra.mxu0 0.0
  %1130 = vmatpush.msra.mxu0 0.0
  %1131 = vmatpush.msra.mxu0 0.0
  %1132 = vmatpush.msra.mxu0 0.0
  %1133 = vmatpush.msra.mxu0 0.0
  %1134 = vmatpush.msra.mxu0 0.0
  %1135 = vmatpush.msra.mxu0 0.0
  %1136 = vmatpush.msra.mxu0 0.0
  %1137 = vmatpush.msra.mxu0 0.0
  %1138 = vmatpush.msra.mxu0 0.0
  %1139 = vmatpush.msra.mxu0 0.0
  %1140 = vmatpush.msra.mxu0 %v1095
  %1141 = vmatmul.f32.gmra.mxu0 %v1103
  %v1142 = vpop.f32.mrf.mxu0
  %v1143 = vadd.f32 0.0, %v1142
  %1144 = vdwg.mxu0
  %1145 = vmatpush.msra.mxu0 0.0
  %1146 = vmatpush.msra.mxu0 0.0
  %1147 = vmatpush.msra.mxu0 0.0
  %1148 = vmatpush.msra.mxu0 0.0
  %1149 = vmatpush.msra.mxu0 0.0
  %1150 = vmatpush.msra.mxu0 0.0
  %1151 = vmatpush.msra.mxu0 0.0
  %1152 = vmatpush.msra.mxu0 0.0
  %1153 = vmatpush.msra.mxu0 0.0
  %1154 = vmatpush.msra.mxu0 0.0
  %1155 = vmatpush.msra.mxu0 0.0
  %1156 = vmatpush.msra.mxu0 0.0
  %1157 = vmatpush.msra.mxu0 0.0
  %1158 = vmatpush.msra.mxu0 0.0
  %1159 = vmatpush.msra.mxu0 0.0
  %1160 = vmatpush.msra.mxu0 %v1096
  %1161 = vmatmul.f32.gmra.mxu0 %v1103
  %v1162 = vpop.f32.mrf.mxu0
  %v1163 = vadd.f32 0.0, %v1162
  %1164 = vdwg.mxu0
  %1165 = vmatpush.msra.mxu0 0.0
  %1166 = vmatpush.msra.mxu0 0.0
  %1167 = vmatpush.msra.mxu0 0.0
  %1168 = vmatpush.msra.mxu0 0.0
  %1169 = vmatpush.msra.mxu0 0.0
  %1170 = vmatpush.msra.mxu0 0.0
  %1171 = vmatpush.msra.mxu0 0.0
  %1172 = vmatpush.msra.mxu0 0.0
  %1173 = vmatpush.msra.mxu0 0.0
  %1174 = vmatpush.msra.mxu0 0.0
  %1175 = vmatpush.msra.mxu0 0.0
  %1176 = vmatpush.msra.mxu0 0.0
  %1177 = vmatpush.msra.mxu0 0.0
  %1178 = vmatpush.msra.mxu0 0.0
  %1179 = vmatpush.msra.mxu0 0.0
  %1180 = vmatpush.msra.mxu0 %v1097
  %1181 = vmatmul.f32.gmra.mxu0 %v1103
  %v1182 = vpop.f32.mrf.mxu0
  %v1183 = vadd.f32 0.0, %v1182
  %1184 = vdwg.mxu0
  %v1185 = vsel %vm236, 1, 0
  %v1186 = vsel %vm237, 1, 0
  %v1187 = vsel %vm238, 1, 0
  %v1188 = vsel %vm239, 1, 0
  %vm1189 = vcmp.eq.s32.totalorder %v1185, 1
  %vm1190 = vcmp.eq.s32.totalorder %v1186, 1
  %vm1191 = vcmp.eq.s32.totalorder %v1187, 1
  %vm1192 = vcmp.eq.s32.totalorder %v1188, 1
  %v1193 = vsel %vm1189, %v1123, 0.0
  %v1194 = vsel %vm1190, %v1143, 0.0
  %v1195 = vsel %vm1191, %v1163, 0.0
  %v1196 = vsel %vm1192, %v1183, 0.0
  %v1197 = vadd.f32 %v1078, %v1193
  %v1198 = vadd.f32 %v1079, %v1194
  %v1199 = vadd.f32 %v1080, %v1195
  %v1200 = vadd.f32 %v1081, %v1196
  %v1201 = vld [vmem:[%s1 + $0x50] sm:$0xff]
  %1202 = vrot.lane.b32.xlu0 %v831, 26
  %v1203 = vpop.permute.xlu0 %1202
  %1204 = vrot.lane.b32.xlu0 %v832, 26
  %v1205 = vpop.permute.xlu0 %1204
  %1206 = vrot.lane.b32.xlu0 %v833, 26
  %v1207 = vpop.permute.xlu0 %1206
  %1208 = vrot.lane.b32.xlu0 %v834, 26
  %v1209 = vpop.permute.xlu0 %1208
  %1210 = vrot.lane.b32.xlu0 %v835, 26
  %v1211 = vpop.permute.xlu0 %1210
  %vm1212 = vcmask 211968
  %v1213 = vsel %vm1212, %v1203, %v1205
  %v1214 = vsel %vm1212, %v1205, %v1207
  %v1215 = vsel %vm1212, %v1207, %v1209
  %v1216 = vsel %vm1212, %v1209, %v1211
  %v1222 = vsel %vm80, %v1201, 0
  %1224 = vmatpush.msra.mxu0 0.0
  %1225 = vmatpush.msra.mxu0 0.0
  %1226 = vmatpush.msra.mxu0 0.0
  %1227 = vmatpush.msra.mxu0 0.0
  %1228 = vmatpush.msra.mxu0 0.0
  %1229 = vmatpush.msra.mxu0 0.0
  %1230 = vmatpush.msra.mxu0 0.0
  %1231 = vmatpush.msra.mxu0 0.0
  %1232 = vmatpush.msra.mxu0 0.0
  %1233 = vmatpush.msra.mxu0 0.0
  %1234 = vmatpush.msra.mxu0 0.0
  %1235 = vmatpush.msra.mxu0 0.0
  %1236 = vmatpush.msra.mxu0 0.0
  %1237 = vmatpush.msra.mxu0 0.0
  %1238 = vmatpush.msra.mxu0 0.0
  %1239 = vmatpush.msra.mxu0 %v1213
  %1240 = vmatmul.f32.gmra.mxu0 %v1222
  %v1241 = vpop.f32.mrf.mxu0
  %v1242 = vadd.f32 0.0, %v1241
  %1243 = vdwg.mxu0
  %1244 = vmatpush.msra.mxu0 0.0
  %1245 = vmatpush.msra.mxu0 0.0
  %1246 = vmatpush.msra.mxu0 0.0
  %1247 = vmatpush.msra.mxu0 0.0
  %1248 = vmatpush.msra.mxu0 0.0
  %1249 = vmatpush.msra.mxu0 0.0
  %1250 = vmatpush.msra.mxu0 0.0
  %1251 = vmatpush.msra.mxu0 0.0
  %1252 = vmatpush.msra.mxu0 0.0
  %1253 = vmatpush.msra.mxu0 0.0
  %1254 = vmatpush.msra.mxu0 0.0
  %1255 = vmatpush.msra.mxu0 0.0
  %1256 = vmatpush.msra.mxu0 0.0
  %1257 = vmatpush.msra.mxu0 0.0
  %1258 = vmatpush.msra.mxu0 0.0
  %1259 = vmatpush.msra.mxu0 %v1214
  %1260 = vmatmul.f32.gmra.mxu0 %v1222
  %v1261 = vpop.f32.mrf.mxu0
  %v1262 = vadd.f32 0.0, %v1261
  %1263 = vdwg.mxu0
  %1264 = vmatpush.msra.mxu0 0.0
  %1265 = vmatpush.msra.mxu0 0.0
  %1266 = vmatpush.msra.mxu0 0.0
  %1267 = vmatpush.msra.mxu0 0.0
  %1268 = vmatpush.msra.mxu0 0.0
  %1269 = vmatpush.msra.mxu0 0.0
  %1270 = vmatpush.msra.mxu0 0.0
  %1271 = vmatpush.msra.mxu0 0.0
  %1272 = vmatpush.msra.mxu0 0.0
  %1273 = vmatpush.msra.mxu0 0.0
  %1274 = vmatpush.msra.mxu0 0.0
  %1275 = vmatpush.msra.mxu0 0.0
  %1276 = vmatpush.msra.mxu0 0.0
  %1277 = vmatpush.msra.mxu0 0.0
  %1278 = vmatpush.msra.mxu0 0.0
  %1279 = vmatpush.msra.mxu0 %v1215
  %1280 = vmatmul.f32.gmra.mxu0 %v1222
  %v1281 = vpop.f32.mrf.mxu0
  %v1282 = vadd.f32 0.0, %v1281
  %1283 = vdwg.mxu0
  %1284 = vmatpush.msra.mxu0 0.0
  %1285 = vmatpush.msra.mxu0 0.0
  %1286 = vmatpush.msra.mxu0 0.0
  %1287 = vmatpush.msra.mxu0 0.0
  %1288 = vmatpush.msra.mxu0 0.0
  %1289 = vmatpush.msra.mxu0 0.0
  %1290 = vmatpush.msra.mxu0 0.0
  %1291 = vmatpush.msra.mxu0 0.0
  %1292 = vmatpush.msra.mxu0 0.0
  %1293 = vmatpush.msra.mxu0 0.0
  %1294 = vmatpush.msra.mxu0 0.0
  %1295 = vmatpush.msra.mxu0 0.0
  %1296 = vmatpush.msra.mxu0 0.0
  %1297 = vmatpush.msra.mxu0 0.0
  %1298 = vmatpush.msra.mxu0 0.0
  %1299 = vmatpush.msra.mxu0 %v1216
  %1300 = vmatmul.f32.gmra.mxu0 %v1222
  %v1301 = vpop.f32.mrf.mxu0
  %v1302 = vadd.f32 0.0, %v1301
  %1303 = vdwg.mxu0
  %vm1304 = vmand %vm236, %vm244
  %vm1305 = vmand %vm237, %vm245
  %vm1306 = vmand %vm238, %vm246
  %vm1307 = vmand %vm239, %vm247
  %v1308 = vsel %vm1304, 1, 0
  %v1309 = vsel %vm1305, 1, 0
  %v1310 = vsel %vm1306, 1, 0
  %v1311 = vsel %vm1307, 1, 0
  %vm1312 = vcmp.eq.s32.totalorder %v1308, 1
  %vm1313 = vcmp.eq.s32.totalorder %v1309, 1
  %vm1314 = vcmp.eq.s32.totalorder %v1310, 1
  %vm1315 = vcmp.eq.s32.totalorder %v1311, 1
  %v1316 = vsel %vm1312, %v1242, 0.0
  %v1317 = vsel %vm1313, %v1262, 0.0
  %v1318 = vsel %vm1314, %v1282, 0.0
  %v1319 = vsel %vm1315, %v1302, 0.0
  %v1320 = vadd.f32 %v1197, %v1316
  %v1321 = vadd.f32 %v1198, %v1317
  %v1322 = vadd.f32 %v1199, %v1318
  %v1323 = vadd.f32 %v1200, %v1319
  %v1324 = vld [vmem:[%s3] sm:$0xff]
  %1326 = vset.pattern.permute.xlu0 2
  %1327 = vperm.xlu0 %1326, %v1324
  %v1328 = vpop.permute.xlu0 %1327
  %v1330 = vadd.f32 %v1320, %v1328
  %v1331 = vadd.f32 %v1321, %v1328
  %v1332 = vadd.f32 %v1322, %v1328
  %v1333 = vadd.f32 %v1323, %v1328
  %v1334 = vmax.f32 %v1330, 0.0
  %v1335 = vmax.f32 %v1331, 0.0
  %v1336 = vmax.f32 %v1332, 0.0
  %v1337 = vmax.f32 %v1333, 0.0
  %1338 = vst [vmem:[#allocation3 + $0x68] sm:$0xff] %v1334
  %1339 = vst [vmem:[#allocation3 + $0x70] sm:$0xff] %v1335
  %1340 = vst [vmem:[#allocation3 + $0x78] sm:$0xff] %v1336
  %1341 = vst [vmem:[#allocation3 + $0x80] sm:$0xff] %v1337
  %vm1342 = vcmp.ge.s32.totalorder %v50, 12
  %vm1343 = vcmp.ge.s32.totalorder %v51, 12
  %vm1344 = vcmp.ge.s32.totalorder %v52, 12
  %vm1345 = vcmp.ge.s32.totalorder %v53, 12
  %vm1346 = vcmp.lt.s32.totalorder %v50, 4
  %vm1347 = vcmp.lt.s32.totalorder %v51, 4
  %vm1348 = vcmp.lt.s32.totalorder %v52, 4
  %vm1349 = vcmp.lt.s32.totalorder %v53, 4
  %vm1350 = vcmp.ge.s32.totalorder %v42, 12
  %vm1351 = vcmp.ge.s32.totalorder %v43, 12
  %vm1352 = vcmp.ge.s32.totalorder %v44, 12
  %vm1353 = vcmp.ge.s32.totalorder %v45, 12
  %vm1354 = vcmp.lt.s32.totalorder %v42, 4
  %vm1355 = vcmp.lt.s32.totalorder %v43, 4
  %vm1356 = vcmp.lt.s32.totalorder %v44, 4
  %vm1357 = vcmp.lt.s32.totalorder %v45, 4
  %v1358 = vld [vmem:[%s1 + $0x58] sm:$0xff]
  %v1359 = vld [vmem:[#allocation2] sm:$0xff]
  %v1360 = vld [vmem:[#allocation2 + $0x8] sm:$0xff]
  %v1361 = vld [vmem:[#allocation2 + $0x10] sm:$0xff]
  %v1362 = vld [vmem:[#allocation2 + $0x18] sm:$0xff]
  %v1363 = vld [vmem:[#allocation2 + $0x20] sm:$0xff]
  %1369 = vrot.lane.b32.xlu0 %v1359, 76
  %v1370 = vpop.permute.xlu0 %1369
  %1371 = vrot.lane.b32.xlu0 %v1360, 76
  %v1372 = vpop.permute.xlu0 %1371
  %1373 = vrot.lane.b32.xlu0 %v1361, 76
  %v1374 = vpop.permute.xlu0 %1373
  %1375 = vrot.lane.b32.xlu0 %v1362, 76
  %v1376 = vpop.permute.xlu0 %1375
  %1377 = vrot.lane.b32.xlu0 %v1363, 76
  %v1378 = vpop.permute.xlu0 %1377
  %vm1379 = vcmask 621568
  %v1380 = vsel %vm1379, %v1370, %v1372
  %v1381 = vsel %vm1379, %v1372, %v1374
  %v1382 = vsel %vm1379, %v1374, %v1376
  %v1383 = vsel %vm1379, %v1376, %v1378
  %v1389 = vsel %vm80, %v1358, 0
  %1391 = vmatpush.msra.mxu0 0.0
  %1392 = vmatpush.msra.mxu0 0.0
  %1393 = vmatpush.msra.mxu0 0.0
  %1394 = vmatpush.msra.mxu0 0.0
  %1395 = vmatpush.msra.mxu0 0.0
  %1396 = vmatpush.msra.mxu0 0.0
  %1397 = vmatpush.msra.mxu0 0.0
  %1398 = vmatpush.msra.mxu0 0.0
  %1399 = vmatpush.msra.mxu0 0.0
  %1400 = vmatpush.msra.mxu0 0.0
  %1401 = vmatpush.msra.mxu0 0.0
  %1402 = vmatpush.msra.mxu0 0.0
  %1403 = vmatpush.msra.mxu0 0.0
  %1404 = vmatpush.msra.mxu0 0.0
  %1405 = vmatpush.msra.mxu0 0.0
  %1406 = vmatpush.msra.mxu0 %v1380
  %1407 = vmatmul.f32.gmra.mxu0 %v1389
  %v1408 = vpop.f32.mrf.mxu0
  %v1409 = vadd.f32 0.0, %v1408
  %1410 = vdwg.mxu0
  %1411 = vmatpush.msra.mxu0 0.0
  %1412 = vmatpush.msra.mxu0 0.0
  %1413 = vmatpush.msra.mxu0 0.0
  %1414 = vmatpush.msra.mxu0 0.0
  %1415 = vmatpush.msra.mxu0 0.0
  %1416 = vmatpush.msra.mxu0 0.0
  %1417 = vmatpush.msra.mxu0 0.0
  %1418 = vmatpush.msra.mxu0 0.0
  %1419 = vmatpush.msra.mxu0 0.0
  %1420 = vmatpush.msra.mxu0 0.0
  %1421 = vmatpush.msra.mxu0 0.0
  %1422 = vmatpush.msra.mxu0 0.0
  %1423 = vmatpush.msra.mxu0 0.0
  %1424 = vmatpush.msra.mxu0 0.0
  %1425 = vmatpush.msra.mxu0 0.0
  %1426 = vmatpush.msra.mxu0 %v1381
  %1427 = vmatmul.f32.gmra.mxu0 %v1389
  %v1428 = vpop.f32.mrf.mxu0
  %v1429 = vadd.f32 0.0, %v1428
  %1430 = vdwg.mxu0
  %1431 = vmatpush.msra.mxu0 0.0
  %1432 = vmatpush.msra.mxu0 0.0
  %1433 = vmatpush.msra.mxu0 0.0
  %1434 = vmatpush.msra.mxu0 0.0
  %1435 = vmatpush.msra.mxu0 0.0
  %1436 = vmatpush.msra.mxu0 0.0
  %1437 = vmatpush.msra.mxu0 0.0
  %1438 = vmatpush.msra.mxu0 0.0
  %1439 = vmatpush.msra.mxu0 0.0
  %1440 = vmatpush.msra.mxu0 0.0
  %1441 = vmatpush.msra.mxu0 0.0
  %1442 = vmatpush.msra.mxu0 0.0
  %1443 = vmatpush.msra.mxu0 0.0
  %1444 = vmatpush.msra.mxu0 0.0
  %1445 = vmatpush.msra.mxu0 0.0
  %1446 = vmatpush.msra.mxu0 %v1382
  %1447 = vmatmul.f32.gmra.mxu0 %v1389
  %v1448 = vpop.f32.mrf.mxu0
  %v1449 = vadd.f32 0.0, %v1448
  %1450 = vdwg.mxu0
  %1451 = vmatpush.msra.mxu0 0.0
  %1452 = vmatpush.msra.mxu0 0.0
  %1453 = vmatpush.msra.mxu0 0.0
  %1454 = vmatpush.msra.mxu0 0.0
  %1455 = vmatpush.msra.mxu0 0.0
  %1456 = vmatpush.msra.mxu0 0.0
  %1457 = vmatpush.msra.mxu0 0.0
  %1458 = vmatpush.msra.mxu0 0.0
  %1459 = vmatpush.msra.mxu0 0.0
  %1460 = vmatpush.msra.mxu0 0.0
  %1461 = vmatpush.msra.mxu0 0.0
  %1462 = vmatpush.msra.mxu0 0.0
  %1463 = vmatpush.msra.mxu0 0.0
  %1464 = vmatpush.msra.mxu0 0.0
  %1465 = vmatpush.msra.mxu0 0.0
  %1466 = vmatpush.msra.mxu0 %v1383
  %1467 = vmatmul.f32.gmra.mxu0 %v1389
  %v1468 = vpop.f32.mrf.mxu0
  %v1469 = vadd.f32 0.0, %v1468
  %1470 = vdwg.mxu0
  %vm1471 = vmand %vm1342, %vm1350
  %vm1472 = vmand %vm1343, %vm1351
  %vm1473 = vmand %vm1344, %vm1352
  %vm1474 = vmand %vm1345, %vm1353
  %v1475 = vsel %vm1471, 1, 0
  %v1476 = vsel %vm1472, 1, 0
  %v1477 = vsel %vm1473, 1, 0
  %v1478 = vsel %vm1474, 1, 0
  %vm1479 = vcmp.eq.s32.totalorder %v1475, 1
  %vm1480 = vcmp.eq.s32.totalorder %v1476, 1
  %vm1481 = vcmp.eq.s32.totalorder %v1477, 1
  %vm1482 = vcmp.eq.s32.totalorder %v1478, 1
  %v1483 = vsel %vm1479, %v1409, 0.0
  %v1484 = vsel %vm1480, %v1429, 0.0
  %v1485 = vsel %vm1481, %v1449, 0.0
  %v1486 = vsel %vm1482, %v1469, 0.0
  %v1487 = vadd.f32 %v1483, 0.0
  %v1488 = vadd.f32 %v1484, 0.0
  %v1489 = vadd.f32 %v1485, 0.0
  %v1490 = vadd.f32 %v1486, 0.0
  %v1491 = vld [vmem:[%s1 + $0x60] sm:$0xff]
  %1492 = vrot.lane.b32.xlu0 %v1359, 64
  %v1493 = vpop.permute.xlu0 %1492
  %1494 = vrot.lane.b32.xlu0 %v1360, 64
  %v1495 = vpop.permute.xlu0 %1494
  %1496 = vrot.lane.b32.xlu0 %v1361, 64
  %v1497 = vpop.permute.xlu0 %1496
  %1498 = vrot.lane.b32.xlu0 %v1362, 64
  %v1499 = vpop.permute.xlu0 %1498
  %1500 = vrot.lane.b32.xlu0 %v1363, 64
  %v1501 = vpop.permute.xlu0 %1500
  %vm1502 = vcmask 523264
  %v1503 = vsel %vm1502, %v1493, %v1495
  %v1504 = vsel %vm1502, %v1495, %v1497
  %v1505 = vsel %vm1502, %v1497, %v1499
  %v1506 = vsel %vm1502, %v1499, %v1501
  %v1512 = vsel %vm80, %v1491, 0
  %1514 = vmatpush.msra.mxu0 0.0
  %1515 = vmatpush.msra.mxu0 0.0
  %1516 = vmatpush.msra.mxu0 0.0
  %1517 = vmatpush.msra.mxu0 0.0
  %1518 = vmatpush.msra.mxu0 0.0
  %1519 = vmatpush.msra.mxu0 0.0
  %1520 = vmatpush.msra.mxu0 0.0
  %1521 = vmatpush.msra.mxu0 0.0
  %1522 = vmatpush.msra.mxu0 0.0
  %1523 = vmatpush.msra.mxu0 0.0
  %1524 = vmatpush.msra.mxu0 0.0
  %1525 = vmatpush.msra.mxu0 0.0
  %1526 = vmatpush.msra.mxu0 0.0
  %1527 = vmatpush.msra.mxu0 0.0
  %1528 = vmatpush.msra.mxu0 0.0
  %1529 = vmatpush.msra.mxu0 %v1503
  %1530 = vmatmul.f32.gmra.mxu0 %v1512
  %v1531 = vpop.f32.mrf.mxu0
  %v1532 = vadd.f32 0.0, %v1531
  %1533 = vdwg.mxu0
  %1534 = vmatpush.msra.mxu0 0.0
  %1535 = vmatpush.msra.mxu0 0.0
  %1536 = vmatpush.msra.mxu0 0.0
  %1537 = vmatpush.msra.mxu0 0.0
  %1538 = vmatpush.msra.mxu0 0.0
  %1539 = vmatpush.msra.mxu0 0.0
  %1540 = vmatpush.msra.mxu0 0.0
  %1541 = vmatpush.msra.mxu0 0.0
  %1542 = vmatpush.msra.mxu0 0.0
  %1543 = vmatpush.msra.mxu0 0.0
  %1544 = vmatpush.msra.mxu0 0.0
  %1545 = vmatpush.msra.mxu0 0.0
  %1546 = vmatpush.msra.mxu0 0.0
  %1547 = vmatpush.msra.mxu0 0.0
  %1548 = vmatpush.msra.mxu0 0.0
  %1549 = vmatpush.msra.mxu0 %v1504
  %1550 = vmatmul.f32.gmra.mxu0 %v1512
  %v1551 = vpop.f32.mrf.mxu0
  %v1552 = vadd.f32 0.0, %v1551
  %1553 = vdwg.mxu0
  %1554 = vmatpush.msra.mxu0 0.0
  %1555 = vmatpush.msra.mxu0 0.0
  %1556 = vmatpush.msra.mxu0 0.0
  %1557 = vmatpush.msra.mxu0 0.0
  %1558 = vmatpush.msra.mxu0 0.0
  %1559 = vmatpush.msra.mxu0 0.0
  %1560 = vmatpush.msra.mxu0 0.0
  %1561 = vmatpush.msra.mxu0 0.0
  %1562 = vmatpush.msra.mxu0 0.0
  %1563 = vmatpush.msra.mxu0 0.0
  %1564 = vmatpush.msra.mxu0 0.0
  %1565 = vmatpush.msra.mxu0 0.0
  %1566 = vmatpush.msra.mxu0 0.0
  %1567 = vmatpush.msra.mxu0 0.0
  %1568 = vmatpush.msra.mxu0 0.0
  %1569 = vmatpush.msra.mxu0 %v1505
  %1570 = vmatmul.f32.gmra.mxu0 %v1512
  %v1571 = vpop.f32.mrf.mxu0
  %v1572 = vadd.f32 0.0, %v1571
  %1573 = vdwg.mxu0
  %1574 = vmatpush.msra.mxu0 0.0
  %1575 = vmatpush.msra.mxu0 0.0
  %1576 = vmatpush.msra.mxu0 0.0
  %1577 = vmatpush.msra.mxu0 0.0
  %1578 = vmatpush.msra.mxu0 0.0
  %1579 = vmatpush.msra.mxu0 0.0
  %1580 = vmatpush.msra.mxu0 0.0
  %1581 = vmatpush.msra.mxu0 0.0
  %1582 = vmatpush.msra.mxu0 0.0
  %1583 = vmatpush.msra.mxu0 0.0
  %1584 = vmatpush.msra.mxu0 0.0
  %1585 = vmatpush.msra.mxu0 0.0
  %1586 = vmatpush.msra.mxu0 0.0
  %1587 = vmatpush.msra.mxu0 0.0
  %1588 = vmatpush.msra.mxu0 0.0
  %1589 = vmatpush.msra.mxu0 %v1506
  %1590 = vmatmul.f32.gmra.mxu0 %v1512
  %v1591 = vpop.f32.mrf.mxu0
  %v1592 = vadd.f32 0.0, %v1591
  %1593 = vdwg.mxu0
  %v1594 = vsel %vm1342, 1, 0
  %v1595 = vsel %vm1343, 1, 0
  %v1596 = vsel %vm1344, 1, 0
  %v1597 = vsel %vm1345, 1, 0
  %vm1598 = vcmp.eq.s32.totalorder %v1594, 1
  %vm1599 = vcmp.eq.s32.totalorder %v1595, 1
  %vm1600 = vcmp.eq.s32.totalorder %v1596, 1
  %vm1601 = vcmp.eq.s32.totalorder %v1597, 1
  %v1602 = vsel %vm1598, %v1532, 0.0
  %v1603 = vsel %vm1599, %v1552, 0.0
  %v1604 = vsel %vm1600, %v1572, 0.0
  %v1605 = vsel %vm1601, %v1592, 0.0
  %v1606 = vadd.f32 %v1487, %v1602
  %v1607 = vadd.f32 %v1488, %v1603
  %v1608 = vadd.f32 %v1489, %v1604
  %v1609 = vadd.f32 %v1490, %v1605
  %v1610 = vld [vmem:[%s1 + $0x68] sm:$0xff]
  %1611 = vrot.lane.b32.xlu0 %v1359, 52
  %v1612 = vpop.permute.xlu0 %1611
  %1613 = vrot.lane.b32.xlu0 %v1360, 52
  %v1614 = vpop.permute.xlu0 %1613
  %1615 = vrot.lane.b32.xlu0 %v1361, 52
  %v1616 = vpop.permute.xlu0 %1615
  %1617 = vrot.lane.b32.xlu0 %v1362, 52
  %v1618 = vpop.permute.xlu0 %1617
  %1619 = vrot.lane.b32.xlu0 %v1363, 52
  %v1620 = vpop.permute.xlu0 %1619
  %vm1621 = vcmask 424960
  %v1622 = vsel %vm1621, %v1612, %v1614
  %v1623 = vsel %vm1621, %v1614, %v1616
  %v1624 = vsel %vm1621, %v1616, %v1618
  %v1625 = vsel %vm1621, %v1618, %v1620
  %v1631 = vsel %vm80, %v1610, 0
  %1633 = vmatpush.msra.mxu0 0.0
  %1634 = vmatpush.msra.mxu0 0.0
  %1635 = vmatpush.msra.mxu0 0.0
  %1636 = vmatpush.msra.mxu0 0.0
  %1637 = vmatpush.msra.mxu0 0.0
  %1638 = vmatpush.msra.mxu0 0.0
  %1639 = vmatpush.msra.mxu0 0.0
  %1640 = vmatpush.msra.mxu0 0.0
  %1641 = vmatpush.msra.mxu0 0.0
  %1642 = vmatpush.msra.mxu0 0.0
  %1643 = vmatpush.msra.mxu0 0.0
  %1644 = vmatpush.msra.mxu0 0.0
  %1645 = vmatpush.msra.mxu0 0.0
  %1646 = vmatpush.msra.mxu0 0.0
  %1647 = vmatpush.msra.mxu0 0.0
  %1648 = vmatpush.msra.mxu0 %v1622
  %1649 = vmatmul.f32.gmra.mxu0 %v1631
  %v1650 = vpop.f32.mrf.mxu0
  %v1651 = vadd.f32 0.0, %v1650
  %1652 = vdwg.mxu0
  %1653 = vmatpush.msra.mxu0 0.0
  %1654 = vmatpush.msra.mxu0 0.0
  %1655 = vmatpush.msra.mxu0 0.0
  %1656 = vmatpush.msra.mxu0 0.0
  %1657 = vmatpush.msra.mxu0 0.0
  %1658 = vmatpush.msra.mxu0 0.0
  %1659 = vmatpush.msra.mxu0 0.0
  %1660 = vmatpush.msra.mxu0 0.0
  %1661 = vmatpush.msra.mxu0 0.0
  %1662 = vmatpush.msra.mxu0 0.0
  %1663 = vmatpush.msra.mxu0 0.0
  %1664 = vmatpush.msra.mxu0 0.0
  %1665 = vmatpush.msra.mxu0 0.0
  %1666 = vmatpush.msra.mxu0 0.0
  %1667 = vmatpush.msra.mxu0 0.0
  %1668 = vmatpush.msra.mxu0 %v1623
  %1669 = vmatmul.f32.gmra.mxu0 %v1631
  %v1670 = vpop.f32.mrf.mxu0
  %v1671 = vadd.f32 0.0, %v1670
  %1672 = vdwg.mxu0
  %1673 = vmatpush.msra.mxu0 0.0
  %1674 = vmatpush.msra.mxu0 0.0
  %1675 = vmatpush.msra.mxu0 0.0
  %1676 = vmatpush.msra.mxu0 0.0
  %1677 = vmatpush.msra.mxu0 0.0
  %1678 = vmatpush.msra.mxu0 0.0
  %1679 = vmatpush.msra.mxu0 0.0
  %1680 = vmatpush.msra.mxu0 0.0
  %1681 = vmatpush.msra.mxu0 0.0
  %1682 = vmatpush.msra.mxu0 0.0
  %1683 = vmatpush.msra.mxu0 0.0
  %1684 = vmatpush.msra.mxu0 0.0
  %1685 = vmatpush.msra.mxu0 0.0
  %1686 = vmatpush.msra.mxu0 0.0
  %1687 = vmatpush.msra.mxu0 0.0
  %1688 = vmatpush.msra.mxu0 %v1624
  %1689 = vmatmul.f32.gmra.mxu0 %v1631
  %v1690 = vpop.f32.mrf.mxu0
  %v1691 = vadd.f32 0.0, %v1690
  %1692 = vdwg.mxu0
  %1693 = vmatpush.msra.mxu0 0.0
  %1694 = vmatpush.msra.mxu0 0.0
  %1695 = vmatpush.msra.mxu0 0.0
  %1696 = vmatpush.msra.mxu0 0.0
  %1697 = vmatpush.msra.mxu0 0.0
  %1698 = vmatpush.msra.mxu0 0.0
  %1699 = vmatpush.msra.mxu0 0.0
  %1700 = vmatpush.msra.mxu0 0.0
  %1701 = vmatpush.msra.mxu0 0.0
  %1702 = vmatpush.msra.mxu0 0.0
  %1703 = vmatpush.msra.mxu0 0.0
  %1704 = vmatpush.msra.mxu0 0.0
  %1705 = vmatpush.msra.mxu0 0.0
  %1706 = vmatpush.msra.mxu0 0.0
  %1707 = vmatpush.msra.mxu0 0.0
  %1708 = vmatpush.msra.mxu0 %v1625
  %1709 = vmatmul.f32.gmra.mxu0 %v1631
  %v1710 = vpop.f32.mrf.mxu0
  %v1711 = vadd.f32 0.0, %v1710
  %1712 = vdwg.mxu0
  %vm1713 = vmand %vm1342, %vm1354
  %vm1714 = vmand %vm1343, %vm1355
  %vm1715 = vmand %vm1344, %vm1356
  %vm1716 = vmand %vm1345, %vm1357
  %v1717 = vsel %vm1713, 1, 0
  %v1718 = vsel %vm1714, 1, 0
  %v1719 = vsel %vm1715, 1, 0
  %v1720 = vsel %vm1716, 1, 0
  %vm1721 = vcmp.eq.s32.totalorder %v1717, 1
  %vm1722 = vcmp.eq.s32.totalorder %v1718, 1
  %vm1723 = vcmp.eq.s32.totalorder %v1719, 1
  %vm1724 = vcmp.eq.s32.totalorder %v1720, 1
  %v1725 = vsel %vm1721, %v1651, 0.0
  %v1726 = vsel %vm1722, %v1671, 0.0
  %v1727 = vsel %vm1723, %v1691, 0.0
  %v1728 = vsel %vm1724, %v1711, 0.0
  %v1729 = vadd.f32 %v1606, %v1725
  %v1730 = vadd.f32 %v1607, %v1726
  %v1731 = vadd.f32 %v1608, %v1727
  %v1732 = vadd.f32 %v1609, %v1728
  %v1733 = vld [vmem:[%s1 + $0x70] sm:$0xff]
  %v1734 = vld [vmem:[#allocation2 + $0x8] sm:$0xff]
  %v1735 = vld [vmem:[#allocation2 + $0x10] sm:$0xff]
  %v1736 = vld [vmem:[#allocation2 + $0x18] sm:$0xff]
  %v1737 = vld [vmem:[#allocation2 + $0x20] sm:$0xff]
  %v1738 = vld [vmem:[#allocation2 + $0x28] sm:$0xff]
  %1744 = vrot.lane.b32.xlu0 %v1734, 12
  %v1745 = vpop.permute.xlu0 %1744
  %1746 = vrot.lane.b32.xlu0 %v1735, 12
  %v1747 = vpop.permute.xlu0 %1746
  %1748 = vrot.lane.b32.xlu0 %v1736, 12
  %v1749 = vpop.permute.xlu0 %1748
  %1750 = vrot.lane.b32.xlu0 %v1737, 12
  %v1751 = vpop.permute.xlu0 %1750
  %1752 = vrot.lane.b32.xlu0 %v1738, 12
  %v1753 = vpop.permute.xlu0 %1752
  %vm1754 = vcmask 97280
  %v1755 = vsel %vm1754, %v1745, %v1747
  %v1756 = vsel %vm1754, %v1747, %v1749
  %v1757 = vsel %vm1754, %v1749, %v1751
  %v1758 = vsel %vm1754, %v1751, %v1753
  %v1764 = vsel %vm80, %v1733, 0
  %1766 = vmatpush.msra.mxu0 0.0
  %1767 = vmatpush.msra.mxu0 0.0
  %1768 = vmatpush.msra.mxu0 0.0
  %1769 = vmatpush.msra.mxu0 0.0
  %1770 = vmatpush.msra.mxu0 0.0
  %1771 = vmatpush.msra.mxu0 0.0
  %1772 = vmatpush.msra.mxu0 0.0
  %1773 = vmatpush.msra.mxu0 0.0
  %1774 = vmatpush.msra.mxu0 0.0
  %1775 = vmatpush.msra.mxu0 0.0
  %1776 = vmatpush.msra.mxu0 0.0
  %1777 = vmatpush.msra.mxu0 0.0
  %1778 = vmatpush.msra.mxu0 0.0
  %1779 = vmatpush.msra.mxu0 0.0
  %1780 = vmatpush.msra.mxu0 0.0
  %1781 = vmatpush.msra.mxu0 %v1755
  %1782 = vmatmul.f32.gmra.mxu0 %v1764
  %v1783 = vpop.f32.mrf.mxu0
  %v1784 = vadd.f32 0.0, %v1783
  %1785 = vdwg.mxu0
  %1786 = vmatpush.msra.mxu0 0.0
  %1787 = vmatpush.msra.mxu0 0.0
  %1788 = vmatpush.msra.mxu0 0.0
  %1789 = vmatpush.msra.mxu0 0.0
  %1790 = vmatpush.msra.mxu0 0.0
  %1791 = vmatpush.msra.mxu0 0.0
  %1792 = vmatpush.msra.mxu0 0.0
  %1793 = vmatpush.msra.mxu0 0.0
  %1794 = vmatpush.msra.mxu0 0.0
  %1795 = vmatpush.msra.mxu0 0.0
  %1796 = vmatpush.msra.mxu0 0.0
  %1797 = vmatpush.msra.mxu0 0.0
  %1798 = vmatpush.msra.mxu0 0.0
  %1799 = vmatpush.msra.mxu0 0.0
  %1800 = vmatpush.msra.mxu0 0.0
  %1801 = vmatpush.msra.mxu0 %v1756
  %1802 = vmatmul.f32.gmra.mxu0 %v1764
  %v1803 = vpop.f32.mrf.mxu0
  %v1804 = vadd.f32 0.0, %v1803
  %1805 = vdwg.mxu0
  %1806 = vmatpush.msra.mxu0 0.0
  %1807 = vmatpush.msra.mxu0 0.0
  %1808 = vmatpush.msra.mxu0 0.0
  %1809 = vmatpush.msra.mxu0 0.0
  %1810 = vmatpush.msra.mxu0 0.0
  %1811 = vmatpush.msra.mxu0 0.0
  %1812 = vmatpush.msra.mxu0 0.0
  %1813 = vmatpush.msra.mxu0 0.0
  %1814 = vmatpush.msra.mxu0 0.0
  %1815 = vmatpush.msra.mxu0 0.0
  %1816 = vmatpush.msra.mxu0 0.0
  %1817 = vmatpush.msra.mxu0 0.0
  %1818 = vmatpush.msra.mxu0 0.0
  %1819 = vmatpush.msra.mxu0 0.0
  %1820 = vmatpush.msra.mxu0 0.0
  %1821 = vmatpush.msra.mxu0 %v1757
  %1822 = vmatmul.f32.gmra.mxu0 %v1764
  %v1823 = vpop.f32.mrf.mxu0
  %v1824 = vadd.f32 0.0, %v1823
  %1825 = vdwg.mxu0
  %1826 = vmatpush.msra.mxu0 0.0
  %1827 = vmatpush.msra.mxu0 0.0
  %1828 = vmatpush.msra.mxu0 0.0
  %1829 = vmatpush.msra.mxu0 0.0
  %1830 = vmatpush.msra.mxu0 0.0
  %1831 = vmatpush.msra.mxu0 0.0
  %1832 = vmatpush.msra.mxu0 0.0
  %1833 = vmatpush.msra.mxu0 0.0
  %1834 = vmatpush.msra.mxu0 0.0
  %1835 = vmatpush.msra.mxu0 0.0
  %1836 = vmatpush.msra.mxu0 0.0
  %1837 = vmatpush.msra.mxu0 0.0
  %1838 = vmatpush.msra.mxu0 0.0
  %1839 = vmatpush.msra.mxu0 0.0
  %1840 = vmatpush.msra.mxu0 0.0
  %1841 = vmatpush.msra.mxu0 %v1758
  %1842 = vmatmul.f32.gmra.mxu0 %v1764
  %v1843 = vpop.f32.mrf.mxu0
  %v1844 = vadd.f32 0.0, %v1843
  %1845 = vdwg.mxu0
  %v1846 = vsel %vm1350, 1, 0
  %v1847 = vsel %vm1351, 1, 0
  %v1848 = vsel %vm1352, 1, 0
  %v1849 = vsel %vm1353, 1, 0
  %vm1850 = vcmp.eq.s32.totalorder %v1846, 1
  %vm1851 = vcmp.eq.s32.totalorder %v1847, 1
  %vm1852 = vcmp.eq.s32.totalorder %v1848, 1
  %vm1853 = vcmp.eq.s32.totalorder %v1849, 1
  %v1854 = vsel %vm1850, %v1784, 0.0
  %v1855 = vsel %vm1851, %v1804, 0.0
  %v1856 = vsel %vm1852, %v1824, 0.0
  %v1857 = vsel %vm1853, %v1844, 0.0
  %v1858 = vadd.f32 %v1729, %v1854
  %v1859 = vadd.f32 %v1730, %v1855
  %v1860 = vadd.f32 %v1731, %v1856
  %v1861 = vadd.f32 %v1732, %v1857
  %v1862 = vld [vmem:[%s1 + $0x78] sm:$0xff]
  %v1864 = vsel %vm80, %v1862, 0
  %1866 = vmatpush.msra.mxu0 0.0
  %1867 = vmatpush.msra.mxu0 0.0
  %1868 = vmatpush.msra.mxu0 0.0
  %1869 = vmatpush.msra.mxu0 0.0
  %1870 = vmatpush.msra.mxu0 0.0
  %1871 = vmatpush.msra.mxu0 0.0
  %1872 = vmatpush.msra.mxu0 0.0
  %1873 = vmatpush.msra.mxu0 0.0
  %1874 = vmatpush.msra.mxu0 0.0
  %1875 = vmatpush.msra.mxu0 0.0
  %1876 = vmatpush.msra.mxu0 0.0
  %1877 = vmatpush.msra.mxu0 0.0
  %1878 = vmatpush.msra.mxu0 0.0
  %1879 = vmatpush.msra.mxu0 0.0
  %1880 = vmatpush.msra.mxu0 0.0
  %1881 = vmatpush.msra.mxu0 %v1735
  %1882 = vmatmul.f32.gmra.mxu0 %v1864
  %v1883 = vpop.f32.mrf.mxu0
  %v1884 = vadd.f32 0.0, %v1883
  %1885 = vdwg.mxu0
  %1886 = vmatpush.msra.mxu0 0.0
  %1887 = vmatpush.msra.mxu0 0.0
  %1888 = vmatpush.msra.mxu0 0.0
  %1889 = vmatpush.msra.mxu0 0.0
  %1890 = vmatpush.msra.mxu0 0.0
  %1891 = vmatpush.msra.mxu0 0.0
  %1892 = vmatpush.msra.mxu0 0.0
  %1893 = vmatpush.msra.mxu0 0.0
  %1894 = vmatpush.msra.mxu0 0.0
  %1895 = vmatpush.msra.mxu0 0.0
  %1896 = vmatpush.msra.mxu0 0.0
  %1897 = vmatpush.msra.mxu0 0.0
  %1898 = vmatpush.msra.mxu0 0.0
  %1899 = vmatpush.msra.mxu0 0.0
  %1900 = vmatpush.msra.mxu0 0.0
  %1901 = vmatpush.msra.mxu0 %v1736
  %1902 = vmatmul.f32.gmra.mxu0 %v1864
  %v1903 = vpop.f32.mrf.mxu0
  %v1904 = vadd.f32 0.0, %v1903
  %1905 = vdwg.mxu0
  %1906 = vmatpush.msra.mxu0 0.0
  %1907 = vmatpush.msra.mxu0 0.0
  %1908 = vmatpush.msra.mxu0 0.0
  %1909 = vmatpush.msra.mxu0 0.0
  %1910 = vmatpush.msra.mxu0 0.0
  %1911 = vmatpush.msra.mxu0 0.0
  %1912 = vmatpush.msra.mxu0 0.0
  %1913 = vmatpush.msra.mxu0 0.0
  %1914 = vmatpush.msra.mxu0 0.0
  %1915 = vmatpush.msra.mxu0 0.0
  %1916 = vmatpush.msra.mxu0 0.0
  %1917 = vmatpush.msra.mxu0 0.0
  %1918 = vmatpush.msra.mxu0 0.0
  %1919 = vmatpush.msra.mxu0 0.0
  %1920 = vmatpush.msra.mxu0 0.0
  %1921 = vmatpush.msra.mxu0 %v1737
  %1922 = vmatmul.f32.gmra.mxu0 %v1864
  %v1923 = vpop.f32.mrf.mxu0
  %v1924 = vadd.f32 0.0, %v1923
  %1925 = vdwg.mxu0
  %1926 = vmatpush.msra.mxu0 0.0
  %1927 = vmatpush.msra.mxu0 0.0
  %1928 = vmatpush.msra.mxu0 0.0
  %1929 = vmatpush.msra.mxu0 0.0
  %1930 = vmatpush.msra.mxu0 0.0
  %1931 = vmatpush.msra.mxu0 0.0
  %1932 = vmatpush.msra.mxu0 0.0
  %1933 = vmatpush.msra.mxu0 0.0
  %1934 = vmatpush.msra.mxu0 0.0
  %1935 = vmatpush.msra.mxu0 0.0
  %1936 = vmatpush.msra.mxu0 0.0
  %1937 = vmatpush.msra.mxu0 0.0
  %1938 = vmatpush.msra.mxu0 0.0
  %1939 = vmatpush.msra.mxu0 0.0
  %1940 = vmatpush.msra.mxu0 0.0
  %1941 = vmatpush.msra.mxu0 %v1738
  %1942 = vmatmul.f32.gmra.mxu0 %v1864
  %v1943 = vpop.f32.mrf.mxu0
  %v1944 = vadd.f32 0.0, %v1943
  %1945 = vdwg.mxu0
  %v1946 = vadd.f32 %v1858, %v1884
  %v1947 = vadd.f32 %v1859, %v1904
  %v1948 = vadd.f32 %v1860, %v1924
  %v1949 = vadd.f32 %v1861, %v1944
  %v1950 = vld [vmem:[%s1 + $0x80] sm:$0xff]
  %v1951 = vld [vmem:[#allocation2 + $0x10] sm:$0xff]
  %v1952 = vld [vmem:[#allocation2 + $0x18] sm:$0xff]
  %v1953 = vld [vmem:[#allocation2 + $0x20] sm:$0xff]
  %v1954 = vld [vmem:[#allocation2 + $0x28] sm:$0xff]
  %v1955 = vld [vmem:[#allocation2 + $0x30] sm:$0xff]
  %1961 = vrot.lane.b32.xlu0 %v1951, 116
  %v1962 = vpop.permute.xlu0 %1961
  %1963 = vrot.lane.b32.xlu0 %v1952, 116
  %v1964 = vpop.permute.xlu0 %1963
  %1965 = vrot.lane.b32.xlu0 %v1953, 116
  %v1966 = vpop.permute.xlu0 %1965
  %1967 = vrot.lane.b32.xlu0 %v1954, 116
  %v1968 = vpop.permute.xlu0 %1967
  %1969 = vrot.lane.b32.xlu0 %v1955, 116
  %v1970 = vpop.permute.xlu0 %1969
  %vm1971 = vcmask 949248
  %v1972 = vsel %vm1971, %v1962, %v1964
  %v1973 = vsel %vm1971, %v1964, %v1966
  %v1974 = vsel %vm1971, %v1966, %v1968
  %v1975 = vsel %vm1971, %v1968, %v1970
  %v1981 = vsel %vm80, %v1950, 0
  %1983 = vmatpush.msra.mxu0 0.0
  %1984 = vmatpush.msra.mxu0 0.0
  %1985 = vmatpush.msra.mxu0 0.0
  %1986 = vmatpush.msra.mxu0 0.0
  %1987 = vmatpush.msra.mxu0 0.0
  %1988 = vmatpush.msra.mxu0 0.0
  %1989 = vmatpush.msra.mxu0 0.0
  %1990 = vmatpush.msra.mxu0 0.0
  %1991 = vmatpush.msra.mxu0 0.0
  %1992 = vmatpush.msra.mxu0 0.0
  %1993 = vmatpush.msra.mxu0 0.0
  %1994 = vmatpush.msra.mxu0 0.0
  %1995 = vmatpush.msra.mxu0 0.0
  %1996 = vmatpush.msra.mxu0 0.0
  %1997 = vmatpush.msra.mxu0 0.0
  %1998 = vmatpush.msra.mxu0 %v1972
  %1999 = vmatmul.f32.gmra.mxu0 %v1981
  %v2000 = vpop.f32.mrf.mxu0
  %v2001 = vadd.f32 0.0, %v2000
  %2002 = vdwg.mxu0
  %2003 = vmatpush.msra.mxu0 0.0
  %2004 = vmatpush.msra.mxu0 0.0
  %2005 = vmatpush.msra.mxu0 0.0
  %2006 = vmatpush.msra.mxu0 0.0
  %2007 = vmatpush.msra.mxu0 0.0
  %2008 = vmatpush.msra.mxu0 0.0
  %2009 = vmatpush.msra.mxu0 0.0
  %2010 = vmatpush.msra.mxu0 0.0
  %2011 = vmatpush.msra.mxu0 0.0
  %2012 = vmatpush.msra.mxu0 0.0
  %2013 = vmatpush.msra.mxu0 0.0
  %2014 = vmatpush.msra.mxu0 0.0
  %2015 = vmatpush.msra.mxu0 0.0
  %2016 = vmatpush.msra.mxu0 0.0
  %2017 = vmatpush.msra.mxu0 0.0
  %2018 = vmatpush.msra.mxu0 %v1973
  %2019 = vmatmul.f32.gmra.mxu0 %v1981
  %v2020 = vpop.f32.mrf.mxu0
  %v2021 = vadd.f32 0.0, %v2020
  %2022 = vdwg.mxu0
  %2023 = vmatpush.msra.mxu0 0.0
  %2024 = vmatpush.msra.mxu0 0.0
  %2025 = vmatpush.msra.mxu0 0.0
  %2026 = vmatpush.msra.mxu0 0.0
  %2027 = vmatpush.msra.mxu0 0.0
  %2028 = vmatpush.msra.mxu0 0.0
  %2029 = vmatpush.msra.mxu0 0.0
  %2030 = vmatpush.msra.mxu0 0.0
  %2031 = vmatpush.msra.mxu0 0.0
  %2032 = vmatpush.msra.mxu0 0.0
  %2033 = vmatpush.msra.mxu0 0.0
  %2034 = vmatpush.msra.mxu0 0.0
  %2035 = vmatpush.msra.mxu0 0.0
  %2036 = vmatpush.msra.mxu0 0.0
  %2037 = vmatpush.msra.mxu0 0.0
  %2038 = vmatpush.msra.mxu0 %v1974
  %2039 = vmatmul.f32.gmra.mxu0 %v1981
  %v2040 = vpop.f32.mrf.mxu0
  %v2041 = vadd.f32 0.0, %v2040
  %2042 = vdwg.mxu0
  %2043 = vmatpush.msra.mxu0 0.0
  %2044 = vmatpush.msra.mxu0 0.0
  %2045 = vmatpush.msra.mxu0 0.0
  %2046 = vmatpush.msra.mxu0 0.0
  %2047 = vmatpush.msra.mxu0 0.0
  %2048 = vmatpush.msra.mxu0 0.0
  %2049 = vmatpush.msra.mxu0 0.0
  %2050 = vmatpush.msra.mxu0 0.0
  %2051 = vmatpush.msra.mxu0 0.0
  %2052 = vmatpush.msra.mxu0 0.0
  %2053 = vmatpush.msra.mxu0 0.0
  %2054 = vmatpush.msra.mxu0 0.0
  %2055 = vmatpush.msra.mxu0 0.0
  %2056 = vmatpush.msra.mxu0 0.0
  %2057 = vmatpush.msra.mxu0 0.0
  %2058 = vmatpush.msra.mxu0 %v1975
  %2059 = vmatmul.f32.gmra.mxu0 %v1981
  %v2060 = vpop.f32.mrf.mxu0
  %v2061 = vadd.f32 0.0, %v2060
  %2062 = vdwg.mxu0
  %v2063 = vsel %vm1354, 1, 0
  %v2064 = vsel %vm1355, 1, 0
  %v2065 = vsel %vm1356, 1, 0
  %v2066 = vsel %vm1357, 1, 0
  %vm2067 = vcmp.eq.s32.totalorder %v2063, 1
  %vm2068 = vcmp.eq.s32.totalorder %v2064, 1
  %vm2069 = vcmp.eq.s32.totalorder %v2065, 1
  %vm2070 = vcmp.eq.s32.totalorder %v2066, 1
  %v2071 = vsel %vm2067, %v2001, 0.0
  %v2072 = vsel %vm2068, %v2021, 0.0
  %v2073 = vsel %vm2069, %v2041, 0.0
  %v2074 = vsel %vm2070, %v2061, 0.0
  %v2075 = vadd.f32 %v1946, %v2071
  %v2076 = vadd.f32 %v1947, %v2072
  %v2077 = vadd.f32 %v1948, %v2073
  %v2078 = vadd.f32 %v1949, %v2074
  %v2079 = vld [vmem:[%s1 + $0x88] sm:$0xff]
  %v2080 = vld [vmem:[#allocation2 + $0x18] sm:$0xff]
  %v2081 = vld [vmem:[#allocation2 + $0x20] sm:$0xff]
  %v2082 = vld [vmem:[#allocation2 + $0x28] sm:$0xff]
  %v2083 = vld [vmem:[#allocation2 + $0x30] sm:$0xff]
  %v2084 = vld [vmem:[#allocation2 + $0x38] sm:$0xff]
  %2090 = vrot.lane.b32.xlu0 %v2080, 76
  %v2091 = vpop.permute.xlu0 %2090
  %2092 = vrot.lane.b32.xlu0 %v2081, 76
  %v2093 = vpop.permute.xlu0 %2092
  %2094 = vrot.lane.b32.xlu0 %v2082, 76
  %v2095 = vpop.permute.xlu0 %2094
  %2096 = vrot.lane.b32.xlu0 %v2083, 76
  %v2097 = vpop.permute.xlu0 %2096
  %2098 = vrot.lane.b32.xlu0 %v2084, 76
  %v2099 = vpop.permute.xlu0 %2098
  %v2100 = vsel %vm1379, %v2091, %v2093
  %v2101 = vsel %vm1379, %v2093, %v2095
  %v2102 = vsel %vm1379, %v2095, %v2097
  %v2103 = vsel %vm1379, %v2097, %v2099
  %v2109 = vsel %vm80, %v2079, 0
  %2111 = vmatpush.msra.mxu0 0.0
  %2112 = vmatpush.msra.mxu0 0.0
  %2113 = vmatpush.msra.mxu0 0.0
  %2114 = vmatpush.msra.mxu0 0.0
  %2115 = vmatpush.msra.mxu0 0.0
  %2116 = vmatpush.msra.mxu0 0.0
  %2117 = vmatpush.msra.mxu0 0.0
  %2118 = vmatpush.msra.mxu0 0.0
  %2119 = vmatpush.msra.mxu0 0.0
  %2120 = vmatpush.msra.mxu0 0.0
  %2121 = vmatpush.msra.mxu0 0.0
  %2122 = vmatpush.msra.mxu0 0.0
  %2123 = vmatpush.msra.mxu0 0.0
  %2124 = vmatpush.msra.mxu0 0.0
  %2125 = vmatpush.msra.mxu0 0.0
  %2126 = vmatpush.msra.mxu0 %v2100
  %2127 = vmatmul.f32.gmra.mxu0 %v2109
  %v2128 = vpop.f32.mrf.mxu0
  %v2129 = vadd.f32 0.0, %v2128
  %2130 = vdwg.mxu0
  %2131 = vmatpush.msra.mxu0 0.0
  %2132 = vmatpush.msra.mxu0 0.0
  %2133 = vmatpush.msra.mxu0 0.0
  %2134 = vmatpush.msra.mxu0 0.0
  %2135 = vmatpush.msra.mxu0 0.0
  %2136 = vmatpush.msra.mxu0 0.0
  %2137 = vmatpush.msra.mxu0 0.0
  %2138 = vmatpush.msra.mxu0 0.0
  %2139 = vmatpush.msra.mxu0 0.0
  %2140 = vmatpush.msra.mxu0 0.0
  %2141 = vmatpush.msra.mxu0 0.0
  %2142 = vmatpush.msra.mxu0 0.0
  %2143 = vmatpush.msra.mxu0 0.0
  %2144 = vmatpush.msra.mxu0 0.0
  %2145 = vmatpush.msra.mxu0 0.0
  %2146 = vmatpush.msra.mxu0 %v2101
  %2147 = vmatmul.f32.gmra.mxu0 %v2109
  %v2148 = vpop.f32.mrf.mxu0
  %v2149 = vadd.f32 0.0, %v2148
  %2150 = vdwg.mxu0
  %2151 = vmatpush.msra.mxu0 0.0
  %2152 = vmatpush.msra.mxu0 0.0
  %2153 = vmatpush.msra.mxu0 0.0
  %2154 = vmatpush.msra.mxu0 0.0
  %2155 = vmatpush.msra.mxu0 0.0
  %2156 = vmatpush.msra.mxu0 0.0
  %2157 = vmatpush.msra.mxu0 0.0
  %2158 = vmatpush.msra.mxu0 0.0
  %2159 = vmatpush.msra.mxu0 0.0
  %2160 = vmatpush.msra.mxu0 0.0
  %2161 = vmatpush.msra.mxu0 0.0
  %2162 = vmatpush.msra.mxu0 0.0
  %2163 = vmatpush.msra.mxu0 0.0
  %2164 = vmatpush.msra.mxu0 0.0
  %2165 = vmatpush.msra.mxu0 0.0
  %2166 = vmatpush.msra.mxu0 %v2102
  %2167 = vmatmul.f32.gmra.mxu0 %v2109
  %v2168 = vpop.f32.mrf.mxu0
  %v2169 = vadd.f32 0.0, %v2168
  %2170 = vdwg.mxu0
  %2171 = vmatpush.msra.mxu0 0.0
  %2172 = vmatpush.msra.mxu0 0.0
  %2173 = vmatpush.msra.mxu0 0.0
  %2174 = vmatpush.msra.mxu0 0.0
  %2175 = vmatpush.msra.mxu0 0.0
  %2176 = vmatpush.msra.mxu0 0.0
  %2177 = vmatpush.msra.mxu0 0.0
  %2178 = vmatpush.msra.mxu0 0.0
  %2179 = vmatpush.msra.mxu0 0.0
  %2180 = vmatpush.msra.mxu0 0.0
  %2181 = vmatpush.msra.mxu0 0.0
  %2182 = vmatpush.msra.mxu0 0.0
  %2183 = vmatpush.msra.mxu0 0.0
  %2184 = vmatpush.msra.mxu0 0.0
  %2185 = vmatpush.msra.mxu0 0.0
  %2186 = vmatpush.msra.mxu0 %v2103
  %2187 = vmatmul.f32.gmra.mxu0 %v2109
  %v2188 = vpop.f32.mrf.mxu0
  %v2189 = vadd.f32 0.0, %v2188
  %2190 = vdwg.mxu0
  %vm2191 = vmand %vm1346, %vm1350
  %vm2192 = vmand %vm1347, %vm1351
  %vm2193 = vmand %vm1348, %vm1352
  %vm2194 = vmand %vm1349, %vm1353
  %v2195 = vsel %vm2191, 1, 0
  %v2196 = vsel %vm2192, 1, 0
  %v2197 = vsel %vm2193, 1, 0
  %v2198 = vsel %vm2194, 1, 0
  %vm2199 = vcmp.eq.s32.totalorder %v2195, 1
  %vm2200 = vcmp.eq.s32.totalorder %v2196, 1
  %vm2201 = vcmp.eq.s32.totalorder %v2197, 1
  %vm2202 = vcmp.eq.s32.totalorder %v2198, 1
  %v2203 = vsel %vm2199, %v2129, 0.0
  %v2204 = vsel %vm2200, %v2149, 0.0
  %v2205 = vsel %vm2201, %v2169, 0.0
  %v2206 = vsel %vm2202, %v2189, 0.0
  %v2207 = vadd.f32 %v2075, %v2203
  %v2208 = vadd.f32 %v2076, %v2204
  %v2209 = vadd.f32 %v2077, %v2205
  %v2210 = vadd.f32 %v2078, %v2206
  %v2211 = vld [vmem:[%s1 + $0x90] sm:$0xff]
  %2212 = vrot.lane.b32.xlu0 %v2080, 64
  %v2213 = vpop.permute.xlu0 %2212
  %2214 = vrot.lane.b32.xlu0 %v2081, 64
  %v2215 = vpop.permute.xlu0 %2214
  %2216 = vrot.lane.b32.xlu0 %v2082, 64
  %v2217 = vpop.permute.xlu0 %2216
  %2218 = vrot.lane.b32.xlu0 %v2083, 64
  %v2219 = vpop.permute.xlu0 %2218
  %2220 = vrot.lane.b32.xlu0 %v2084, 64
  %v2221 = vpop.permute.xlu0 %2220
  %v2222 = vsel %vm1502, %v2213, %v2215
  %v2223 = vsel %vm1502, %v2215, %v2217
  %v2224 = vsel %vm1502, %v2217, %v2219
  %v2225 = vsel %vm1502, %v2219, %v2221
  %v2231 = vsel %vm80, %v2211, 0
  %2233 = vmatpush.msra.mxu0 0.0
  %2234 = vmatpush.msra.mxu0 0.0
  %2235 = vmatpush.msra.mxu0 0.0
  %2236 = vmatpush.msra.mxu0 0.0
  %2237 = vmatpush.msra.mxu0 0.0
  %2238 = vmatpush.msra.mxu0 0.0
  %2239 = vmatpush.msra.mxu0 0.0
  %2240 = vmatpush.msra.mxu0 0.0
  %2241 = vmatpush.msra.mxu0 0.0
  %2242 = vmatpush.msra.mxu0 0.0
  %2243 = vmatpush.msra.mxu0 0.0
  %2244 = vmatpush.msra.mxu0 0.0
  %2245 = vmatpush.msra.mxu0 0.0
  %2246 = vmatpush.msra.mxu0 0.0
  %2247 = vmatpush.msra.mxu0 0.0
  %2248 = vmatpush.msra.mxu0 %v2222
  %2249 = vmatmul.f32.gmra.mxu0 %v2231
  %v2250 = vpop.f32.mrf.mxu0
  %v2251 = vadd.f32 0.0, %v2250
  %2252 = vdwg.mxu0
  %2253 = vmatpush.msra.mxu0 0.0
  %2254 = vmatpush.msra.mxu0 0.0
  %2255 = vmatpush.msra.mxu0 0.0
  %2256 = vmatpush.msra.mxu0 0.0
  %2257 = vmatpush.msra.mxu0 0.0
  %2258 = vmatpush.msra.mxu0 0.0
  %2259 = vmatpush.msra.mxu0 0.0
  %2260 = vmatpush.msra.mxu0 0.0
  %2261 = vmatpush.msra.mxu0 0.0
  %2262 = vmatpush.msra.mxu0 0.0
  %2263 = vmatpush.msra.mxu0 0.0
  %2264 = vmatpush.msra.mxu0 0.0
  %2265 = vmatpush.msra.mxu0 0.0
  %2266 = vmatpush.msra.mxu0 0.0
  %2267 = vmatpush.msra.mxu0 0.0
  %2268 = vmatpush.msra.mxu0 %v2223
  %2269 = vmatmul.f32.gmra.mxu0 %v2231
  %v2270 = vpop.f32.mrf.mxu0
  %v2271 = vadd.f32 0.0, %v2270
  %2272 = vdwg.mxu0
  %2273 = vmatpush.msra.mxu0 0.0
  %2274 = vmatpush.msra.mxu0 0.0
  %2275 = vmatpush.msra.mxu0 0.0
  %2276 = vmatpush.msra.mxu0 0.0
  %2277 = vmatpush.msra.mxu0 0.0
  %2278 = vmatpush.msra.mxu0 0.0
  %2279 = vmatpush.msra.mxu0 0.0
  %2280 = vmatpush.msra.mxu0 0.0
  %2281 = vmatpush.msra.mxu0 0.0
  %2282 = vmatpush.msra.mxu0 0.0
  %2283 = vmatpush.msra.mxu0 0.0
  %2284 = vmatpush.msra.mxu0 0.0
  %2285 = vmatpush.msra.mxu0 0.0
  %2286 = vmatpush.msra.mxu0 0.0
  %2287 = vmatpush.msra.mxu0 0.0
  %2288 = vmatpush.msra.mxu0 %v2224
  %2289 = vmatmul.f32.gmra.mxu0 %v2231
  %v2290 = vpop.f32.mrf.mxu0
  %v2291 = vadd.f32 0.0, %v2290
  %2292 = vdwg.mxu0
  %2293 = vmatpush.msra.mxu0 0.0
  %2294 = vmatpush.msra.mxu0 0.0
  %2295 = vmatpush.msra.mxu0 0.0
  %2296 = vmatpush.msra.mxu0 0.0
  %2297 = vmatpush.msra.mxu0 0.0
  %2298 = vmatpush.msra.mxu0 0.0
  %2299 = vmatpush.msra.mxu0 0.0
  %2300 = vmatpush.msra.mxu0 0.0
  %2301 = vmatpush.msra.mxu0 0.0
  %2302 = vmatpush.msra.mxu0 0.0
  %2303 = vmatpush.msra.mxu0 0.0
  %2304 = vmatpush.msra.mxu0 0.0
  %2305 = vmatpush.msra.mxu0 0.0
  %2306 = vmatpush.msra.mxu0 0.0
  %2307 = vmatpush.msra.mxu0 0.0
  %2308 = vmatpush.msra.mxu0 %v2225
  %2309 = vmatmul.f32.gmra.mxu0 %v2231
  %v2310 = vpop.f32.mrf.mxu0
  %v2311 = vadd.f32 0.0, %v2310
  %2312 = vdwg.mxu0
  %v2313 = vsel %vm1346, 1, 0
  %v2314 = vsel %vm1347, 1, 0
  %v2315 = vsel %vm1348, 1, 0
  %v2316 = vsel %vm1349, 1, 0
  %vm2317 = vcmp.eq.s32.totalorder %v2313, 1
  %vm2318 = vcmp.eq.s32.totalorder %v2314, 1
  %vm2319 = vcmp.eq.s32.totalorder %v2315, 1
  %vm2320 = vcmp.eq.s32.totalorder %v2316, 1
  %v2321 = vsel %vm2317, %v2251, 0.0
  %v2322 = vsel %vm2318, %v2271, 0.0
  %v2323 = vsel %vm2319, %v2291, 0.0
  %v2324 = vsel %vm2320, %v2311, 0.0
  %v2325 = vadd.f32 %v2207, %v2321
  %v2326 = vadd.f32 %v2208, %v2322
  %v2327 = vadd.f32 %v2209, %v2323
  %v2328 = vadd.f32 %v2210, %v2324
  %v2329 = vld [vmem:[%s1 + $0x98] sm:$0xff]
  %2330 = vrot.lane.b32.xlu0 %v2080, 52
  %v2331 = vpop.permute.xlu0 %2330
  %2332 = vrot.lane.b32.xlu0 %v2081, 52
  %v2333 = vpop.permute.xlu0 %2332
  %2334 = vrot.lane.b32.xlu0 %v2082, 52
  %v2335 = vpop.permute.xlu0 %2334
  %2336 = vrot.lane.b32.xlu0 %v2083, 52
  %v2337 = vpop.permute.xlu0 %2336
  %2338 = vrot.lane.b32.xlu0 %v2084, 52
  %v2339 = vpop.permute.xlu0 %2338
  %v2340 = vsel %vm1621, %v2331, %v2333
  %v2341 = vsel %vm1621, %v2333, %v2335
  %v2342 = vsel %vm1621, %v2335, %v2337
  %v2343 = vsel %vm1621, %v2337, %v2339
  %v2349 = vsel %vm80, %v2329, 0
  %2351 = vmatpush.msra.mxu0 0.0
  %2352 = vmatpush.msra.mxu0 0.0
  %2353 = vmatpush.msra.mxu0 0.0
  %2354 = vmatpush.msra.mxu0 0.0
  %2355 = vmatpush.msra.mxu0 0.0
  %2356 = vmatpush.msra.mxu0 0.0
  %2357 = vmatpush.msra.mxu0 0.0
  %2358 = vmatpush.msra.mxu0 0.0
  %2359 = vmatpush.msra.mxu0 0.0
  %2360 = vmatpush.msra.mxu0 0.0
  %2361 = vmatpush.msra.mxu0 0.0
  %2362 = vmatpush.msra.mxu0 0.0
  %2363 = vmatpush.msra.mxu0 0.0
  %2364 = vmatpush.msra.mxu0 0.0
  %2365 = vmatpush.msra.mxu0 0.0
  %2366 = vmatpush.msra.mxu0 %v2340
  %2367 = vmatmul.f32.gmra.mxu0 %v2349
  %v2368 = vpop.f32.mrf.mxu0
  %v2369 = vadd.f32 0.0, %v2368
  %2370 = vdwg.mxu0
  %2371 = vmatpush.msra.mxu0 0.0
  %2372 = vmatpush.msra.mxu0 0.0
  %2373 = vmatpush.msra.mxu0 0.0
  %2374 = vmatpush.msra.mxu0 0.0
  %2375 = vmatpush.msra.mxu0 0.0
  %2376 = vmatpush.msra.mxu0 0.0
  %2377 = vmatpush.msra.mxu0 0.0
  %2378 = vmatpush.msra.mxu0 0.0
  %2379 = vmatpush.msra.mxu0 0.0
  %2380 = vmatpush.msra.mxu0 0.0
  %2381 = vmatpush.msra.mxu0 0.0
  %2382 = vmatpush.msra.mxu0 0.0
  %2383 = vmatpush.msra.mxu0 0.0
  %2384 = vmatpush.msra.mxu0 0.0
  %2385 = vmatpush.msra.mxu0 0.0
  %2386 = vmatpush.msra.mxu0 %v2341
  %2387 = vmatmul.f32.gmra.mxu0 %v2349
  %v2388 = vpop.f32.mrf.mxu0
  %v2389 = vadd.f32 0.0, %v2388
  %2390 = vdwg.mxu0
  %2391 = vmatpush.msra.mxu0 0.0
  %2392 = vmatpush.msra.mxu0 0.0
  %2393 = vmatpush.msra.mxu0 0.0
  %2394 = vmatpush.msra.mxu0 0.0
  %2395 = vmatpush.msra.mxu0 0.0
  %2396 = vmatpush.msra.mxu0 0.0
  %2397 = vmatpush.msra.mxu0 0.0
  %2398 = vmatpush.msra.mxu0 0.0
  %2399 = vmatpush.msra.mxu0 0.0
  %2400 = vmatpush.msra.mxu0 0.0
  %2401 = vmatpush.msra.mxu0 0.0
  %2402 = vmatpush.msra.mxu0 0.0
  %2403 = vmatpush.msra.mxu0 0.0
  %2404 = vmatpush.msra.mxu0 0.0
  %2405 = vmatpush.msra.mxu0 0.0
  %2406 = vmatpush.msra.mxu0 %v2342
  %2407 = vmatmul.f32.gmra.mxu0 %v2349
  %v2408 = vpop.f32.mrf.mxu0
  %v2409 = vadd.f32 0.0, %v2408
  %2410 = vdwg.mxu0
  %2411 = vmatpush.msra.mxu0 0.0
  %2412 = vmatpush.msra.mxu0 0.0
  %2413 = vmatpush.msra.mxu0 0.0
  %2414 = vmatpush.msra.mxu0 0.0
  %2415 = vmatpush.msra.mxu0 0.0
  %2416 = vmatpush.msra.mxu0 0.0
  %2417 = vmatpush.msra.mxu0 0.0
  %2418 = vmatpush.msra.mxu0 0.0
  %2419 = vmatpush.msra.mxu0 0.0
  %2420 = vmatpush.msra.mxu0 0.0
  %2421 = vmatpush.msra.mxu0 0.0
  %2422 = vmatpush.msra.mxu0 0.0
  %2423 = vmatpush.msra.mxu0 0.0
  %2424 = vmatpush.msra.mxu0 0.0
  %2425 = vmatpush.msra.mxu0 0.0
  %2426 = vmatpush.msra.mxu0 %v2343
  %2427 = vmatmul.f32.gmra.mxu0 %v2349
  %v2428 = vpop.f32.mrf.mxu0
  %v2429 = vadd.f32 0.0, %v2428
  %2430 = vdwg.mxu0
  %vm2431 = vmand %vm1346, %vm1354
  %vm2432 = vmand %vm1347, %vm1355
  %vm2433 = vmand %vm1348, %vm1356
  %vm2434 = vmand %vm1349, %vm1357
  %v2435 = vsel %vm2431, 1, 0
  %v2436 = vsel %vm2432, 1, 0
  %v2437 = vsel %vm2433, 1, 0
  %v2438 = vsel %vm2434, 1, 0
  %vm2439 = vcmp.eq.s32.totalorder %v2435, 1
  %vm2440 = vcmp.eq.s32.totalorder %v2436, 1
  %vm2441 = vcmp.eq.s32.totalorder %v2437, 1
  %vm2442 = vcmp.eq.s32.totalorder %v2438, 1
  %v2443 = vsel %vm2439, %v2369, 0.0
  %v2444 = vsel %vm2440, %v2389, 0.0
  %v2445 = vsel %vm2441, %v2409, 0.0
  %v2446 = vsel %vm2442, %v2429, 0.0
  %v2447 = vadd.f32 %v2325, %v2443
  %v2448 = vadd.f32 %v2326, %v2444
  %v2449 = vadd.f32 %v2327, %v2445
  %v2450 = vadd.f32 %v2328, %v2446
  %v2451 = vld [vmem:[%s3] sm:$0xff]
  %2453 = vset.pattern.permute.xlu0 3
  %2454 = vperm.xlu0 %2453, %v2451
  %v2455 = vpop.permute.xlu0 %2454
  %v2457 = vadd.f32 %v2447, %v2455
  %v2458 = vadd.f32 %v2448, %v2455
  %v2459 = vadd.f32 %v2449, %v2455
  %v2460 = vadd.f32 %v2450, %v2455
  %v2461 = vmax.f32 %v2457, 0.0
  %v2462 = vmax.f32 %v2458, 0.0
  %v2463 = vmax.f32 %v2459, 0.0
  %v2464 = vmax.f32 %v2460, 0.0
  %2465 = vst [vmem:[#allocation3 + $0x98] sm:$0xff] %v2461
  %2466 = vst [vmem:[#allocation3 + $0xa0] sm:$0xff] %v2462
  %2467 = vst [vmem:[#allocation3 + $0xa8] sm:$0xff] %v2463
  %2468 = vst [vmem:[#allocation3 + $0xb0] sm:$0xff] %v2464
  %vm2469 = vcmp.ge.s32.totalorder %v50, 1
  %vm2470 = vcmp.ge.s32.totalorder %v51, 1
  %vm2471 = vcmp.ge.s32.totalorder %v52, 1
  %vm2472 = vcmp.ge.s32.totalorder %v53, 1
  %vm2473 = vcmp.lt.s32.totalorder %v50, 15
  %vm2474 = vcmp.lt.s32.totalorder %v51, 15
  %vm2475 = vcmp.lt.s32.totalorder %v52, 15
  %vm2476 = vcmp.lt.s32.totalorder %v53, 15
  %vm2477 = vcmp.ge.s32.totalorder %v42, 1
  %vm2478 = vcmp.ge.s32.totalorder %v43, 1
  %vm2479 = vcmp.ge.s32.totalorder %v44, 1
  %vm2480 = vcmp.ge.s32.totalorder %v45, 1
  %vm2481 = vcmp.lt.s32.totalorder %v42, 15
  %vm2482 = vcmp.lt.s32.totalorder %v43, 15
  %vm2483 = vcmp.lt.s32.totalorder %v44, 15
  %vm2484 = vcmp.lt.s32.totalorder %v45, 15
  %v2485 = vld [vmem:[%s2] sm:$0xff]
  %v2486 = vld [vmem:[#allocation3] sm:$0xff]
  %v2487 = vld [vmem:[#allocation3 + $0x8] sm:$0xff]
  %v2488 = vld [vmem:[#allocation3 + $0x10] sm:$0xff]
  %v2489 = vld [vmem:[#allocation3 + $0x18] sm:$0xff]
  %v2490 = vld [vmem:[#allocation3 + $0x20] sm:$0xff]
  %v2491 = vld [vmem:[#allocation3 + $0x30] sm:$0xff]
  %v2492 = vld [vmem:[#allocation3 + $0x38] sm:$0xff]
  %v2493 = vld [vmem:[#allocation3 + $0x40] sm:$0xff]
  %v2494 = vld [vmem:[#allocation3 + $0x48] sm:$0xff]
  %v2495 = vld [vmem:[#allocation3 + $0x50] sm:$0xff]
  %v2496 = vld [vmem:[#allocation3 + $0x60] sm:$0xff]
  %v2497 = vld [vmem:[#allocation3 + $0x68] sm:$0xff]
  %v2498 = vld [vmem:[#allocation3 + $0x70] sm:$0xff]
  %v2499 = vld [vmem:[#allocation3 + $0x78] sm:$0xff]
  %v2500 = vld [vmem:[#allocation3 + $0x80] sm:$0xff]
  %v2501 = vld [vmem:[#allocation3 + $0x90] sm:$0xff]
  %v2502 = vld [vmem:[#allocation3 + $0x98] sm:$0xff]
  %v2503 = vld [vmem:[#allocation3 + $0xa0] sm:$0xff]
  %v2504 = vld [vmem:[#allocation3 + $0xa8] sm:$0xff]
  %v2505 = vld [vmem:[#allocation3 + $0xb0] sm:$0xff]
  %2526 = vrot.lane.b32.xlu0 %v2486, 17
  %v2527 = vpop.permute.xlu0 %2526
  %2528 = vrot.lane.b32.xlu0 %v2487, 17
  %v2529 = vpop.permute.xlu0 %2528
  %2530 = vrot.lane.b32.xlu0 %v2488, 17
  %v2531 = vpop.permute.xlu0 %2530
  %2532 = vrot.lane.b32.xlu0 %v2489, 17
  %v2533 = vpop.permute.xlu0 %2532
  %2534 = vrot.lane.b32.xlu0 %v2490, 17
  %v2535 = vpop.permute.xlu0 %2534
  %2536 = vrot.lane.b32.xlu0 %v2491, 17
  %v2537 = vpop.permute.xlu0 %2536
  %2538 = vrot.lane.b32.xlu0 %v2492, 17
  %v2539 = vpop.permute.xlu0 %2538
  %2540 = vrot.lane.b32.xlu0 %v2493, 17
  %v2541 = vpop.permute.xlu0 %2540
  %2542 = vrot.lane.b32.xlu0 %v2494, 17
  %v2543 = vpop.permute.xlu0 %2542
  %2544 = vrot.lane.b32.xlu0 %v2495, 17
  %v2545 = vpop.permute.xlu0 %2544
  %2546 = vrot.lane.b32.xlu0 %v2496, 17
  %v2547 = vpop.permute.xlu0 %2546
  %2548 = vrot.lane.b32.xlu0 %v2497, 17
  %v2549 = vpop.permute.xlu0 %2548
  %2550 = vrot.lane.b32.xlu0 %v2498, 17
  %v2551 = vpop.permute.xlu0 %2550
  %2552 = vrot.lane.b32.xlu0 %v2499, 17
  %v2553 = vpop.permute.xlu0 %2552
  %2554 = vrot.lane.b32.xlu0 %v2500, 17
  %v2555 = vpop.permute.xlu0 %2554
  %2556 = vrot.lane.b32.xlu0 %v2501, 17
  %v2557 = vpop.permute.xlu0 %2556
  %2558 = vrot.lane.b32.xlu0 %v2502, 17
  %v2559 = vpop.permute.xlu0 %2558
  %2560 = vrot.lane.b32.xlu0 %v2503, 17
  %v2561 = vpop.permute.xlu0 %2560
  %2562 = vrot.lane.b32.xlu0 %v2504, 17
  %v2563 = vpop.permute.xlu0 %2562
  %2564 = vrot.lane.b32.xlu0 %v2505, 17
  %v2565 = vpop.permute.xlu0 %2564
  %vm2566 = vcmask 138240
  %v2567 = vsel %vm2566, %v2527, %v2529
  %v2568 = vsel %vm2566, %v2529, %v2531
  %v2569 = vsel %vm2566, %v2531, %v2533
  %v2570 = vsel %vm2566, %v2533, %v2535
  %v2571 = vsel %vm2566, %v2537, %v2539
  %v2572 = vsel %vm2566, %v2539, %v2541
  %v2573 = vsel %vm2566, %v2541, %v2543
  %v2574 = vsel %vm2566, %v2543, %v2545
  %v2575 = vsel %vm2566, %v2547, %v2549
  %v2576 = vsel %vm2566, %v2549, %v2551
  %v2577 = vsel %vm2566, %v2551, %v2553
  %v2578 = vsel %vm2566, %v2553, %v2555
  %v2579 = vsel %vm2566, %v2557, %v2559
  %v2580 = vsel %vm2566, %v2559, %v2561
  %v2581 = vsel %vm2566, %v2561, %v2563
  %v2582 = vsel %vm2566, %v2563, %v2565
  %v2600 = vsel %vm1093, %v2485, 0
  %2602 = vmatpush.msra.mxu0 0.0
  %2603 = vmatpush.msra.mxu0 0.0
  %2604 = vmatpush.msra.mxu0 0.0
  %2605 = vmatpush.msra.mxu0 0.0
  %2606 = vmatpush.msra.mxu0 0.0
  %2607 = vmatpush.msra.mxu0 0.0
  %2608 = vmatpush.msra.mxu0 0.0
  %2609 = vmatpush.msra.mxu0 0.0
  %2610 = vmatpush.msra.mxu0 0.0
  %2611 = vmatpush.msra.mxu0 0.0
  %2612 = vmatpush.msra.mxu0 0.0
  %2613 = vmatpush.msra.mxu0 0.0
  %2614 = vmatpush.msra.mxu0 %v2579
  %2615 = vmatpush.msra.mxu0 %v2575
  %2616 = vmatpush.msra.mxu0 %v2571
  %2617 = vmatpush.msra.mxu0 %v2567
  %2618 = vmatmul.f32.gmra.mxu0 %v2600
  %v2619 = vpop.f32.mrf.mxu0
  %v2620 = vadd.f32 0.0, %v2619
  %2621 = vdwg.mxu0
  %2622 = vmatpush.msra.mxu0 0.0
  %2623 = vmatpush.msra.mxu0 0.0
  %2624 = vmatpush.msra.mxu0 0.0
  %2625 = vmatpush.msra.mxu0 0.0
  %2626 = vmatpush.msra.mxu0 0.0
  %2627 = vmatpush.msra.mxu0 0.0
  %2628 = vmatpush.msra.mxu0 0.0
  %2629 = vmatpush.msra.mxu0 0.0
  %2630 = vmatpush.msra.mxu0 0.0
  %2631 = vmatpush.msra.mxu0 0.0
  %2632 = vmatpush.msra.mxu0 0.0
  %2633 = vmatpush.msra.mxu0 0.0
  %2634 = vmatpush.msra.mxu0 %v2580
  %2635 = vmatpush.msra.mxu0 %v2576
  %2636 = vmatpush.msra.mxu0 %v2572
  %2637 = vmatpush.msra.mxu0 %v2568
  %2638 = vmatmul.f32.gmra.mxu0 %v2600
  %v2639 = vpop.f32.mrf.mxu0
  %v2640 = vadd.f32 0.0, %v2639
  %2641 = vdwg.mxu0
  %2642 = vmatpush.msra.mxu0 0.0
  %2643 = vmatpush.msra.mxu0 0.0
  %2644 = vmatpush.msra.mxu0 0.0
  %2645 = vmatpush.msra.mxu0 0.0
  %2646 = vmatpush.msra.mxu0 0.0
  %2647 = vmatpush.msra.mxu0 0.0
  %2648 = vmatpush.msra.mxu0 0.0
  %2649 = vmatpush.msra.mxu0 0.0
  %2650 = vmatpush.msra.mxu0 0.0
  %2651 = vmatpush.msra.mxu0 0.0
  %2652 = vmatpush.msra.mxu0 0.0
  %2653 = vmatpush.msra.mxu0 0.0
  %2654 = vmatpush.msra.mxu0 %v2581
  %2655 = vmatpush.msra.mxu0 %v2577
  %2656 = vmatpush.msra.mxu0 %v2573
  %2657 = vmatpush.msra.mxu0 %v2569
  %2658 = vmatmul.f32.gmra.mxu0 %v2600
  %v2659 = vpop.f32.mrf.mxu0
  %v2660 = vadd.f32 0.0, %v2659
  %2661 = vdwg.mxu0
  %2662 = vmatpush.msra.mxu0 0.0
  %2663 = vmatpush.msra.mxu0 0.0
  %2664 = vmatpush.msra.mxu0 0.0
  %2665 = vmatpush.msra.mxu0 0.0
  %2666 = vmatpush.msra.mxu0 0.0
  %2667 = vmatpush.msra.mxu0 0.0
  %2668 = vmatpush.msra.mxu0 0.0
  %2669 = vmatpush.msra.mxu0 0.0
  %2670 = vmatpush.msra.mxu0 0.0
  %2671 = vmatpush.msra.mxu0 0.0
  %2672 = vmatpush.msra.mxu0 0.0
  %2673 = vmatpush.msra.mxu0 0.0
  %2674 = vmatpush.msra.mxu0 %v2582
  %2675 = vmatpush.msra.mxu0 %v2578
  %2676 = vmatpush.msra.mxu0 %v2574
  %2677 = vmatpush.msra.mxu0 %v2570
  %2678 = vmatmul.f32.gmra.mxu0 %v2600
  %v2679 = vpop.f32.mrf.mxu0
  %v2680 = vadd.f32 0.0, %v2679
  %2681 = vdwg.mxu0
  %vm2682 = vmand %vm2469, %vm2477
  %vm2683 = vmand %vm2470, %vm2478
  %vm2684 = vmand %vm2471, %vm2479
  %vm2685 = vmand %vm2472, %vm2480
  %v2686 = vsel %vm2682, 1, 0
  %v2687 = vsel %vm2683, 1, 0
  %v2688 = vsel %vm2684, 1, 0
  %v2689 = vsel %vm2685, 1, 0
  %vm2690 = vcmp.eq.s32.totalorder %v2686, 1
  %vm2691 = vcmp.eq.s32.totalorder %v2687, 1
  %vm2692 = vcmp.eq.s32.totalorder %v2688, 1
  %vm2693 = vcmp.eq.s32.totalorder %v2689, 1
  %v2694 = vsel %vm2690, %v2620, 0.0
  %v2695 = vsel %vm2691, %v2640, 0.0
  %v2696 = vsel %vm2692, %v2660, 0.0
  %v2697 = vsel %vm2693, %v2680, 0.0
  %v2698 = vadd.f32 %v2694, 0.0
  %v2699 = vadd.f32 %v2695, 0.0
  %v2700 = vadd.f32 %v2696, 0.0
  %v2701 = vadd.f32 %v2697, 0.0
  %v2702 = vld [vmem:[%s2 + $0x8] sm:$0xff]
  %2703 = vrot.lane.b32.xlu0 %v2486, 16
  %v2704 = vpop.permute.xlu0 %2703
  %2705 = vrot.lane.b32.xlu0 %v2487, 16
  %v2706 = vpop.permute.xlu0 %2705
  %2707 = vrot.lane.b32.xlu0 %v2488, 16
  %v2708 = vpop.permute.xlu0 %2707
  %2709 = vrot.lane.b32.xlu0 %v2489, 16
  %v2710 = vpop.permute.xlu0 %2709
  %2711 = vrot.lane.b32.xlu0 %v2490, 16
  %v2712 = vpop.permute.xlu0 %2711
  %2713 = vrot.lane.b32.xlu0 %v2491, 16
  %v2714 = vpop.permute.xlu0 %2713
  %2715 = vrot.lane.b32.xlu0 %v2492, 16
  %v2716 = vpop.permute.xlu0 %2715
  %2717 = vrot.lane.b32.xlu0 %v2493, 16
  %v2718 = vpop.permute.xlu0 %2717
  %2719 = vrot.lane.b32.xlu0 %v2494, 16
  %v2720 = vpop.permute.xlu0 %2719
  %2721 = vrot.lane.b32.xlu0 %v2495, 16
  %v2722 = vpop.permute.xlu0 %2721
  %2723 = vrot.lane.b32.xlu0 %v2496, 16
  %v2724 = vpop.permute.xlu0 %2723
  %2725 = vrot.lane.b32.xlu0 %v2497, 16
  %v2726 = vpop.permute.xlu0 %2725
  %2727 = vrot.lane.b32.xlu0 %v2498, 16
  %v2728 = vpop.permute.xlu0 %2727
  %2729 = vrot.lane.b32.xlu0 %v2499, 16
  %v2730 = vpop.permute.xlu0 %2729
  %2731 = vrot.lane.b32.xlu0 %v2500, 16
  %v2732 = vpop.permute.xlu0 %2731
  %2733 = vrot.lane.b32.xlu0 %v2501, 16
  %v2734 = vpop.permute.xlu0 %2733
  %2735 = vrot.lane.b32.xlu0 %v2502, 16
  %v2736 = vpop.permute.xlu0 %2735
  %2737 = vrot.lane.b32.xlu0 %v2503, 16
  %v2738 = vpop.permute.xlu0 %2737
  %2739 = vrot.lane.b32.xlu0 %v2504, 16
  %v2740 = vpop.permute.xlu0 %2739
  %2741 = vrot.lane.b32.xlu0 %v2505, 16
  %v2742 = vpop.permute.xlu0 %2741
  %vm2743 = vcmask 130048
  %v2744 = vsel %vm2743, %v2704, %v2706
  %v2745 = vsel %vm2743, %v2706, %v2708
  %v2746 = vsel %vm2743, %v2708, %v2710
  %v2747 = vsel %vm2743, %v2710, %v2712
  %v2748 = vsel %vm2743, %v2714, %v2716
  %v2749 = vsel %vm2743, %v2716, %v2718
  %v2750 = vsel %vm2743, %v2718, %v2720
  %v2751 = vsel %vm2743, %v2720, %v2722
  %v2752 = vsel %vm2743, %v2724, %v2726
  %v2753 = vsel %vm2743, %v2726, %v2728
  %v2754 = vsel %vm2743, %v2728, %v2730
  %v2755 = vsel %vm2743, %v2730, %v2732
  %v2756 = vsel %vm2743, %v2734, %v2736
  %v2757 = vsel %vm2743, %v2736, %v2738
  %v2758 = vsel %vm2743, %v2738, %v2740
  %v2759 = vsel %vm2743, %v2740, %v2742
  %v2777 = vsel %vm1093, %v2702, 0
  %2779 = vmatpush.msra.mxu0 0.0
  %2780 = vmatpush.msra.mxu0 0.0
  %2781 = vmatpush.msra.mxu0 0.0
  %2782 = vmatpush.msra.mxu0 0.0
  %2783 = vmatpush.msra.mxu0 0.0
  %2784 = vmatpush.msra.mxu0 0.0
  %2785 = vmatpush.msra.mxu0 0.0
  %2786 = vmatpush.msra.mxu0 0.0
  %2787 = vmatpush.msra.mxu0 0.0
  %2788 = vmatpush.msra.mxu0 0.0
  %2789 = vmatpush.msra.mxu0 0.0
  %2790 = vmatpush.msra.mxu0 0.0
  %2791 = vmatpush.msra.mxu0 %v2756
  %2792 = vmatpush.msra.mxu0 %v2752
  %2793 = vmatpush.msra.mxu0 %v2748
  %2794 = vmatpush.msra.mxu0 %v2744
  %2795 = vmatmul.f32.gmra.mxu0 %v2777
  %v2796 = vpop.f32.mrf.mxu0
  %v2797 = vadd.f32 0.0, %v2796
  %2798 = vdwg.mxu0
  %2799 = vmatpush.msra.mxu0 0.0
  %2800 = vmatpush.msra.mxu0 0.0
  %2801 = vmatpush.msra.mxu0 0.0
  %2802 = vmatpush.msra.mxu0 0.0
  %2803 = vmatpush.msra.mxu0 0.0
  %2804 = vmatpush.msra.mxu0 0.0
  %2805 = vmatpush.msra.mxu0 0.0
  %2806 = vmatpush.msra.mxu0 0.0
  %2807 = vmatpush.msra.mxu0 0.0
  %2808 = vmatpush.msra.mxu0 0.0
  %2809 = vmatpush.msra.mxu0 0.0
  %2810 = vmatpush.msra.mxu0 0.0
  %2811 = vmatpush.msra.mxu0 %v2757
  %2812 = vmatpush.msra.mxu0 %v2753
  %2813 = vmatpush.msra.mxu0 %v2749
  %2814 = vmatpush.msra.mxu0 %v2745
  %2815 = vmatmul.f32.gmra.mxu0 %v2777
  %v2816 = vpop.f32.mrf.mxu0
  %v2817 = vadd.f32 0.0, %v2816
  %2818 = vdwg.mxu0
  %2819 = vmatpush.msra.mxu0 0.0
  %2820 = vmatpush.msra.mxu0 0.0
  %2821 = vmatpush.msra.mxu0 0.0
  %2822 = vmatpush.msra.mxu0 0.0
  %2823 = vmatpush.msra.mxu0 0.0
  %2824 = vmatpush.msra.mxu0 0.0
  %2825 = vmatpush.msra.mxu0 0.0
  %2826 = vmatpush.msra.mxu0 0.0
  %2827 = vmatpush.msra.mxu0 0.0
  %2828 = vmatpush.msra.mxu0 0.0
  %2829 = vmatpush.msra.mxu0 0.0
  %2830 = vmatpush.msra.mxu0 0.0
  %2831 = vmatpush.msra.mxu0 %v2758
  %2832 = vmatpush.msra.mxu0 %v2754
  %2833 = vmatpush.msra.mxu0 %v2750
  %2834 = vmatpush.msra.mxu0 %v2746
  %2835 = vmatmul.f32.gmra.mxu0 %v2777
  %v2836 = vpop.f32.mrf.mxu0
  %v2837 = vadd.f32 0.0, %v2836
  %2838 = vdwg.mxu0
  %2839 = vmatpush.msra.mxu0 0.0
  %2840 = vmatpush.msra.mxu0 0.0
  %2841 = vmatpush.msra.mxu0 0.0
  %2842 = vmatpush.msra.mxu0 0.0
  %2843 = vmatpush.msra.mxu0 0.0
  %2844 = vmatpush.msra.mxu0 0.0
  %2845 = vmatpush.msra.mxu0 0.0
  %2846 = vmatpush.msra.mxu0 0.0
  %2847 = vmatpush.msra.mxu0 0.0
  %2848 = vmatpush.msra.mxu0 0.0
  %2849 = vmatpush.msra.mxu0 0.0
  %2850 = vmatpush.msra.mxu0 0.0
  %2851 = vmatpush.msra.mxu0 %v2759
  %2852 = vmatpush.msra.mxu0 %v2755
  %2853 = vmatpush.msra.mxu0 %v2751
  %2854 = vmatpush.msra.mxu0 %v2747
  %2855 = vmatmul.f32.gmra.mxu0 %v2777
  %v2856 = vpop.f32.mrf.mxu0
  %v2857 = vadd.f32 0.0, %v2856
  %2858 = vdwg.mxu0
  %v2859 = vsel %vm2469, 1, 0
  %v2860 = vsel %vm2470, 1, 0
  %v2861 = vsel %vm2471, 1, 0
  %v2862 = vsel %vm2472, 1, 0
  %vm2863 = vcmp.eq.s32.totalorder %v2859, 1
  %vm2864 = vcmp.eq.s32.totalorder %v2860, 1
  %vm2865 = vcmp.eq.s32.totalorder %v2861, 1
  %vm2866 = vcmp.eq.s32.totalorder %v2862, 1
  %v2867 = vsel %vm2863, %v2797, 0.0
  %v2868 = vsel %vm2864, %v2817, 0.0
  %v2869 = vsel %vm2865, %v2837, 0.0
  %v2870 = vsel %vm2866, %v2857, 0.0
  %v2871 = vadd.f32 %v2698, %v2867
  %v2872 = vadd.f32 %v2699, %v2868
  %v2873 = vadd.f32 %v2700, %v2869
  %v2874 = vadd.f32 %v2701, %v2870
  %v2875 = vld [vmem:[%s2 + $0x10] sm:$0xff]
  %2876 = vrot.lane.b32.xlu0 %v2486, 15
  %v2877 = vpop.permute.xlu0 %2876
  %2878 = vrot.lane.b32.xlu0 %v2487, 15
  %v2879 = vpop.permute.xlu0 %2878
  %2880 = vrot.lane.b32.xlu0 %v2488, 15
  %v2881 = vpop.permute.xlu0 %2880
  %2882 = vrot.lane.b32.xlu0 %v2489, 15
  %v2883 = vpop.permute.xlu0 %2882
  %2884 = vrot.lane.b32.xlu0 %v2490, 15
  %v2885 = vpop.permute.xlu0 %2884
  %2886 = vrot.lane.b32.xlu0 %v2491, 15
  %v2887 = vpop.permute.xlu0 %2886
  %2888 = vrot.lane.b32.xlu0 %v2492, 15
  %v2889 = vpop.permute.xlu0 %2888
  %2890 = vrot.lane.b32.xlu0 %v2493, 15
  %v2891 = vpop.permute.xlu0 %2890
  %2892 = vrot.lane.b32.xlu0 %v2494, 15
  %v2893 = vpop.permute.xlu0 %2892
  %2894 = vrot.lane.b32.xlu0 %v2495, 15
  %v2895 = vpop.permute.xlu0 %2894
  %2896 = vrot.lane.b32.xlu0 %v2496, 15
  %v2897 = vpop.permute.xlu0 %2896
  %2898 = vrot.lane.b32.xlu0 %v2497, 15
  %v2899 = vpop.permute.xlu0 %2898
  %2900 = vrot.lane.b32.xlu0 %v2498, 15
  %v2901 = vpop.permute.xlu0 %2900
  %2902 = vrot.lane.b32.xlu0 %v2499, 15
  %v2903 = vpop.permute.xlu0 %2902
  %2904 = vrot.lane.b32.xlu0 %v2500, 15
  %v2905 = vpop.permute.xlu0 %2904
  %2906 = vrot.lane.b32.xlu0 %v2501, 15
  %v2907 = vpop.permute.xlu0 %2906
  %2908 = vrot.lane.b32.xlu0 %v2502, 15
  %v2909 = vpop.permute.xlu0 %2908
  %2910 = vrot.lane.b32.xlu0 %v2503, 15
  %v2911 = vpop.permute.xlu0 %2910
  %2912 = vrot.lane.b32.xlu0 %v2504, 15
  %v2913 = vpop.permute.xlu0 %2912
  %2914 = vrot.lane.b32.xlu0 %v2505, 15
  %v2915 = vpop.permute.xlu0 %2914
  %vm2916 = vcmask 121856
  %v2917 = vsel %vm2916, %v2877, %v2879
  %v2918 = vsel %vm2916, %v2879, %v2881
  %v2919 = vsel %vm2916, %v2881, %v2883
  %v2920 = vsel %vm2916, %v2883, %v2885
  %v2921 = vsel %vm2916, %v2887, %v2889
  %v2922 = vsel %vm2916, %v2889, %v2891
  %v2923 = vsel %vm2916, %v2891, %v2893
  %v2924 = vsel %vm2916, %v2893, %v2895
  %v2925 = vsel %vm2916, %v2897, %v2899
  %v2926 = vsel %vm2916, %v2899, %v2901
  %v2927 = vsel %vm2916, %v2901, %v2903
  %v2928 = vsel %vm2916, %v2903, %v2905
  %v2929 = vsel %vm2916, %v2907, %v2909
  %v2930 = vsel %vm2916, %v2909, %v2911
  %v2931 = vsel %vm2916, %v2911, %v2913
  %v2932 = vsel %vm2916, %v2913, %v2915
  %v2950 = vsel %vm1093, %v2875, 0
  %2952 = vmatpush.msra.mxu0 0.0
  %2953 = vmatpush.msra.mxu0 0.0
  %2954 = vmatpush.msra.mxu0 0.0
  %2955 = vmatpush.msra.mxu0 0.0
  %2956 = vmatpush.msra.mxu0 0.0
  %2957 = vmatpush.msra.mxu0 0.0
  %2958 = vmatpush.msra.mxu0 0.0
  %2959 = vmatpush.msra.mxu0 0.0
  %2960 = vmatpush.msra.mxu0 0.0
  %2961 = vmatpush.msra.mxu0 0.0
  %2962 = vmatpush.msra.mxu0 0.0
  %2963 = vmatpush.msra.mxu0 0.0
  %2964 = vmatpush.msra.mxu0 %v2929
  %2965 = vmatpush.msra.mxu0 %v2925
  %2966 = vmatpush.msra.mxu0 %v2921
  %2967 = vmatpush.msra.mxu0 %v2917
  %2968 = vmatmul.f32.gmra.mxu0 %v2950
  %v2969 = vpop.f32.mrf.mxu0
  %v2970 = vadd.f32 0.0, %v2969
  %2971 = vdwg.mxu0
  %2972 = vmatpush.msra.mxu0 0.0
  %2973 = vmatpush.msra.mxu0 0.0
  %2974 = vmatpush.msra.mxu0 0.0
  %2975 = vmatpush.msra.mxu0 0.0
  %2976 = vmatpush.msra.mxu0 0.0
  %2977 = vmatpush.msra.mxu0 0.0
  %2978 = vmatpush.msra.mxu0 0.0
  %2979 = vmatpush.msra.mxu0 0.0
  %2980 = vmatpush.msra.mxu0 0.0
  %2981 = vmatpush.msra.mxu0 0.0
  %2982 = vmatpush.msra.mxu0 0.0
  %2983 = vmatpush.msra.mxu0 0.0
  %2984 = vmatpush.msra.mxu0 %v2930
  %2985 = vmatpush.msra.mxu0 %v2926
  %2986 = vmatpush.msra.mxu0 %v2922
  %2987 = vmatpush.msra.mxu0 %v2918
  %2988 = vmatmul.f32.gmra.mxu0 %v2950
  %v2989 = vpop.f32.mrf.mxu0
  %v2990 = vadd.f32 0.0, %v2989
  %2991 = vdwg.mxu0
  %2992 = vmatpush.msra.mxu0 0.0
  %2993 = vmatpush.msra.mxu0 0.0
  %2994 = vmatpush.msra.mxu0 0.0
  %2995 = vmatpush.msra.mxu0 0.0
  %2996 = vmatpush.msra.mxu0 0.0
  %2997 = vmatpush.msra.mxu0 0.0
  %2998 = vmatpush.msra.mxu0 0.0
  %2999 = vmatpush.msra.mxu0 0.0
  %3000 = vmatpush.msra.mxu0 0.0
  %3001 = vmatpush.msra.mxu0 0.0
  %3002 = vmatpush.msra.mxu0 0.0
  %3003 = vmatpush.msra.mxu0 0.0
  %3004 = vmatpush.msra.mxu0 %v2931
  %3005 = vmatpush.msra.mxu0 %v2927
  %3006 = vmatpush.msra.mxu0 %v2923
  %3007 = vmatpush.msra.mxu0 %v2919
  %3008 = vmatmul.f32.gmra.mxu0 %v2950
  %v3009 = vpop.f32.mrf.mxu0
  %v3010 = vadd.f32 0.0, %v3009
  %3011 = vdwg.mxu0
  %3012 = vmatpush.msra.mxu0 0.0
  %3013 = vmatpush.msra.mxu0 0.0
  %3014 = vmatpush.msra.mxu0 0.0
  %3015 = vmatpush.msra.mxu0 0.0
  %3016 = vmatpush.msra.mxu0 0.0
  %3017 = vmatpush.msra.mxu0 0.0
  %3018 = vmatpush.msra.mxu0 0.0
  %3019 = vmatpush.msra.mxu0 0.0
  %3020 = vmatpush.msra.mxu0 0.0
  %3021 = vmatpush.msra.mxu0 0.0
  %3022 = vmatpush.msra.mxu0 0.0
  %3023 = vmatpush.msra.mxu0 0.0
  %3024 = vmatpush.msra.mxu0 %v2932
  %3025 = vmatpush.msra.mxu0 %v2928
  %3026 = vmatpush.msra.mxu0 %v2924
  %3027 = vmatpush.msra.mxu0 %v2920
  %3028 = vmatmul.f32.gmra.mxu0 %v2950
  %v3029 = vpop.f32.mrf.mxu0
  %v3030 = vadd.f32 0.0, %v3029
  %3031 = vdwg.mxu0
  %vm3032 = vmand %vm2469, %vm2481
  %vm3033 = vmand %vm2470, %vm2482
  %vm3034 = vmand %vm2471, %vm2483
  %vm3035 = vmand %vm2472, %vm2484
  %v3036 = vsel %vm3032, 1, 0
  %v3037 = vsel %vm3033, 1, 0
  %v3038 = vsel %vm3034, 1, 0
  %v3039 = vsel %vm3035, 1, 0
  %vm3040 = vcmp.eq.s32.totalorder %v3036, 1
  %vm3041 = vcmp.eq.s32.totalorder %v3037, 1
  %vm3042 = vcmp.eq.s32.totalorder %v3038, 1
  %vm3043 = vcmp.eq.s32.totalorder %v3039, 1
  %v3044 = vsel %vm3040, %v2970, 0.0
  %v3045 = vsel %vm3041, %v2990, 0.0
  %v3046 = vsel %vm3042, %v3010, 0.0
  %v3047 = vsel %vm3043, %v3030, 0.0
  %v3048 = vadd.f32 %v2871, %v3044
  %v3049 = vadd.f32 %v2872, %v3045
  %v3050 = vadd.f32 %v2873, %v3046
  %v3051 = vadd.f32 %v2874, %v3047
  %v3052 = vld [vmem:[%s2 + $0x18] sm:$0xff]
  %3053 = vrot.lane.b32.xlu0 %v2486, 1
  %v3054 = vpop.permute.xlu0 %3053
  %3055 = vrot.lane.b32.xlu0 %v2487, 1
  %v3056 = vpop.permute.xlu0 %3055
  %3057 = vrot.lane.b32.xlu0 %v2488, 1
  %v3058 = vpop.permute.xlu0 %3057
  %3059 = vrot.lane.b32.xlu0 %v2489, 1
  %v3060 = vpop.permute.xlu0 %3059
  %3061 = vrot.lane.b32.xlu0 %v2490, 1
  %v3062 = vpop.permute.xlu0 %3061
  %3063 = vrot.lane.b32.xlu0 %v2491, 1
  %v3064 = vpop.permute.xlu0 %3063
  %3065 = vrot.lane.b32.xlu0 %v2492, 1
  %v3066 = vpop.permute.xlu0 %3065
  %3067 = vrot.lane.b32.xlu0 %v2493, 1
  %v3068 = vpop.permute.xlu0 %3067
  %3069 = vrot.lane.b32.xlu0 %v2494, 1
  %v3070 = vpop.permute.xlu0 %3069
  %3071 = vrot.lane.b32.xlu0 %v2495, 1
  %v3072 = vpop.permute.xlu0 %3071
  %3073 = vrot.lane.b32.xlu0 %v2496, 1
  %v3074 = vpop.permute.xlu0 %3073
  %3075 = vrot.lane.b32.xlu0 %v2497, 1
  %v3076 = vpop.permute.xlu0 %3075
  %3077 = vrot.lane.b32.xlu0 %v2498, 1
  %v3078 = vpop.permute.xlu0 %3077
  %3079 = vrot.lane.b32.xlu0 %v2499, 1
  %v3080 = vpop.permute.xlu0 %3079
  %3081 = vrot.lane.b32.xlu0 %v2500, 1
  %v3082 = vpop.permute.xlu0 %3081
  %3083 = vrot.lane.b32.xlu0 %v2501, 1
  %v3084 = vpop.permute.xlu0 %3083
  %3085 = vrot.lane.b32.xlu0 %v2502, 1
  %v3086 = vpop.permute.xlu0 %3085
  %3087 = vrot.lane.b32.xlu0 %v2503, 1
  %v3088 = vpop.permute.xlu0 %3087
  %3089 = vrot.lane.b32.xlu0 %v2504, 1
  %v3090 = vpop.permute.xlu0 %3089
  %3091 = vrot.lane.b32.xlu0 %v2505, 1
  %v3092 = vpop.permute.xlu0 %3091
  %vm3093 = vcmask 7168
  %v3094 = vsel %vm3093, %v3054, %v3056
  %v3095 = vsel %vm3093, %v3056, %v3058
  %v3096 = vsel %vm3093, %v3058, %v3060
  %v3097 = vsel %vm3093, %v3060, %v3062
  %v3098 = vsel %vm3093, %v3064, %v3066
  %v3099 = vsel %vm3093, %v3066, %v3068
  %v3100 = vsel %vm3093, %v3068, %v3070
  %v3101 = vsel %vm3093, %v3070, %v3072
  %v3102 = vsel %vm3093, %v3074, %v3076
  %v3103 = vsel %vm3093, %v3076, %v3078
  %v3104 = vsel %vm3093, %v3078, %v3080
  %v3105 = vsel %vm3093, %v3080, %v3082
  %v3106 = vsel %vm3093, %v3084, %v3086
  %v3107 = vsel %vm3093, %v3086, %v3088
  %v3108 = vsel %vm3093, %v3088, %v3090
  %v3109 = vsel %vm3093, %v3090, %v3092
  %v3127 = vsel %vm1093, %v3052, 0
  %3129 = vmatpush.msra.mxu0 0.0
  %3130 = vmatpush.msra.mxu0 0.0
  %3131 = vmatpush.msra.mxu0 0.0
  %3132 = vmatpush.msra.mxu0 0.0
  %3133 = vmatpush.msra.mxu0 0.0
  %3134 = vmatpush.msra.mxu0 0.0
  %3135 = vmatpush.msra.mxu0 0.0
  %3136 = vmatpush.msra.mxu0 0.0
  %3137 = vmatpush.msra.mxu0 0.0
  %3138 = vmatpush.msra.mxu0 0.0
  %3139 = vmatpush.msra.mxu0 0.0
  %3140 = vmatpush.msra.mxu0 0.0
  %3141 = vmatpush.msra.mxu0 %v3106
  %3142 = vmatpush.msra.mxu0 %v3102
  %3143 = vmatpush.msra.mxu0 %v3098
  %3144 = vmatpush.msra.mxu0 %v3094
  %3145 = vmatmul.f32.gmra.mxu0 %v3127
  %v3146 = vpop.f32.mrf.mxu0
  %v3147 = vadd.f32 0.0, %v3146
  %3148 = vdwg.mxu0
  %3149 = vmatpush.msra.mxu0 0.0
  %3150 = vmatpush.msra.mxu0 0.0
  %3151 = vmatpush.msra.mxu0 0.0
  %3152 = vmatpush.msra.mxu0 0.0
  %3153 = vmatpush.msra.mxu0 0.0
  %3154 = vmatpush.msra.mxu0 0.0
  %3155 = vmatpush.msra.mxu0 0.0
  %3156 = vmatpush.msra.mxu0 0.0
  %3157 = vmatpush.msra.mxu0 0.0
  %3158 = vmatpush.msra.mxu0 0.0
  %3159 = vmatpush.msra.mxu0 0.0
  %3160 = vmatpush.msra.mxu0 0.0
  %3161 = vmatpush.msra.mxu0 %v3107
  %3162 = vmatpush.msra.mxu0 %v3103
  %3163 = vmatpush.msra.mxu0 %v3099
  %3164 = vmatpush.msra.mxu0 %v3095
  %3165 = vmatmul.f32.gmra.mxu0 %v3127
  %v3166 = vpop.f32.mrf.mxu0
  %v3167 = vadd.f32 0.0, %v3166
  %3168 = vdwg.mxu0
  %3169 = vmatpush.msra.mxu0 0.0
  %3170 = vmatpush.msra.mxu0 0.0
  %3171 = vmatpush.msra.mxu0 0.0
  %3172 = vmatpush.msra.mxu0 0.0
  %3173 = vmatpush.msra.mxu0 0.0
  %3174 = vmatpush.msra.mxu0 0.0
  %3175 = vmatpush.msra.mxu0 0.0
  %3176 = vmatpush.msra.mxu0 0.0
  %3177 = vmatpush.msra.mxu0 0.0
  %3178 = vmatpush.msra.mxu0 0.0
  %3179 = vmatpush.msra.mxu0 0.0
  %3180 = vmatpush.msra.mxu0 0.0
  %3181 = vmatpush.msra.mxu0 %v3108
  %3182 = vmatpush.msra.mxu0 %v3104
  %3183 = vmatpush.msra.mxu0 %v3100
  %3184 = vmatpush.msra.mxu0 %v3096
  %3185 = vmatmul.f32.gmra.mxu0 %v3127
  %v3186 = vpop.f32.mrf.mxu0
  %v3187 = vadd.f32 0.0, %v3186
  %3188 = vdwg.mxu0
  %3189 = vmatpush.msra.mxu0 0.0
  %3190 = vmatpush.msra.mxu0 0.0
  %3191 = vmatpush.msra.mxu0 0.0
  %3192 = vmatpush.msra.mxu0 0.0
  %3193 = vmatpush.msra.mxu0 0.0
  %3194 = vmatpush.msra.mxu0 0.0
  %3195 = vmatpush.msra.mxu0 0.0
  %3196 = vmatpush.msra.mxu0 0.0
  %3197 = vmatpush.msra.mxu0 0.0
  %3198 = vmatpush.msra.mxu0 0.0
  %3199 = vmatpush.msra.mxu0 0.0
  %3200 = vmatpush.msra.mxu0 0.0
  %3201 = vmatpush.msra.mxu0 %v3109
  %3202 = vmatpush.msra.mxu0 %v3105
  %3203 = vmatpush.msra.mxu0 %v3101
  %3204 = vmatpush.msra.mxu0 %v3097
  %3205 = vmatmul.f32.gmra.mxu0 %v3127
  %v3206 = vpop.f32.mrf.mxu0
  %v3207 = vadd.f32 0.0, %v3206
  %3208 = vdwg.mxu0
  %v3209 = vsel %vm2477, 1, 0
  %v3210 = vsel %vm2478, 1, 0
  %v3211 = vsel %vm2479, 1, 0
  %v3212 = vsel %vm2480, 1, 0
  %vm3213 = vcmp.eq.s32.totalorder %v3209, 1
  %vm3214 = vcmp.eq.s32.totalorder %v3210, 1
  %vm3215 = vcmp.eq.s32.totalorder %v3211, 1
  %vm3216 = vcmp.eq.s32.totalorder %v3212, 1
  %v3217 = vsel %vm3213, %v3147, 0.0
  %v3218 = vsel %vm3214, %v3167, 0.0
  %v3219 = vsel %vm3215, %v3187, 0.0
  %v3220 = vsel %vm3216, %v3207, 0.0
  %v3221 = vadd.f32 %v3048, %v3217
  %v3222 = vadd.f32 %v3049, %v3218
  %v3223 = vadd.f32 %v3050, %v3219
  %v3224 = vadd.f32 %v3051, %v3220
  %v3225 = vld [vmem:[%s2 + $0x20] sm:$0xff]
  %v3227 = vsel %vm1093, %v3225, 0
  %3229 = vmatpush.msra.mxu0 0.0
  %3230 = vmatpush.msra.mxu0 0.0
  %3231 = vmatpush.msra.mxu0 0.0
  %3232 = vmatpush.msra.mxu0 0.0
  %3233 = vmatpush.msra.mxu0 0.0
  %3234 = vmatpush.msra.mxu0 0.0
  %3235 = vmatpush.msra.mxu0 0.0
  %3236 = vmatpush.msra.mxu0 0.0
  %3237 = vmatpush.msra.mxu0 0.0
  %3238 = vmatpush.msra.mxu0 0.0
  %3239 = vmatpush.msra.mxu0 0.0
  %3240 = vmatpush.msra.mxu0 0.0
  %3241 = vmatpush.msra.mxu0 %v2502
  %3242 = vmatpush.msra.mxu0 %v2497
  %3243 = vmatpush.msra.mxu0 %v2492
  %3244 = vmatpush.msra.mxu0 %v2487
  %3245 = vmatmul.f32.gmra.mxu0 %v3227
  %v3246 = vpop.f32.mrf.mxu0
  %v3247 = vadd.f32 0.0, %v3246
  %3248 = vdwg.mxu0
  %3249 = vmatpush.msra.mxu0 0.0
  %3250 = vmatpush.msra.mxu0 0.0
  %3251 = vmatpush.msra.mxu0 0.0
  %3252 = vmatpush.msra.mxu0 0.0
  %3253 = vmatpush.msra.mxu0 0.0
  %3254 = vmatpush.msra.mxu0 0.0
  %3255 = vmatpush.msra.mxu0 0.0
  %3256 = vmatpush.msra.mxu0 0.0
  %3257 = vmatpush.msra.mxu0 0.0
  %3258 = vmatpush.msra.mxu0 0.0
  %3259 = vmatpush.msra.mxu0 0.0
  %3260 = vmatpush.msra.mxu0 0.0
  %3261 = vmatpush.msra.mxu0 %v2503
  %3262 = vmatpush.msra.mxu0 %v2498
  %3263 = vmatpush.msra.mxu0 %v2493
  %3264 = vmatpush.msra.mxu0 %v2488
  %3265 = vmatmul.f32.gmra.mxu0 %v3227
  %v3266 = vpop.f32.mrf.mxu0
  %v3267 = vadd.f32 0.0, %v3266
  %3268 = vdwg.mxu0
  %3269 = vmatpush.msra.mxu0 0.0
  %3270 = vmatpush.msra.mxu0 0.0
  %3271 = vmatpush.msra.mxu0 0.0
  %3272 = vmatpush.msra.mxu0 0.0
  %3273 = vmatpush.msra.mxu0 0.0
  %3274 = vmatpush.msra.mxu0 0.0
  %3275 = vmatpush.msra.mxu0 0.0
  %3276 = vmatpush.msra.mxu0 0.0
  %3277 = vmatpush.msra.mxu0 0.0
  %3278 = vmatpush.msra.mxu0 0.0
  %3279 = vmatpush.msra.mxu0 0.0
  %3280 = vmatpush.msra.mxu0 0.0
  %3281 = vmatpush.msra.mxu0 %v2504
  %3282 = vmatpush.msra.mxu0 %v2499
  %3283 = vmatpush.msra.mxu0 %v2494
  %3284 = vmatpush.msra.mxu0 %v2489
  %3285 = vmatmul.f32.gmra.mxu0 %v3227
  %v3286 = vpop.f32.mrf.mxu0
  %v3287 = vadd.f32 0.0, %v3286
  %3288 = vdwg.mxu0
  %3289 = vmatpush.msra.mxu0 0.0
  %3290 = vmatpush.msra.mxu0 0.0
  %3291 = vmatpush.msra.mxu0 0.0
  %3292 = vmatpush.msra.mxu0 0.0
  %3293 = vmatpush.msra.mxu0 0.0
  %3294 = vmatpush.msra.mxu0 0.0
  %3295 = vmatpush.msra.mxu0 0.0
  %3296 = vmatpush.msra.mxu0 0.0
  %3297 = vmatpush.msra.mxu0 0.0
  %3298 = vmatpush.msra.mxu0 0.0
  %3299 = vmatpush.msra.mxu0 0.0
  %3300 = vmatpush.msra.mxu0 0.0
  %3301 = vmatpush.msra.mxu0 %v2505
  %3302 = vmatpush.msra.mxu0 %v2500
  %3303 = vmatpush.msra.mxu0 %v2495
  %3304 = vmatpush.msra.mxu0 %v2490
  %3305 = vmatmul.f32.gmra.mxu0 %v3227
  %v3306 = vpop.f32.mrf.mxu0
  %v3307 = vadd.f32 0.0, %v3306
  %3308 = vdwg.mxu0
  %v3309 = vadd.f32 %v3221, %v3247
  %v3310 = vadd.f32 %v3222, %v3267
  %v3311 = vadd.f32 %v3223, %v3287
  %v3312 = vadd.f32 %v3224, %v3307
  %v3313 = vld [vmem:[%s2 + $0x28] sm:$0xff]
  %v3314 = vld [vmem:[#allocation3 + $0x8] sm:$0xff]
  %v3315 = vld [vmem:[#allocation3 + $0x10] sm:$0xff]
  %v3316 = vld [vmem:[#allocation3 + $0x18] sm:$0xff]
  %v3317 = vld [vmem:[#allocation3 + $0x20] sm:$0xff]
  %v3318 = vld [vmem:[#allocation3 + $0x28] sm:$0xff]
  %v3319 = vld [vmem:[#allocation3 + $0x38] sm:$0xff]
  %v3320 = vld [vmem:[#allocation3 + $0x40] sm:$0xff]
  %v3321 = vld [vmem:[#allocation3 + $0x48] sm:$0xff]
  %v3322 = vld [vmem:[#allocation3 + $0x50] sm:$0xff]
  %v3323 = vld [vmem:[#allocation3 + $0x58] sm:$0xff]
  %v3324 = vld [vmem:[#allocation3 + $0x68] sm:$0xff]
  %v3325 = vld [vmem:[#allocation3 + $0x70] sm:$0xff]
  %v3326 = vld [vmem:[#allocation3 + $0x78] sm:$0xff]
  %v3327 = vld [vmem:[#allocation3 + $0x80] sm:$0xff]
  %v3328 = vld [vmem:[#allocation3 + $0x88] sm:$0xff]
  %v3329 = vld [vmem:[#allocation3 + $0x98] sm:$0xff]
  %v3330 = vld [vmem:[#allocation3 + $0xa0] sm:$0xff]
  %v3331 = vld [vmem:[#allocation3 + $0xa8] sm:$0xff]
  %v3332 = vld [vmem:[#allocation3 + $0xb0] sm:$0xff]
  %v3333 = vld [vmem:[#allocation3 + $0xb8] sm:$0xff]
  %3354 = vrot.lane.b32.xlu0 %v3314, 127
  %v3355 = vpop.permute.xlu0 %3354
  %3356 = vrot.lane.b32.xlu0 %v3315, 127
  %v3357 = vpop.permute.xlu0 %3356
  %3358 = vrot.lane.b32.xlu0 %v3316, 127
  %v3359 = vpop.permute.xlu0 %3358
  %3360 = vrot.lane.b32.xlu0 %v3317, 127
  %v3361 = vpop.permute.xlu0 %3360
  %3362 = vrot.lane.b32.xlu0 %v3318, 127
  %v3363 = vpop.permute.xlu0 %3362
  %3364 = vrot.lane.b32.xlu0 %v3319, 127
  %v3365 = vpop.permute.xlu0 %3364
  %3366 = vrot.lane.b32.xlu0 %v3320, 127
  %v3367 = vpop.permute.xlu0 %3366
  %3368 = vrot.lane.b32.xlu0 %v3321, 127
  %v3369 = vpop.permute.xlu0 %3368
  %3370 = vrot.lane.b32.xlu0 %v3322, 127
  %v3371 = vpop.permute.xlu0 %3370
  %3372 = vrot.lane.b32.xlu0 %v3323, 127
  %v3373 = vpop.permute.xlu0 %3372
  %3374 = vrot.lane.b32.xlu0 %v3324, 127
  %v3375 = vpop.permute.xlu0 %3374
  %3376 = vrot.lane.b32.xlu0 %v3325, 127
  %v3377 = vpop.permute.xlu0 %3376
  %3378 = vrot.lane.b32.xlu0 %v3326, 127
  %v3379 = vpop.permute.xlu0 %3378
  %3380 = vrot.lane.b32.xlu0 %v3327, 127
  %v3381 = vpop.permute.xlu0 %3380
  %3382 = vrot.lane.b32.xlu0 %v3328, 127
  %v3383 = vpop.permute.xlu0 %3382
  %3384 = vrot.lane.b32.xlu0 %v3329, 127
  %v3385 = vpop.permute.xlu0 %3384
  %3386 = vrot.lane.b32.xlu0 %v3330, 127
  %v3387 = vpop.permute.xlu0 %3386
  %3388 = vrot.lane.b32.xlu0 %v3331, 127
  %v3389 = vpop.permute.xlu0 %3388
  %3390 = vrot.lane.b32.xlu0 %v3332, 127
  %v3391 = vpop.permute.xlu0 %3390
  %3392 = vrot.lane.b32.xlu0 %v3333, 127
  %v3393 = vpop.permute.xlu0 %3392
  %vm3394 = vcmask 1039360
  %v3395 = vsel %vm3394, %v3355, %v3357
  %v3396 = vsel %vm3394, %v3357, %v3359
  %v3397 = vsel %vm3394, %v3359, %v3361
  %v3398 = vsel %vm3394, %v3361, %v3363
  %v3399 = vsel %vm3394, %v3365, %v3367
  %v3400 = vsel %vm3394, %v3367, %v3369
  %v3401 = vsel %vm3394, %v3369, %v3371
  %v3402 = vsel %vm3394, %v3371, %v3373
  %v3403 = vsel %vm3394, %v3375, %v3377
  %v3404 = vsel %vm3394, %v3377, %v3379
  %v3405 = vsel %vm3394, %v3379, %v3381
  %v3406 = vsel %vm3394, %v3381, %v3383
  %v3407 = vsel %vm3394, %v3385, %v3387
  %v3408 = vsel %vm3394, %v3387, %v3389
  %v3409 = vsel %vm3394, %v3389, %v3391
  %v3410 = vsel %vm3394, %v3391, %v3393
  %v3428 = vsel %vm1093, %v3313, 0
  %3430 = vmatpush.msra.mxu0 0.0
  %3431 = vmatpush.msra.mxu0 0.0
  %3432 = vmatpush.msra.mxu0 0.0
  %3433 = vmatpush.msra.mxu0 0.0
  %3434 = vmatpush.msra.mxu0 0.0
  %3435 = vmatpush.msra.mxu0 0.0
  %3436 = vmatpush.msra.mxu0 0.0
  %3437 = vmatpush.msra.mxu0 0.0
  %3438 = vmatpush.msra.mxu0 0.0
  %3439 = vmatpush.msra.mxu0 0.0
  %3440 = vmatpush.msra.mxu0 0.0
  %3441 = vmatpush.msra.mxu0 0.0
  %3442 = vmatpush.msra.mxu0 %v3407
  %3443 = vmatpush.msra.mxu0 %v3403
  %3444 = vmatpush.msra.mxu0 %v3399
  %3445 = vmatpush.msra.mxu0 %v3395
  %3446 = vmatmul.f32.gmra.mxu0 %v3428
  %v3447 = vpop.f32.mrf.mxu0
  %v3448 = vadd.f32 0.0, %v3447
  %3449 = vdwg.mxu0
  %3450 = vmatpush.msra.mxu0 0.0
  %3451 = vmatpush.msra.mxu0 0.0
  %3452 = vmatpush.msra.mxu0 0.0
  %3453 = vmatpush.msra.mxu0 0.0
  %3454 = vmatpush.msra.mxu0 0.0
  %3455 = vmatpush.msra.mxu0 0.0
  %3456 = vmatpush.msra.mxu0 0.0
  %3457 = vmatpush.msra.mxu0 0.0
  %3458 = vmatpush.msra.mxu0 0.0
  %3459 = vmatpush.msra.mxu0 0.0
  %3460 = vmatpush.msra.mxu0 0.0
  %3461 = vmatpush.msra.mxu0 0.0
  %3462 = vmatpush.msra.mxu0 %v3408
  %3463 = vmatpush.msra.mxu0 %v3404
  %3464 = vmatpush.msra.mxu0 %v3400
  %3465 = vmatpush.msra.mxu0 %v3396
  %3466 = vmatmul.f32.gmra.mxu0 %v3428
  %v3467 = vpop.f32.mrf.mxu0
  %v3468 = vadd.f32 0.0, %v3467
  %3469 = vdwg.mxu0
  %3470 = vmatpush.msra.mxu0 0.0
  %3471 = vmatpush.msra.mxu0 0.0
  %3472 = vmatpush.msra.mxu0 0.0
  %3473 = vmatpush.msra.mxu0 0.0
  %3474 = vmatpush.msra.mxu0 0.0
  %3475 = vmatpush.msra.mxu0 0.0
  %3476 = vmatpush.msra.mxu0 0.0
  %3477 = vmatpush.msra.mxu0 0.0
  %3478 = vmatpush.msra.mxu0 0.0
  %3479 = vmatpush.msra.mxu0 0.0
  %3480 = vmatpush.msra.mxu0 0.0
  %3481 = vmatpush.msra.mxu0 0.0
  %3482 = vmatpush.msra.mxu0 %v3409
  %3483 = vmatpush.msra.mxu0 %v3405
  %3484 = vmatpush.msra.mxu0 %v3401
  %3485 = vmatpush.msra.mxu0 %v3397
  %3486 = vmatmul.f32.gmra.mxu0 %v3428
  %v3487 = vpop.f32.mrf.mxu0
  %v3488 = vadd.f32 0.0, %v3487
  %3489 = vdwg.mxu0
  %3490 = vmatpush.msra.mxu0 0.0
  %3491 = vmatpush.msra.mxu0 0.0
  %3492 = vmatpush.msra.mxu0 0.0
  %3493 = vmatpush.msra.mxu0 0.0
  %3494 = vmatpush.msra.mxu0 0.0
  %3495 = vmatpush.msra.mxu0 0.0
  %3496 = vmatpush.msra.mxu0 0.0
  %3497 = vmatpush.msra.mxu0 0.0
  %3498 = vmatpush.msra.mxu0 0.0
  %3499 = vmatpush.msra.mxu0 0.0
  %3500 = vmatpush.msra.mxu0 0.0
  %3501 = vmatpush.msra.mxu0 0.0
  %3502 = vmatpush.msra.mxu0 %v3410
  %3503 = vmatpush.msra.mxu0 %v3406
  %3504 = vmatpush.msra.mxu0 %v3402
  %3505 = vmatpush.msra.mxu0 %v3398
  %3506 = vmatmul.f32.gmra.mxu0 %v3428
  %v3507 = vpop.f32.mrf.mxu0
  %v3508 = vadd.f32 0.0, %v3507
  %3509 = vdwg.mxu0
  %v3510 = vsel %vm2481, 1, 0
  %v3511 = vsel %vm2482, 1, 0
  %v3512 = vsel %vm2483, 1, 0
  %v3513 = vsel %vm2484, 1, 0
  %vm3514 = vcmp.eq.s32.totalorder %v3510, 1
  %vm3515 = vcmp.eq.s32.totalorder %v3511, 1
  %vm3516 = vcmp.eq.s32.totalorder %v3512, 1
  %vm3517 = vcmp.eq.s32.totalorder %v3513, 1
  %v3518 = vsel %vm3514, %v3448, 0.0
  %v3519 = vsel %vm3515, %v3468, 0.0
  %v3520 = vsel %vm3516, %v3488, 0.0
  %v3521 = vsel %vm3517, %v3508, 0.0
  %v3522 = vadd.f32 %v3309, %v3518
  %v3523 = vadd.f32 %v3310, %v3519
  %v3524 = vadd.f32 %v3311, %v3520
  %v3525 = vadd.f32 %v3312, %v3521
  %v3526 = vld [vmem:[%s2 + $0x30] sm:$0xff]
  %3527 = vrot.lane.b32.xlu0 %v3314, 113
  %v3528 = vpop.permute.xlu0 %3527
  %3529 = vrot.lane.b32.xlu0 %v3315, 113
  %v3530 = vpop.permute.xlu0 %3529
  %3531 = vrot.lane.b32.xlu0 %v3316, 113
  %v3532 = vpop.permute.xlu0 %3531
  %3533 = vrot.lane.b32.xlu0 %v3317, 113
  %v3534 = vpop.permute.xlu0 %3533
  %3535 = vrot.lane.b32.xlu0 %v3318, 113
  %v3536 = vpop.permute.xlu0 %3535
  %3537 = vrot.lane.b32.xlu0 %v3319, 113
  %v3538 = vpop.permute.xlu0 %3537
  %3539 = vrot.lane.b32.xlu0 %v3320, 113
  %v3540 = vpop.permute.xlu0 %3539
  %3541 = vrot.lane.b32.xlu0 %v3321, 113
  %v3542 = vpop.permute.xlu0 %3541
  %3543 = vrot.lane.b32.xlu0 %v3322, 113
  %v3544 = vpop.permute.xlu0 %3543
  %3545 = vrot.lane.b32.xlu0 %v3323, 113
  %v3546 = vpop.permute.xlu0 %3545
  %3547 = vrot.lane.b32.xlu0 %v3324, 113
  %v3548 = vpop.permute.xlu0 %3547
  %3549 = vrot.lane.b32.xlu0 %v3325, 113
  %v3550 = vpop.permute.xlu0 %3549
  %3551 = vrot.lane.b32.xlu0 %v3326, 113
  %v3552 = vpop.permute.xlu0 %3551
  %3553 = vrot.lane.b32.xlu0 %v3327, 113
  %v3554 = vpop.permute.xlu0 %3553
  %3555 = vrot.lane.b32.xlu0 %v3328, 113
  %v3556 = vpop.permute.xlu0 %3555
  %3557 = vrot.lane.b32.xlu0 %v3329, 113
  %v3558 = vpop.permute.xlu0 %3557
  %3559 = vrot.lane.b32.xlu0 %v3330, 113
  %v3560 = vpop.permute.xlu0 %3559
  %3561 = vrot.lane.b32.xlu0 %v3331, 113
  %v3562 = vpop.permute.xlu0 %3561
  %3563 = vrot.lane.b32.xlu0 %v3332, 113
  %v3564 = vpop.permute.xlu0 %3563
  %3565 = vrot.lane.b32.xlu0 %v3333, 113
  %v3566 = vpop.permute.xlu0 %3565
  %vm3567 = vcmask 924672
  %v3568 = vsel %vm3567, %v3528, %v3530
  %v3569 = vsel %vm3567, %v3530, %v3532
  %v3570 = vsel %vm3567, %v3532, %v3534
  %v3571 = vsel %vm3567, %v3534, %v3536
  %v3572 = vsel %vm3567, %v3538, %v3540
  %v3573 = vsel %vm3567, %v3540, %v3542
  %v3574 = vsel %vm3567, %v3542, %v3544
  %v3575 = vsel %vm3567, %v3544, %v3546
  %v3576 = vsel %vm3567, %v3548, %v3550
  %v3577 = vsel %vm3567, %v3550, %v3552
  %v3578 = vsel %vm3567, %v3552, %v3554
  %v3579 = vsel %vm3567, %v3554, %v3556
  %v3580 = vsel %vm3567, %v3558, %v3560
  %v3581 = vsel %vm3567, %v3560, %v3562
  %v3582 = vsel %vm3567, %v3562, %v3564
  %v3583 = vsel %vm3567, %v3564, %v3566
  %v3601 = vsel %vm1093, %v3526, 0
  %3603 = vmatpush.msra.mxu0 0.0
  %3604 = vmatpush.msra.mxu0 0.0
  %3605 = vmatpush.msra.mxu0 0.0
  %3606 = vmatpush.msra.mxu0 0.0
  %3607 = vmatpush.msra.mxu0 0.0
  %3608 = vmatpush.msra.mxu0 0.0
  %3609 = vmatpush.msra.mxu0 0.0
  %3610 = vmatpush.msra.mxu0 0.0
  %3611 = vmatpush.msra.mxu0 0.0
  %3612 = vmatpush.msra.mxu0 0.0
  %3613 = vmatpush.msra.mxu0 0.0
  %3614 = vmatpush.msra.mxu0 0.0
  %3615 = vmatpush.msra.mxu0 %v3580
  %3616 = vmatpush.msra.mxu0 %v3576
  %3617 = vmatpush.msra.mxu0 %v3572
  %3618 = vmatpush.msra.mxu0 %v3568
  %3619 = vmatmul.f32.gmra.mxu0 %v3601
  %v3620 = vpop.f32.mrf.mxu0
  %v3621 = vadd.f32 0.0, %v3620
  %3622 = vdwg.mxu0
  %3623 = vmatpush.msra.mxu0 0.0
  %3624 = vmatpush.msra.mxu0 0.0
  %3625 = vmatpush.msra.mxu0 0.0
  %3626 = vmatpush.msra.mxu0 0.0
  %3627 = vmatpush.msra.mxu0 0.0
  %3628 = vmatpush.msra.mxu0 0.0
  %3629 = vmatpush.msra.mxu0 0.0
  %3630 = vmatpush.msra.mxu0 0.0
  %3631 = vmatpush.msra.mxu0 0.0
  %3632 = vmatpush.msra.mxu0 0.0
  %3633 = vmatpush.msra.mxu0 0.0
  %3634 = vmatpush.msra.mxu0 0.0
  %3635 = vmatpush.msra.mxu0 %v3581
  %3636 = vmatpush.msra.mxu0 %v3577
  %3637 = vmatpush.msra.mxu0 %v3573
  %3638 = vmatpush.msra.mxu0 %v3569
  %3639 = vmatmul.f32.gmra.mxu0 %v3601
  %v3640 = vpop.f32.mrf.mxu0
  %v3641 = vadd.f32 0.0, %v3640
  %3642 = vdwg.mxu0
  %3643 = vmatpush.msra.mxu0 0.0
  %3644 = vmatpush.msra.mxu0 0.0
  %3645 = vmatpush.msra.mxu0 0.0
  %3646 = vmatpush.msra.mxu0 0.0
  %3647 = vmatpush.msra.mxu0 0.0
  %3648 = vmatpush.msra.mxu0 0.0
  %3649 = vmatpush.msra.mxu0 0.0
  %3650 = vmatpush.msra.mxu0 0.0
  %3651 = vmatpush.msra.mxu0 0.0
  %3652 = vmatpush.msra.mxu0 0.0
  %3653 = vmatpush.msra.mxu0 0.0
  %3654 = vmatpush.msra.mxu0 0.0
  %3655 = vmatpush.msra.mxu0 %v3582
  %3656 = vmatpush.msra.mxu0 %v3578
  %3657 = vmatpush.msra.mxu0 %v3574
  %3658 = vmatpush.msra.mxu0 %v3570
  %3659 = vmatmul.f32.gmra.mxu0 %v3601
  %v3660 = vpop.f32.mrf.mxu0
  %v3661 = vadd.f32 0.0, %v3660
  %3662 = vdwg.mxu0
  %3663 = vmatpush.msra.mxu0 0.0
  %3664 = vmatpush.msra.mxu0 0.0
  %3665 = vmatpush.msra.mxu0 0.0
  %3666 = vmatpush.msra.mxu0 0.0
  %3667 = vmatpush.msra.mxu0 0.0
  %3668 = vmatpush.msra.mxu0 0.0
  %3669 = vmatpush.msra.mxu0 0.0
  %3670 = vmatpush.msra.mxu0 0.0
  %3671 = vmatpush.msra.mxu0 0.0
  %3672 = vmatpush.msra.mxu0 0.0
  %3673 = vmatpush.msra.mxu0 0.0
  %3674 = vmatpush.msra.mxu0 0.0
  %3675 = vmatpush.msra.mxu0 %v3583
  %3676 = vmatpush.msra.mxu0 %v3579
  %3677 = vmatpush.msra.mxu0 %v3575
  %3678 = vmatpush.msra.mxu0 %v3571
  %3679 = vmatmul.f32.gmra.mxu0 %v3601
  %v3680 = vpop.f32.mrf.mxu0
  %v3681 = vadd.f32 0.0, %v3680
  %3682 = vdwg.mxu0
  %vm3683 = vmand %vm2473, %vm2477
  %vm3684 = vmand %vm2474, %vm2478
  %vm3685 = vmand %vm2475, %vm2479
  %vm3686 = vmand %vm2476, %vm2480
  %v3687 = vsel %vm3683, 1, 0
  %v3688 = vsel %vm3684, 1, 0
  %v3689 = vsel %vm3685, 1, 0
  %v3690 = vsel %vm3686, 1, 0
  %vm3691 = vcmp.eq.s32.totalorder %v3687, 1
  %vm3692 = vcmp.eq.s32.totalorder %v3688, 1
  %vm3693 = vcmp.eq.s32.totalorder %v3689, 1
  %vm3694 = vcmp.eq.s32.totalorder %v3690, 1
  %v3695 = vsel %vm3691, %v3621, 0.0
  %v3696 = vsel %vm3692, %v3641, 0.0
  %v3697 = vsel %vm3693, %v3661, 0.0
  %v3698 = vsel %vm3694, %v3681, 0.0
  %v3699 = vadd.f32 %v3522, %v3695
  %v3700 = vadd.f32 %v3523, %v3696
  %v3701 = vadd.f32 %v3524, %v3697
  %v3702 = vadd.f32 %v3525, %v3698
  %v3703 = vld [vmem:[%s2 + $0x38] sm:$0xff]
  %3704 = vrot.lane.b32.xlu0 %v3314, 112
  %v3705 = vpop.permute.xlu0 %3704
  %3706 = vrot.lane.b32.xlu0 %v3315, 112
  %v3707 = vpop.permute.xlu0 %3706
  %3708 = vrot.lane.b32.xlu0 %v3316, 112
  %v3709 = vpop.permute.xlu0 %3708
  %3710 = vrot.lane.b32.xlu0 %v3317, 112
  %v3711 = vpop.permute.xlu0 %3710
  %3712 = vrot.lane.b32.xlu0 %v3318, 112
  %v3713 = vpop.permute.xlu0 %3712
  %3714 = vrot.lane.b32.xlu0 %v3319, 112
  %v3715 = vpop.permute.xlu0 %3714
  %3716 = vrot.lane.b32.xlu0 %v3320, 112
  %v3717 = vpop.permute.xlu0 %3716
  %3718 = vrot.lane.b32.xlu0 %v3321, 112
  %v3719 = vpop.permute.xlu0 %3718
  %3720 = vrot.lane.b32.xlu0 %v3322, 112
  %v3721 = vpop.permute.xlu0 %3720
  %3722 = vrot.lane.b32.xlu0 %v3323, 112
  %v3723 = vpop.permute.xlu0 %3722
  %3724 = vrot.lane.b32.xlu0 %v3324, 112
  %v3725 = vpop.permute.xlu0 %3724
  %3726 = vrot.lane.b32.xlu0 %v3325, 112
  %v3727 = vpop.permute.xlu0 %3726
  %3728 = vrot.lane.b32.xlu0 %v3326, 112
  %v3729 = vpop.permute.xlu0 %3728
  %3730 = vrot.lane.b32.xlu0 %v3327, 112
  %v3731 = vpop.permute.xlu0 %3730
  %3732 = vrot.lane.b32.xlu0 %v3328, 112
  %v3733 = vpop.permute.xlu0 %3732
  %3734 = vrot.lane.b32.xlu0 %v3329, 112
  %v3735 = vpop.permute.xlu0 %3734
  %3736 = vrot.lane.b32.xlu0 %v3330, 112
  %v3737 = vpop.permute.xlu0 %3736
  %3738 = vrot.lane.b32.xlu0 %v3331, 112
  %v3739 = vpop.permute.xlu0 %3738
  %3740 = vrot.lane.b32.xlu0 %v3332, 112
  %v3741 = vpop.permute.xlu0 %3740
  %3742 = vrot.lane.b32.xlu0 %v3333, 112
  %v3743 = vpop.permute.xlu0 %3742
  %vm3744 = vcmask 916480
  %v3745 = vsel %vm3744, %v3705, %v3707
  %v3746 = vsel %vm3744, %v3707, %v3709
  %v3747 = vsel %vm3744, %v3709, %v3711
  %v3748 = vsel %vm3744, %v3711, %v3713
  %v3749 = vsel %vm3744, %v3715, %v3717
  %v3750 = vsel %vm3744, %v3717, %v3719
  %v3751 = vsel %vm3744, %v3719, %v3721
  %v3752 = vsel %vm3744, %v3721, %v3723
  %v3753 = vsel %vm3744, %v3725, %v3727
  %v3754 = vsel %vm3744, %v3727, %v3729
  %v3755 = vsel %vm3744, %v3729, %v3731
  %v3756 = vsel %vm3744, %v3731, %v3733
  %v3757 = vsel %vm3744, %v3735, %v3737
  %v3758 = vsel %vm3744, %v3737, %v3739
  %v3759 = vsel %vm3744, %v3739, %v3741
  %v3760 = vsel %vm3744, %v3741, %v3743
  %v3778 = vsel %vm1093, %v3703, 0
  %3780 = vmatpush.msra.mxu0 0.0
  %3781 = vmatpush.msra.mxu0 0.0
  %3782 = vmatpush.msra.mxu0 0.0
  %3783 = vmatpush.msra.mxu0 0.0
  %3784 = vmatpush.msra.mxu0 0.0
  %3785 = vmatpush.msra.mxu0 0.0
  %3786 = vmatpush.msra.mxu0 0.0
  %3787 = vmatpush.msra.mxu0 0.0
  %3788 = vmatpush.msra.mxu0 0.0
  %3789 = vmatpush.msra.mxu0 0.0
  %3790 = vmatpush.msra.mxu0 0.0
  %3791 = vmatpush.msra.mxu0 0.0
  %3792 = vmatpush.msra.mxu0 %v3757
  %3793 = vmatpush.msra.mxu0 %v3753
  %3794 = vmatpush.msra.mxu0 %v3749
  %3795 = vmatpush.msra.mxu0 %v3745
  %3796 = vmatmul.f32.gmra.mxu0 %v3778
  %v3797 = vpop.f32.mrf.mxu0
  %v3798 = vadd.f32 0.0, %v3797
  %3799 = vdwg.mxu0
  %3800 = vmatpush.msra.mxu0 0.0
  %3801 = vmatpush.msra.mxu0 0.0
  %3802 = vmatpush.msra.mxu0 0.0
  %3803 = vmatpush.msra.mxu0 0.0
  %3804 = vmatpush.msra.mxu0 0.0
  %3805 = vmatpush.msra.mxu0 0.0
  %3806 = vmatpush.msra.mxu0 0.0
  %3807 = vmatpush.msra.mxu0 0.0
  %3808 = vmatpush.msra.mxu0 0.0
  %3809 = vmatpush.msra.mxu0 0.0
  %3810 = vmatpush.msra.mxu0 0.0
  %3811 = vmatpush.msra.mxu0 0.0
  %3812 = vmatpush.msra.mxu0 %v3758
  %3813 = vmatpush.msra.mxu0 %v3754
  %3814 = vmatpush.msra.mxu0 %v3750
  %3815 = vmatpush.msra.mxu0 %v3746
  %3816 = vmatmul.f32.gmra.mxu0 %v3778
  %v3817 = vpop.f32.mrf.mxu0
  %v3818 = vadd.f32 0.0, %v3817
  %3819 = vdwg.mxu0
  %3820 = vmatpush.msra.mxu0 0.0
  %3821 = vmatpush.msra.mxu0 0.0
  %3822 = vmatpush.msra.mxu0 0.0
  %3823 = vmatpush.msra.mxu0 0.0
  %3824 = vmatpush.msra.mxu0 0.0
  %3825 = vmatpush.msra.mxu0 0.0
  %3826 = vmatpush.msra.mxu0 0.0
  %3827 = vmatpush.msra.mxu0 0.0
  %3828 = vmatpush.msra.mxu0 0.0
  %3829 = vmatpush.msra.mxu0 0.0
  %3830 = vmatpush.msra.mxu0 0.0
  %3831 = vmatpush.msra.mxu0 0.0
  %3832 = vmatpush.msra.mxu0 %v3759
  %3833 = vmatpush.msra.mxu0 %v3755
  %3834 = vmatpush.msra.mxu0 %v3751
  %3835 = vmatpush.msra.mxu0 %v3747
  %3836 = vmatmul.f32.gmra.mxu0 %v3778
  %v3837 = vpop.f32.mrf.mxu0
  %v3838 = vadd.f32 0.0, %v3837
  %3839 = vdwg.mxu0
  %3840 = vmatpush.msra.mxu0 0.0
  %3841 = vmatpush.msra.mxu0 0.0
  %3842 = vmatpush.msra.mxu0 0.0
  %3843 = vmatpush.msra.mxu0 0.0
  %3844 = vmatpush.msra.mxu0 0.0
  %3845 = vmatpush.msra.mxu0 0.0
  %3846 = vmatpush.msra.mxu0 0.0
  %3847 = vmatpush.msra.mxu0 0.0
  %3848 = vmatpush.msra.mxu0 0.0
  %3849 = vmatpush.msra.mxu0 0.0
  %3850 = vmatpush.msra.mxu0 0.0
  %3851 = vmatpush.msra.mxu0 0.0
  %3852 = vmatpush.msra.mxu0 %v3760
  %3853 = vmatpush.msra.mxu0 %v3756
  %3854 = vmatpush.msra.mxu0 %v3752
  %3855 = vmatpush.msra.mxu0 %v3748
  %3856 = vmatmul.f32.gmra.mxu0 %v3778
  %v3857 = vpop.f32.mrf.mxu0
  %v3858 = vadd.f32 0.0, %v3857
  %3859 = vdwg.mxu0
  %v3860 = vsel %vm2473, 1, 0
  %v3861 = vsel %vm2474, 1, 0
  %v3862 = vsel %vm2475, 1, 0
  %v3863 = vsel %vm2476, 1, 0
  %vm3864 = vcmp.eq.s32.totalorder %v3860, 1
  %vm3865 = vcmp.eq.s32.totalorder %v3861, 1
  %vm3866 = vcmp.eq.s32.totalorder %v3862, 1
  %vm3867 = vcmp.eq.s32.totalorder %v3863, 1
  %v3868 = vsel %vm3864, %v3798, 0.0
  %v3869 = vsel %vm3865, %v3818, 0.0
  %v3870 = vsel %vm3866, %v3838, 0.0
  %v3871 = vsel %vm3867, %v3858, 0.0
  %v3872 = vadd.f32 %v3699, %v3868
  %v3873 = vadd.f32 %v3700, %v3869
  %v3874 = vadd.f32 %v3701, %v3870
  %v3875 = vadd.f32 %v3702, %v3871
  %v3876 = vld [vmem:[%s2 + $0x40] sm:$0xff]
  %3877 = vrot.lane.b32.xlu0 %v3314, 111
  %v3878 = vpop.permute.xlu0 %3877
  %3879 = vrot.lane.b32.xlu0 %v3315, 111
  %v3880 = vpop.permute.xlu0 %3879
  %3881 = vrot.lane.b32.xlu0 %v3316, 111
  %v3882 = vpop.permute.xlu0 %3881
  %3883 = vrot.lane.b32.xlu0 %v3317, 111
  %v3884 = vpop.permute.xlu0 %3883
  %3885 = vrot.lane.b32.xlu0 %v3318, 111
  %v3886 = vpop.permute.xlu0 %3885
  %3887 = vrot.lane.b32.xlu0 %v3319, 111
  %v3888 = vpop.permute.xlu0 %3887
  %3889 = vrot.lane.b32.xlu0 %v3320, 111
  %v3890 = vpop.permute.xlu0 %3889
  %3891 = vrot.lane.b32.xlu0 %v3321, 111
  %v3892 = vpop.permute.xlu0 %3891
  %3893 = vrot.lane.b32.xlu0 %v3322, 111
  %v3894 = vpop.permute.xlu0 %3893
  %3895 = vrot.lane.b32.xlu0 %v3323, 111
  %v3896 = vpop.permute.xlu0 %3895
  %3897 = vrot.lane.b32.xlu0 %v3324, 111
  %v3898 = vpop.permute.xlu0 %3897
  %3899 = vrot.lane.b32.xlu0 %v3325, 111
  %v3900 = vpop.permute.xlu0 %3899
  %3901 = vrot.lane.b32.xlu0 %v3326, 111
  %v3902 = vpop.permute.xlu0 %3901
  %3903 = vrot.lane.b32.xlu0 %v3327, 111
  %v3904 = vpop.permute.xlu0 %3903
  %3905 = vrot.lane.b32.xlu0 %v3328, 111
  %v3906 = vpop.permute.xlu0 %3905
  %3907 = vrot.lane.b32.xlu0 %v3329, 111
  %v3908 = vpop.permute.xlu0 %3907
  %3909 = vrot.lane.b32.xlu0 %v3330, 111
  %v3910 = vpop.permute.xlu0 %3909
  %3911 = vrot.lane.b32.xlu0 %v3331, 111
  %v3912 = vpop.permute.xlu0 %3911
  %3913 = vrot.lane.b32.xlu0 %v3332, 111
  %v3914 = vpop.permute.xlu0 %3913
  %3915 = vrot.lane.b32.xlu0 %v3333, 111
  %v3916 = vpop.permute.xlu0 %3915
  %vm3917 = vcmask 908288
  %v3918 = vsel %vm3917, %v3878, %v3880
  %v3919 = vsel %vm3917, %v3880, %v3882
  %v3920 = vsel %vm3917, %v3882, %v3884
  %v3921 = vsel %vm3917, %v3884, %v3886
  %v3922 = vsel %vm3917, %v3888, %v3890
  %v3923 = vsel %vm3917, %v3890, %v3892
  %v3924 = vsel %vm3917, %v3892, %v3894
  %v3925 = vsel %vm3917, %v3894, %v3896
  %v3926 = vsel %vm3917, %v3898, %v3900
  %v3927 = vsel %vm3917, %v3900, %v3902
  %v3928 = vsel %vm3917, %v3902, %v3904
  %v3929 = vsel %vm3917, %v3904, %v3906
  %v3930 = vsel %vm3917, %v3908, %v3910
  %v3931 = vsel %vm3917, %v3910, %v3912
  %v3932 = vsel %vm3917, %v3912, %v3914
  %v3933 = vsel %vm3917, %v3914, %v3916
  %v3951 = vsel %vm1093, %v3876, 0
  %3953 = vmatpush.msra.mxu0 0.0
  %3954 = vmatpush.msra.mxu0 0.0
  %3955 = vmatpush.msra.mxu0 0.0
  %3956 = vmatpush.msra.mxu0 0.0
  %3957 = vmatpush.msra.mxu0 0.0
  %3958 = vmatpush.msra.mxu0 0.0
  %3959 = vmatpush.msra.mxu0 0.0
  %3960 = vmatpush.msra.mxu0 0.0
  %3961 = vmatpush.msra.mxu0 0.0
  %3962 = vmatpush.msra.mxu0 0.0
  %3963 = vmatpush.msra.mxu0 0.0
  %3964 = vmatpush.msra.mxu0 0.0
  %3965 = vmatpush.msra.mxu0 %v3930
  %3966 = vmatpush.msra.mxu0 %v3926
  %3967 = vmatpush.msra.mxu0 %v3922
  %3968 = vmatpush.msra.mxu0 %v3918
  %3969 = vmatmul.f32.gmra.mxu0 %v3951
  %v3970 = vpop.f32.mrf.mxu0
  %v3971 = vadd.f32 0.0, %v3970
  %3972 = vdwg.mxu0
  %3973 = vmatpush.msra.mxu0 0.0
  %3974 = vmatpush.msra.mxu0 0.0
  %3975 = vmatpush.msra.mxu0 0.0
  %3976 = vmatpush.msra.mxu0 0.0
  %3977 = vmatpush.msra.mxu0 0.0
  %3978 = vmatpush.msra.mxu0 0.0
  %3979 = vmatpush.msra.mxu0 0.0
  %3980 = vmatpush.msra.mxu0 0.0
  %3981 = vmatpush.msra.mxu0 0.0
  %3982 = vmatpush.msra.mxu0 0.0
  %3983 = vmatpush.msra.mxu0 0.0
  %3984 = vmatpush.msra.mxu0 0.0
  %3985 = vmatpush.msra.mxu0 %v3931
  %3986 = vmatpush.msra.mxu0 %v3927
  %3987 = vmatpush.msra.mxu0 %v3923
  %3988 = vmatpush.msra.mxu0 %v3919
  %3989 = vmatmul.f32.gmra.mxu0 %v3951
  %v3990 = vpop.f32.mrf.mxu0
  %v3991 = vadd.f32 0.0, %v3990
  %3992 = vdwg.mxu0
  %3993 = vmatpush.msra.mxu0 0.0
  %3994 = vmatpush.msra.mxu0 0.0
  %3995 = vmatpush.msra.mxu0 0.0
  %3996 = vmatpush.msra.mxu0 0.0
  %3997 = vmatpush.msra.mxu0 0.0
  %3998 = vmatpush.msra.mxu0 0.0
  %3999 = vmatpush.msra.mxu0 0.0
  %4000 = vmatpush.msra.mxu0 0.0
  %4001 = vmatpush.msra.mxu0 0.0
  %4002 = vmatpush.msra.mxu0 0.0
  %4003 = vmatpush.msra.mxu0 0.0
  %4004 = vmatpush.msra.mxu0 0.0
  %4005 = vmatpush.msra.mxu0 %v3932
  %4006 = vmatpush.msra.mxu0 %v3928
  %4007 = vmatpush.msra.mxu0 %v3924
  %4008 = vmatpush.msra.mxu0 %v3920
  %4009 = vmatmul.f32.gmra.mxu0 %v3951
  %v4010 = vpop.f32.mrf.mxu0
  %v4011 = vadd.f32 0.0, %v4010
  %4012 = vdwg.mxu0
  %4013 = vmatpush.msra.mxu0 0.0
  %4014 = vmatpush.msra.mxu0 0.0
  %4015 = vmatpush.msra.mxu0 0.0
  %4016 = vmatpush.msra.mxu0 0.0
  %4017 = vmatpush.msra.mxu0 0.0
  %4018 = vmatpush.msra.mxu0 0.0
  %4019 = vmatpush.msra.mxu0 0.0
  %4020 = vmatpush.msra.mxu0 0.0
  %4021 = vmatpush.msra.mxu0 0.0
  %4022 = vmatpush.msra.mxu0 0.0
  %4023 = vmatpush.msra.mxu0 0.0
  %4024 = vmatpush.msra.mxu0 0.0
  %4025 = vmatpush.msra.mxu0 %v3933
  %4026 = vmatpush.msra.mxu0 %v3929
  %4027 = vmatpush.msra.mxu0 %v3925
  %4028 = vmatpush.msra.mxu0 %v3921
  %4029 = vmatmul.f32.gmra.mxu0 %v3951
  %v4030 = vpop.f32.mrf.mxu0
  %v4031 = vadd.f32 0.0, %v4030
  %4032 = vdwg.mxu0
  %vm4033 = vmand %vm2473, %vm2481
  %vm4034 = vmand %vm2474, %vm2482
  %vm4035 = vmand %vm2475, %vm2483
  %vm4036 = vmand %vm2476, %vm2484
  %v4037 = vsel %vm4033, 1, 0
  %v4038 = vsel %vm4034, 1, 0
  %v4039 = vsel %vm4035, 1, 0
  %v4040 = vsel %vm4036, 1, 0
  %vm4041 = vcmp.eq.s32.totalorder %v4037, 1
  %vm4042 = vcmp.eq.s32.totalorder %v4038, 1
  %vm4043 = vcmp.eq.s32.totalorder %v4039, 1
  %vm4044 = vcmp.eq.s32.totalorder %v4040, 1
  %v4045 = vsel %vm4041, %v3971, 0.0
  %v4046 = vsel %vm4042, %v3991, 0.0
  %v4047 = vsel %vm4043, %v4011, 0.0
  %v4048 = vsel %vm4044, %v4031, 0.0
  %v4049 = vadd.f32 %v3872, %v4045
  %v4050 = vadd.f32 %v3873, %v4046
  %v4051 = vadd.f32 %v3874, %v4047
  %v4052 = vadd.f32 %v3875, %v4048
  %v4053 = vld [vmem:[%s3] sm:$0xff]
  %4055 = vset.pattern.permute.xlu0 4
  %4056 = vperm.xlu0 %4055, %v4053
  %v4057 = vpop.permute.xlu0 %4056
  %v4059 = vadd.f32 %v4049, %v4057
  %v4060 = vadd.f32 %v4050, %v4057
  %v4061 = vadd.f32 %v4051, %v4057
  %v4062 = vadd.f32 %v4052, %v4057
  %v4063 = vmax.f32 %v4059, 0.0
  %v4064 = vmax.f32 %v4060, 0.0
  %v4065 = vmax.f32 %v4061, 0.0
  %v4066 = vmax.f32 %v4062, 0.0
  %4067 = vst [vmem:[%s4] sm:$0xff] %v4063
  %4068 = vst [vmem:[%s4 + $0x8] sm:$0xff] %v4064
  %4069 = vst [vmem:[%s4 + $0x10] sm:$0xff] %v4065
  %4070 = vst [vmem:[%s4 + $0x18] sm:$0xff] %v4066
  // Predicated region
  $region18: #{aspp_forward.1} parent=0 // pred_check
    _
  $region19: #{aspp_forward.1} parent=0 // pred_check_branch
    %4072 = sbr.rel (0) target = $region21
  $region20: #{aspp_forward.1} parent=0 // pred_region
    _
  $region21: #{aspp_forward.1} parent=0 // pred_fallthru
    _
  // Predicated region
  $region22: #{aspp_forward.1} parent=0 // pred_check
    _
  $region23: #{aspp_forward.1} parent=0 // pred_check_branch
    %4074 = sbr.rel (0) target = $region25
  $region24: #{aspp_forward.1} parent=0 // pred_region
    _
  $region25: #{aspp_forward.1} parent=0 // pred_fallthru
    _

</llo_original>
